<compile_context>
chip_gen: v6e
topology: v6e:2x2x1
jax: 0.10.0
libtpu: 0.0.40
codegen_flags: <defaults>
</compile_context>

<pallas_src>
import functools

import jax
import jax.numpy as jnp
from jax import lax
from jax.experimental import pallas as pl
from jax.experimental.pallas import tpu as pltpu


# ----------------------------------------------------------------------------
# Fused Pallas kernel: one grid step == one sample (all T frames)
# ----------------------------------------------------------------------------

def _visual_block_kernel(x_ref, hw_ref, wsp_ref, bsp_ref, wt_ref, bt_ref,
                         wl_ref, bl_ref, o_ref, psp_ref, pt_ref,
                         *, T, H, W, cin, cout):
    """All shapes are (rows, T*H*W) with T*H*W on lanes.

    x_ref  : (1, cin, L)        input sample, L = T*H*W
    hw_ref : (2, L) int32       row 0 = h index of lane, row 1 = w index
    wsp_ref: (2*cout, 25*cin)   [3x3 branch ; 5x5 branch], BN scale folded in
    bsp_ref: (2*cout, 1)        spatial BN bias
    wt_ref : (2*cout, 8*cout)   block matrix [wt3 | 0 ; 0 | wt5], scale folded
    bt_ref : (2*cout, 1)
    wl_ref : (cout, cout)       1x1x1 conv, scale folded
    bl_ref : (cout, 1)
    o_ref  : (1, cout, L)
    psp_ref: (25*cin, L)        shared 5x5 im2col patch matrix (VMEM scratch)
    pt_ref : (8*cout, L)        combined temporal patch matrix (VMEM scratch)
    """
    HW = H * W
    L = T * HW
    x = x_ref[0]                              # (cin, L) f32
    h_idx = hw_ref[0:1, :]                    # (1, L) int32
    w_idx = hw_ref[1:2, :]                    # (1, L) int32
    q = lax.broadcasted_iota(jnp.int32, (1, L), 1)

    # ---- shared 5x5 im2col: both spatial branches read the same patches ----
    pad = 2
    ksz = 2 * pad + 1
    for dh in range(-pad, pad + 1):
        for dw in range(-pad, pad + 1):
            tap = (dh + pad) * ksz + (dw + pad)
            s = dh * W + dw
            rolled = jnp.roll(x, -s, axis=1) if s != 0 else x
            valid = ((h_idx + dh >= 0) & (h_idx + dh < H) &
                     (w_idx + dw >= 0) & (w_idx + dw < W))
            psp_ref[tap * cin:(tap + 1) * cin, :] = jnp.where(valid, rolled, 0.0)

    # one matmul produces both spatial branches (K = 25*cin)
    y_sp = jnp.dot(wsp_ref[...], psp_ref[...],
                   preferred_element_type=jnp.float32)        # (2*cout, L)
    y_sp = jnp.maximum(y_sp + bsp_ref[...], 0.0)
    y3 = y_sp[:cout, :]
    y5 = y_sp[cout:, :]

    # ---- combined temporal im2col: 3 taps of y3 then 5 taps of y5 ----------
    def t_taps(y, kt, row0):
        p = kt // 2
        for k in range(kt):
            dt = k - p
            s = dt * HW
            rolled = jnp.roll(y, -s, axis=1) if s != 0 else y
            valid = (q + s >= 0) & (q + s < L)
            r = row0 + k * cout
            pt_ref[r:r + cout, :] = jnp.where(valid, rolled, 0.0)

    t_taps(y3, 3, 0)
    t_taps(y5, 5, 3 * cout)

    # one matmul produces both temporal branches (K = 8*cout)
    y_t = jnp.dot(wt_ref[...], pt_ref[...],
                  preferred_element_type=jnp.float32)         # (2*cout, L)
    y_t = jnp.maximum(y_t + bt_ref[...], 0.0)

    # ---- add branches, 1x1x1 conv, BN + ReLU --------------------------------
    fused = y_t[:cout, :] + y_t[cout:, :]                     # (cout, L)
    y = jnp.dot(wl_ref[...], fused, preferred_element_type=jnp.float32)
    o_ref[0] = jnp.maximum(y + bl_ref[...], 0.0).astype(o_ref.dtype)


# ----------------------------------------------------------------------------
# Wrapper: weight/bias folding + single pallas_call
# ----------------------------------------------------------------------------

def visual_block_pallas(x_ncdhw, p):
    """x_ncdhw: (N, Cin, T, H, W) -> (N, Cout, T, H, W)."""
    N, Cin, T, H, W = x_ncdhw.shape
    Cout = p["w_s3"].shape[0]
    HW = H * W
    L = T * HW

    x_flat = x_ncdhw.reshape(N, Cin, L).astype(jnp.float32)   # channels->sublanes

    # per-lane (h, w) indices for halo masking inside the kernel
    lane = jnp.arange(L, dtype=jnp.int32) % HW
    hw_idx = jnp.stack([lane // W, lane % W]).astype(jnp.int32)   # (2, L)

    # ---- fold BN scale into conv weights and build fused weight matrices ----
    s_s3, b_s3 = p["bn_s3"]
    s_s5, b_s5 = p["bn_s5"]
    s_t3, b_t3 = p["bn_t3"]
    s_t5, b_t5 = p["bn_t5"]
    s_l, b_l = p["bn_last"]

    def flat_sp(w):  # (Cout, Cin, 5, 5) -> (Cout, 25*Cin), tap-major / cin-minor
        return jnp.transpose(w, (0, 2, 3, 1)).reshape(Cout, 25 * Cin)

    w3 = jnp.pad(p["w_s3"][:, :, 0], ((0, 0), (0, 0), (1, 1), (1, 1)))  # 3x3 -> 5x5
    w5 = p["w_s5"][:, :, 0]
    w_sp = jnp.concatenate([flat_sp(w3) * s_s3[:, None],
                            flat_sp(w5) * s_s5[:, None]], axis=0)       # (2C, 25*Cin)
    b_sp = jnp.concatenate([b_s3, b_s5]).reshape(2 * Cout, 1)

    def flat_t(w, kt):  # (Cout, Cout, kt, 1, 1) -> (Cout, kt*Cout), k-major
        return jnp.transpose(w[:, :, :, 0, 0], (0, 2, 1)).reshape(Cout, kt * Cout)

    wt3 = flat_t(p["w_t3"], 3) * s_t3[:, None]
    wt5 = flat_t(p["w_t5"], 5) * s_t5[:, None]
    z3 = jnp.zeros((Cout, 5 * Cout), jnp.float32)
    z5 = jnp.zeros((Cout, 3 * Cout), jnp.float32)
    w_t = jnp.concatenate([jnp.concatenate([wt3, z3], axis=1),
                           jnp.concatenate([z5, wt5], axis=1)], axis=0)  # (2C, 8C)
    b_t = jnp.concatenate([b_t3, b_t5]).reshape(2 * Cout, 1)

    w_l = p["w_last"][:, :, 0, 0, 0] * s_l[:, None]                      # (C, C)
    b_lc = b_l.reshape(Cout, 1)

    kern = functools.partial(_visual_block_kernel,
                             T=T, H=H, W=W, cin=Cin, cout=Cout)

    flops = 2 * N * L * (2 * Cout * 25 * Cin + 2 * Cout * 8 * Cout + Cout * Cout)
    bytes_accessed = 4 * (x_flat.size + N * Cout * L + hw_idx.size
                          + w_sp.size + w_t.size + w_l.size + 5 * Cout)

    out = pl.pallas_call(
        kern,
        out_shape=jax.ShapeDtypeStruct((N, Cout, L), jnp.float32),
        grid=(N,),
        in_specs=[
            pl.BlockSpec((1, Cin, L), lambda n: (n, 0, 0)),
            pl.BlockSpec((2, L), lambda n: (0, 0)),
            pl.BlockSpec((2 * Cout, 25 * Cin), lambda n: (0, 0)),
            pl.BlockSpec((2 * Cout, 1), lambda n: (0, 0)),
            pl.BlockSpec((2 * Cout, 8 * Cout), lambda n: (0, 0)),
            pl.BlockSpec((2 * Cout, 1), lambda n: (0, 0)),
            pl.BlockSpec((Cout, Cout), lambda n: (0, 0)),
            pl.BlockSpec((Cout, 1), lambda n: (0, 0)),
        ],
        out_specs=pl.BlockSpec((1, Cout, L), lambda n: (n, 0, 0)),
        scratch_shapes=[
            pltpu.VMEM((25 * Cin, L), jnp.float32),   # shared spatial patches
            pltpu.VMEM((8 * Cout, L), jnp.float32),   # combined temporal patches
        ],
        compiler_params=pltpu.CompilerParams(
            dimension_semantics=("parallel",)),
        cost_estimate=pl.CostEstimate(flops=flops, transcendentals=0,
                                      bytes_accessed=bytes_accessed),
    )(x_flat, hw_idx, w_sp.astype(jnp.float32), b_sp.astype(jnp.float32),
      w_t.astype(jnp.float32), b_t.astype(jnp.float32),
      w_l.astype(jnp.float32), b_lc.astype(jnp.float32))

    return out.reshape(N, Cout, T, H, W)


# ----------------------------------------------------------------------------
# Pure-JAX reference (XLA conv) for verification
# ----------------------------------------------------------------------------

def _conv3d(x, w, padding):
    dn = lax.conv_dimension_numbers(x.shape, w.shape,
                                    ("NCDHW", "OIDHW", "NCDHW"))
    return lax.conv_general_dilated(
        x, w, window_strides=(1, 1, 1), padding=padding,
        dimension_numbers=dn, precision=lax.Precision.HIGHEST)


def _bn_relu(x, scale, bias):
    s = scale[None, :, None, None, None]
    b = bias[None, :, None, None, None]
    return jnp.maximum(x * s + b, 0.0)


def visual_block_ref(x, p):
    y3 = _bn_relu(_conv3d(x, p["w_s3"], ((0, 0), (1, 1), (1, 1))), *p["bn_s3"])
    y3 = _bn_relu(_conv3d(y3, p["w_t3"], ((1, 1), (0, 0), (0, 0))), *p["bn_t3"])
    y5 = _bn_relu(_conv3d(x, p["w_s5"], ((0, 0), (2, 2), (2, 2))), *p["bn_s5"])
    y5 = _bn_relu(_conv3d(y5, p["w_t5"], ((2, 2), (0, 0), (0, 0))), *p["bn_t5"])
    y = y3 + y5
    y = _bn_relu(_conv3d(y, p["w_last"], ((0, 0), (0, 0), (0, 0))),
                 *p["bn_last"])
    return y


# ----------------------------------------------------------------------------
# Deterministic parameter construction
# ----------------------------------------------------------------------------

def _fold_bn(gamma, beta, mean, var, eps=0.001):
    scale = gamma / jnp.sqrt(var + eps)
    bias = beta - mean * scale
    return scale.astype(jnp.float32), bias.astype(jnp.float32)


def make_params(key, cin, cout):
    ks = jax.random.split(key, 25)

    def w(k, shape):
        return (0.1 * jax.random.normal(k, shape)).astype(jnp.float32)

    def bn(k):
        k1, k2, k3, k4 = jax.random.split(k, 4)
        gamma = 1.0 + 0.1 * jax.random.normal(k1, (cout,))
        beta = 0.1 * jax.random.normal(k2, (cout,))
        mean = 0.1 * jax.random.normal(k3, (cout,))
        var = jax.random.uniform(k4, (cout,), minval=0.5, maxval=1.5)
        return _fold_bn(gamma, beta, mean, var)

    return {
        "w_s3": w(ks[0], (cout, cin, 1, 3, 3)),
        "bn_s3": bn(ks[1]),
        "w_t3": w(ks[2], (cout, cout, 3, 1, 1)),
        "bn_t3": bn(ks[3]),
        "w_s5": w(ks[4], (cout, cin, 1, 5, 5)),
        "bn_s5": bn(ks[5]),
        "w_t5": w(ks[6], (cout, cout, 5, 1, 1)),
        "bn_t5": bn(ks[7]),
        "w_last": w(ks[8], (cout, cout, 1, 1, 1)),
        "bn_last": bn(ks[9]),
    }


# ----------------------------------------------------------------------------
# Main
# ----------------------------------------------------------------------------

if __name__ == "__main__":
    N, Cin, Cout, T, H, W = 2, 4, 8, 4, 16, 16

    root = jax.random.PRNGKey(0)
    k_params, k_x = jax.random.split(root)
    params = make_params(k_params, Cin, Cout)
    x = jax.random.normal(k_x, (N, Cin, T, H, W), dtype=jnp.float32)

    out = jax.jit(visual_block_pallas)(x, params)
    out = jax.block_until_ready(out)

    ref = jax.jit(visual_block_ref)(x, params)
    ref = jax.block_until_ready(ref)

    assert out.shape == (N, Cout, T, H, W), out.shape
    max_err = float(jnp.max(jnp.abs(out - ref)))
    if max_err > 5e-3:
        raise AssertionError(f"Pallas / reference mismatch: max_err={max_err}")

    print("KERNEL_OK")
</pallas_src>

<mosaic_0001>
module attributes {stable_mosaic.version = 11 : i64} {
  func.func @_visual_block_kernel(%arg0: i32, %arg1: memref<1x4x1024xf32, #tpu.memory_space<vmem>>, %arg2: memref<2x1024xi32, #tpu.memory_space<vmem>>, %arg3: memref<16x100xf32, #tpu.memory_space<vmem>>, %arg4: memref<16x1xf32, #tpu.memory_space<vmem>>, %arg5: memref<16x64xf32, #tpu.memory_space<vmem>>, %arg6: memref<16x1xf32, #tpu.memory_space<vmem>>, %arg7: memref<8x8xf32, #tpu.memory_space<vmem>>, %arg8: memref<8x1xf32, #tpu.memory_space<vmem>>, %arg9: memref<1x8x1024xf32, #tpu.memory_space<vmem>>, %arg10: memref<100x1024xf32, #tpu.memory_space<vmem>>, %arg11: memref<64x1024xf32, #tpu.memory_space<vmem>>) attributes {dimension_semantics = [#tpu.dimension_semantics<parallel>], iteration_bounds = array<i64: 2>, scalar_prefetch = 0 : i64, scratch_operands = 2 : i64, tpu.core_type = #tpu.core_type<tc>, window_params = [{transform_indices = @transform_0, window_bounds = array<i64: 1, 4, 1024>}, {pipeline_mode = #tpu.pipeline_mode<synchronous>, transform_indices = @transform_1, window_bounds = array<i64: 2, 1024>}, {pipeline_mode = #tpu.pipeline_mode<synchronous>, transform_indices = @transform_2, window_bounds = array<i64: 16, 100>}, {pipeline_mode = #tpu.pipeline_mode<synchronous>, transform_indices = @transform_3, window_bounds = array<i64: 16, 1>}, {pipeline_mode = #tpu.pipeline_mode<synchronous>, transform_indices = @transform_4, window_bounds = array<i64: 16, 64>}, {pipeline_mode = #tpu.pipeline_mode<synchronous>, transform_indices = @transform_5, window_bounds = array<i64: 16, 1>}, {pipeline_mode = #tpu.pipeline_mode<synchronous>, transform_indices = @transform_6, window_bounds = array<i64: 8, 8>}, {pipeline_mode = #tpu.pipeline_mode<synchronous>, transform_indices = @transform_7, window_bounds = array<i64: 8, 1>}, {transform_indices = @transform_8, window_bounds = array<i64: 1, 8, 1024>}]} {
    %c0 = arith.constant 0 : index
    %c0_0 = arith.constant 0 : index
    %c0_1 = arith.constant 0 : index
    %0 = vector.load %arg1[%c0, %c0_0, %c0_1] : memref<1x4x1024xf32, #tpu.memory_space<vmem>>, vector<1x4x1024xf32>
    %1 = vector.shape_cast %0 : vector<1x4x1024xf32> to vector<4x1024xf32>
    %c0_2 = arith.constant 0 : index
    %c0_3 = arith.constant 0 : index
    %2 = vector.load %arg2[%c0_2, %c0_3] : memref<2x1024xi32, #tpu.memory_space<vmem>>, vector<1x1024xi32>
    %c1 = arith.constant 1 : index
    %c0_4 = arith.constant 0 : index
    %3 = vector.load %arg2[%c1, %c0_4] : memref<2x1024xi32, #tpu.memory_space<vmem>>, vector<1x1024xi32>
    %4 = tpu.iota {dimensions = array<i32: 1>} : vector<1x1024xi32>
    %5 = vector.extract_strided_slice %1 {offsets = [0, 990], sizes = [4, 34], strides = [1, 1]} : vector<4x1024xf32> to vector<4x34xf32>
    %6 = vector.extract_strided_slice %1 {offsets = [0, 0], sizes = [4, 990], strides = [1, 1]} : vector<4x1024xf32> to vector<4x990xf32>
    %7 = tpu.concatenate %5, %6 in 1 : vector<4x34xf32>, vector<4x990xf32> -> vector<4x1024xf32>
    %c-2_i32 = arith.constant -2 : i32
    %8 = vector.broadcast %c-2_i32 : i32 to vector<1x1024xi32>
    %9 = arith.addi %2, %8 : vector<1x1024xi32>
    %c0_i32 = arith.constant 0 : i32
    %10 = vector.broadcast %c0_i32 : i32 to vector<1x1024xi32>
    %11 = arith.cmpi sge, %9, %10 : vector<1x1024xi32>
    %c-2_i32_5 = arith.constant -2 : i32
    %12 = vector.broadcast %c-2_i32_5 : i32 to vector<1x1024xi32>
    %13 = arith.addi %2, %12 : vector<1x1024xi32>
    %c16_i32 = arith.constant 16 : i32
    %14 = vector.broadcast %c16_i32 : i32 to vector<1x1024xi32>
    %15 = arith.cmpi slt, %13, %14 : vector<1x1024xi32>
    %16 = arith.andi %11, %15 : vector<1x1024xi1>
    %c-2_i32_6 = arith.constant -2 : i32
    %17 = vector.broadcast %c-2_i32_6 : i32 to vector<1x1024xi32>
    %18 = arith.addi %3, %17 : vector<1x1024xi32>
    %c0_i32_7 = arith.constant 0 : i32
    %19 = vector.broadcast %c0_i32_7 : i32 to vector<1x1024xi32>
    %20 = arith.cmpi sge, %18, %19 : vector<1x1024xi32>
    %21 = arith.andi %16, %20 : vector<1x1024xi1>
    %c-2_i32_8 = arith.constant -2 : i32
    %22 = vector.broadcast %c-2_i32_8 : i32 to vector<1x1024xi32>
    %23 = arith.addi %3, %22 : vector<1x1024xi32>
    %c16_i32_9 = arith.constant 16 : i32
    %24 = vector.broadcast %c16_i32_9 : i32 to vector<1x1024xi32>
    %25 = arith.cmpi slt, %23, %24 : vector<1x1024xi32>
    %26 = arith.andi %21, %25 : vector<1x1024xi1>
    %cst = arith.constant 0.000000e+00 : f32
    %27 = vector.shape_cast %26 : vector<1x1024xi1> to vector<1x1024xi1>
    %28 = vector.broadcast %27 : vector<1x1024xi1> to vector<4x1024xi1>
    %29 = vector.broadcast %cst : f32 to vector<4x1024xf32>
    %30 = arith.select %28, %7, %29 : vector<4x1024xi1>, vector<4x1024xf32>
    %c0_10 = arith.constant 0 : index
    %c0_11 = arith.constant 0 : index
    %31 = vector.load %arg10[%c0_10, %c0_11] : memref<100x1024xf32, #tpu.memory_space<vmem>>, vector<4x1024xf32>
    tpu.vector_store %arg10[%c0_10, %c0_11], %30 {strides = array<i32>} : memref<100x1024xf32, #tpu.memory_space<vmem>>, vector<4x1024xf32>,
    %32 = vector.extract_strided_slice %1 {offsets = [0, 991], sizes = [4, 33], strides = [1, 1]} : vector<4x1024xf32> to vector<4x33xf32>
    %33 = vector.extract_strided_slice %1 {offsets = [0, 0], sizes = [4, 991], strides = [1, 1]} : vector<4x1024xf32> to vector<4x991xf32>
    %34 = tpu.concatenate %32, %33 in 1 : vector<4x33xf32>, vector<4x991xf32> -> vector<4x1024xf32>
    %c-2_i32_12 = arith.constant -2 : i32
    %35 = vector.broadcast %c-2_i32_12 : i32 to vector<1x1024xi32>
    %36 = arith.addi %2, %35 : vector<1x1024xi32>
    %c0_i32_13 = arith.constant 0 : i32
    %37 = vector.broadcast %c0_i32_13 : i32 to vector<1x1024xi32>
    %38 = arith.cmpi sge, %36, %37 : vector<1x1024xi32>
    %c-2_i32_14 = arith.constant -2 : i32
    %39 = vector.broadcast %c-2_i32_14 : i32 to vector<1x1024xi32>
    %40 = arith.addi %2, %39 : vector<1x1024xi32>
    %c16_i32_15 = arith.constant 16 : i32
    %41 = vector.broadcast %c16_i32_15 : i32 to vector<1x1024xi32>
    %42 = arith.cmpi slt, %40, %41 : vector<1x1024xi32>
    %43 = arith.andi %38, %42 : vector<1x1024xi1>
    %c-1_i32 = arith.constant -1 : i32
    %44 = vector.broadcast %c-1_i32 : i32 to vector<1x1024xi32>
    %45 = arith.addi %3, %44 : vector<1x1024xi32>
    %c0_i32_16 = arith.constant 0 : i32
    %46 = vector.broadcast %c0_i32_16 : i32 to vector<1x1024xi32>
    %47 = arith.cmpi sge, %45, %46 : vector<1x1024xi32>
    %48 = arith.andi %43, %47 : vector<1x1024xi1>
    %c-1_i32_17 = arith.constant -1 : i32
    %49 = vector.broadcast %c-1_i32_17 : i32 to vector<1x1024xi32>
    %50 = arith.addi %3, %49 : vector<1x1024xi32>
    %c16_i32_18 = arith.constant 16 : i32
    %51 = vector.broadcast %c16_i32_18 : i32 to vector<1x1024xi32>
    %52 = arith.cmpi slt, %50, %51 : vector<1x1024xi32>
    %53 = arith.andi %48, %52 : vector<1x1024xi1>
    %cst_19 = arith.constant 0.000000e+00 : f32
    %54 = vector.shape_cast %53 : vector<1x1024xi1> to vector<1x1024xi1>
    %55 = vector.broadcast %54 : vector<1x1024xi1> to vector<4x1024xi1>
    %56 = vector.broadcast %cst_19 : f32 to vector<4x1024xf32>
    %57 = arith.select %55, %34, %56 : vector<4x1024xi1>, vector<4x1024xf32>
    %c4 = arith.constant 4 : index
    %c0_20 = arith.constant 0 : index
    %58 = vector.load %arg10[%c4, %c0_20] : memref<100x1024xf32, #tpu.memory_space<vmem>>, vector<4x1024xf32>
    tpu.vector_store %arg10[%c4, %c0_20], %57 {strides = array<i32>} : memref<100x1024xf32, #tpu.memory_space<vmem>>, vector<4x1024xf32>,
    %59 = vector.extract_strided_slice %1 {offsets = [0, 992], sizes = [4, 32], strides = [1, 1]} : vector<4x1024xf32> to vector<4x32xf32>
    %60 = vector.extract_strided_slice %1 {offsets = [0, 0], sizes = [4, 992], strides = [1, 1]} : vector<4x1024xf32> to vector<4x992xf32>
    %61 = tpu.concatenate %59, %60 in 1 : vector<4x32xf32>, vector<4x992xf32> -> vector<4x1024xf32>
    %c-2_i32_21 = arith.constant -2 : i32
    %62 = vector.broadcast %c-2_i32_21 : i32 to vector<1x1024xi32>
    %63 = arith.addi %2, %62 : vector<1x1024xi32>
    %c0_i32_22 = arith.constant 0 : i32
    %64 = vector.broadcast %c0_i32_22 : i32 to vector<1x1024xi32>
    %65 = arith.cmpi sge, %63, %64 : vector<1x1024xi32>
    %c-2_i32_23 = arith.constant -2 : i32
    %66 = vector.broadcast %c-2_i32_23 : i32 to vector<1x1024xi32>
    %67 = arith.addi %2, %66 : vector<1x1024xi32>
    %c16_i32_24 = arith.constant 16 : i32
    %68 = vector.broadcast %c16_i32_24 : i32 to vector<1x1024xi32>
    %69 = arith.cmpi slt, %67, %68 : vector<1x1024xi32>
    %70 = arith.andi %65, %69 : vector<1x1024xi1>
    %c0_i32_25 = arith.constant 0 : i32
    %71 = vector.broadcast %c0_i32_25 : i32 to vector<1x1024xi32>
    %72 = arith.addi %3, %71 : vector<1x1024xi32>
    %c0_i32_26 = arith.constant 0 : i32
    %73 = vector.broadcast %c0_i32_26 : i32 to vector<1x1024xi32>
    %74 = arith.cmpi sge, %72, %73 : vector<1x1024xi32>
    %75 = arith.andi %70, %74 : vector<1x1024xi1>
    %c0_i32_27 = arith.constant 0 : i32
    %76 = vector.broadcast %c0_i32_27 : i32 to vector<1x1024xi32>
    %77 = arith.addi %3, %76 : vector<1x1024xi32>
    %c16_i32_28 = arith.constant 16 : i32
    %78 = vector.broadcast %c16_i32_28 : i32 to vector<1x1024xi32>
    %79 = arith.cmpi slt, %77, %78 : vector<1x1024xi32>
    %80 = arith.andi %75, %79 : vector<1x1024xi1>
    %cst_29 = arith.constant 0.000000e+00 : f32
    %81 = vector.shape_cast %80 : vector<1x1024xi1> to vector<1x1024xi1>
    %82 = vector.broadcast %81 : vector<1x1024xi1> to vector<4x1024xi1>
    %83 = vector.broadcast %cst_29 : f32 to vector<4x1024xf32>
    %84 = arith.select %82, %61, %83 : vector<4x1024xi1>, vector<4x1024xf32>
    %c8 = arith.constant 8 : index
    %c0_30 = arith.constant 0 : index
    %85 = vector.load %arg10[%c8, %c0_30] : memref<100x1024xf32, #tpu.memory_space<vmem>>, vector<4x1024xf32>
    tpu.vector_store %arg10[%c8, %c0_30], %84 {strides = array<i32>} : memref<100x1024xf32, #tpu.memory_space<vmem>>, vector<4x1024xf32>,
    %86 = vector.extract_strided_slice %1 {offsets = [0, 993], sizes = [4, 31], strides = [1, 1]} : vector<4x1024xf32> to vector<4x31xf32>
    %87 = vector.extract_strided_slice %1 {offsets = [0, 0], sizes = [4, 993], strides = [1, 1]} : vector<4x1024xf32> to vector<4x993xf32>
    %88 = tpu.concatenate %86, %87 in 1 : vector<4x31xf32>, vector<4x993xf32> -> vector<4x1024xf32>
    %c-2_i32_31 = arith.constant -2 : i32
    %89 = vector.broadcast %c-2_i32_31 : i32 to vector<1x1024xi32>
    %90 = arith.addi %2, %89 : vector<1x1024xi32>
    %c0_i32_32 = arith.constant 0 : i32
    %91 = vector.broadcast %c0_i32_32 : i32 to vector<1x1024xi32>
    %92 = arith.cmpi sge, %90, %91 : vector<1x1024xi32>
    %c-2_i32_33 = arith.constant -2 : i32
    %93 = vector.broadcast %c-2_i32_33 : i32 to vector<1x1024xi32>
    %94 = arith.addi %2, %93 : vector<1x1024xi32>
    %c16_i32_34 = arith.constant 16 : i32
    %95 = vector.broadcast %c16_i32_34 : i32 to vector<1x1024xi32>
    %96 = arith.cmpi slt, %94, %95 : vector<1x1024xi32>
    %97 = arith.andi %92, %96 : vector<1x1024xi1>
    %c1_i32 = arith.constant 1 : i32
    %98 = vector.broadcast %c1_i32 : i32 to vector<1x1024xi32>
    %99 = arith.addi %3, %98 : vector<1x1024xi32>
    %c0_i32_35 = arith.constant 0 : i32
    %100 = vector.broadcast %c0_i32_35 : i32 to vector<1x1024xi32>
    %101 = arith.cmpi sge, %99, %100 : vector<1x1024xi32>
    %102 = arith.andi %97, %101 : vector<1x1024xi1>
    %c1_i32_36 = arith.constant 1 : i32
    %103 = vector.broadcast %c1_i32_36 : i32 to vector<1x1024xi32>
    %104 = arith.addi %3, %103 : vector<1x1024xi32>
    %c16_i32_37 = arith.constant 16 : i32
    %105 = vector.broadcast %c16_i32_37 : i32 to vector<1x1024xi32>
    %106 = arith.cmpi slt, %104, %105 : vector<1x1024xi32>
    %107 = arith.andi %102, %106 : vector<1x1024xi1>
    %cst_38 = arith.constant 0.000000e+00 : f32
    %108 = vector.shape_cast %107 : vector<1x1024xi1> to vector<1x1024xi1>
    %109 = vector.broadcast %108 : vector<1x1024xi1> to vector<4x1024xi1>
    %110 = vector.broadcast %cst_38 : f32 to vector<4x1024xf32>
    %111 = arith.select %109, %88, %110 : vector<4x1024xi1>, vector<4x1024xf32>
    %c12 = arith.constant 12 : index
    %c0_39 = arith.constant 0 : index
    %112 = vector.load %arg10[%c12, %c0_39] : memref<100x1024xf32, #tpu.memory_space<vmem>>, vector<4x1024xf32>
    tpu.vector_store %arg10[%c12, %c0_39], %111 {strides = array<i32>} : memref<100x1024xf32, #tpu.memory_space<vmem>>, vector<4x1024xf32>,
    %113 = vector.extract_strided_slice %1 {offsets = [0, 994], sizes = [4, 30], strides = [1, 1]} : vector<4x1024xf32> to vector<4x30xf32>
    %114 = vector.extract_strided_slice %1 {offsets = [0, 0], sizes = [4, 994], strides = [1, 1]} : vector<4x1024xf32> to vector<4x994xf32>
    %115 = tpu.concatenate %113, %114 in 1 : vector<4x30xf32>, vector<4x994xf32> -> vector<4x1024xf32>
    %c-2_i32_40 = arith.constant -2 : i32
    %116 = vector.broadcast %c-2_i32_40 : i32 to vector<1x1024xi32>
    %117 = arith.addi %2, %116 : vector<1x1024xi32>
    %c0_i32_41 = arith.constant 0 : i32
    %118 = vector.broadcast %c0_i32_41 : i32 to vector<1x1024xi32>
    %119 = arith.cmpi sge, %117, %118 : vector<1x1024xi32>
    %c-2_i32_42 = arith.constant -2 : i32
    %120 = vector.broadcast %c-2_i32_42 : i32 to vector<1x1024xi32>
    %121 = arith.addi %2, %120 : vector<1x1024xi32>
    %c16_i32_43 = arith.constant 16 : i32
    %122 = vector.broadcast %c16_i32_43 : i32 to vector<1x1024xi32>
    %123 = arith.cmpi slt, %121, %122 : vector<1x1024xi32>
    %124 = arith.andi %119, %123 : vector<1x1024xi1>
    %c2_i32 = arith.constant 2 : i32
    %125 = vector.broadcast %c2_i32 : i32 to vector<1x1024xi32>
    %126 = arith.addi %3, %125 : vector<1x1024xi32>
    %c0_i32_44 = arith.constant 0 : i32
    %127 = vector.broadcast %c0_i32_44 : i32 to vector<1x1024xi32>
    %128 = arith.cmpi sge, %126, %127 : vector<1x1024xi32>
    %129 = arith.andi %124, %128 : vector<1x1024xi1>
    %c2_i32_45 = arith.constant 2 : i32
    %130 = vector.broadcast %c2_i32_45 : i32 to vector<1x1024xi32>
    %131 = arith.addi %3, %130 : vector<1x1024xi32>
    %c16_i32_46 = arith.constant 16 : i32
    %132 = vector.broadcast %c16_i32_46 : i32 to vector<1x1024xi32>
    %133 = arith.cmpi slt, %131, %132 : vector<1x1024xi32>
    %134 = arith.andi %129, %133 : vector<1x1024xi1>
    %cst_47 = arith.constant 0.000000e+00 : f32
    %135 = vector.shape_cast %134 : vector<1x1024xi1> to vector<1x1024xi1>
    %136 = vector.broadcast %135 : vector<1x1024xi1> to vector<4x1024xi1>
    %137 = vector.broadcast %cst_47 : f32 to vector<4x1024xf32>
    %138 = arith.select %136, %115, %137 : vector<4x1024xi1>, vector<4x1024xf32>
    %c16 = arith.constant 16 : index
    %c0_48 = arith.constant 0 : index
    %139 = vector.load %arg10[%c16, %c0_48] : memref<100x1024xf32, #tpu.memory_space<vmem>>, vector<4x1024xf32>
    tpu.vector_store %arg10[%c16, %c0_48], %138 {strides = array<i32>} : memref<100x1024xf32, #tpu.memory_space<vmem>>, vector<4x1024xf32>,
    %140 = vector.extract_strided_slice %1 {offsets = [0, 1006], sizes = [4, 18], strides = [1, 1]} : vector<4x1024xf32> to vector<4x18xf32>
    %141 = vector.extract_strided_slice %1 {offsets = [0, 0], sizes = [4, 1006], strides = [1, 1]} : vector<4x1024xf32> to vector<4x1006xf32>
    %142 = tpu.concatenate %140, %141 in 1 : vector<4x18xf32>, vector<4x1006xf32> -> vector<4x1024xf32>
    %c-1_i32_49 = arith.constant -1 : i32
    %143 = vector.broadcast %c-1_i32_49 : i32 to vector<1x1024xi32>
    %144 = arith.addi %2, %143 : vector<1x1024xi32>
    %c0_i32_50 = arith.constant 0 : i32
    %145 = vector.broadcast %c0_i32_50 : i32 to vector<1x1024xi32>
    %146 = arith.cmpi sge, %144, %145 : vector<1x1024xi32>
    %c-1_i32_51 = arith.constant -1 : i32
    %147 = vector.broadcast %c-1_i32_51 : i32 to vector<1x1024xi32>
    %148 = arith.addi %2, %147 : vector<1x1024xi32>
    %c16_i32_52 = arith.constant 16 : i32
    %149 = vector.broadcast %c16_i32_52 : i32 to vector<1x1024xi32>
    %150 = arith.cmpi slt, %148, %149 : vector<1x1024xi32>
    %151 = arith.andi %146, %150 : vector<1x1024xi1>
    %c-2_i32_53 = arith.constant -2 : i32
    %152 = vector.broadcast %c-2_i32_53 : i32 to vector<1x1024xi32>
    %153 = arith.addi %3, %152 : vector<1x1024xi32>
    %c0_i32_54 = arith.constant 0 : i32
    %154 = vector.broadcast %c0_i32_54 : i32 to vector<1x1024xi32>
    %155 = arith.cmpi sge, %153, %154 : vector<1x1024xi32>
    %156 = arith.andi %151, %155 : vector<1x1024xi1>
    %c-2_i32_55 = arith.constant -2 : i32
    %157 = vector.broadcast %c-2_i32_55 : i32 to vector<1x1024xi32>
    %158 = arith.addi %3, %157 : vector<1x1024xi32>
    %c16_i32_56 = arith.constant 16 : i32
    %159 = vector.broadcast %c16_i32_56 : i32 to vector<1x1024xi32>
    %160 = arith.cmpi slt, %158, %159 : vector<1x1024xi32>
    %161 = arith.andi %156, %160 : vector<1x1024xi1>
    %cst_57 = arith.constant 0.000000e+00 : f32
    %162 = vector.shape_cast %161 : vector<1x1024xi1> to vector<1x1024xi1>
    %163 = vector.broadcast %162 : vector<1x1024xi1> to vector<4x1024xi1>
    %164 = vector.broadcast %cst_57 : f32 to vector<4x1024xf32>
    %165 = arith.select %163, %142, %164 : vector<4x1024xi1>, vector<4x1024xf32>
    %c20 = arith.constant 20 : index
    %c0_58 = arith.constant 0 : index
    %166 = vector.load %arg10[%c20, %c0_58] : memref<100x1024xf32, #tpu.memory_space<vmem>>, vector<4x1024xf32>
    tpu.vector_store %arg10[%c20, %c0_58], %165 {strides = array<i32>} : memref<100x1024xf32, #tpu.memory_space<vmem>>, vector<4x1024xf32>,
    %167 = vector.extract_strided_slice %1 {offsets = [0, 1007], sizes = [4, 17], strides = [1, 1]} : vector<4x1024xf32> to vector<4x17xf32>
    %168 = vector.extract_strided_slice %1 {offsets = [0, 0], sizes = [4, 1007], strides = [1, 1]} : vector<4x1024xf32> to vector<4x1007xf32>
    %169 = tpu.concatenate %167, %168 in 1 : vector<4x17xf32>, vector<4x1007xf32> -> vector<4x1024xf32>
    %c-1_i32_59 = arith.constant -1 : i32
    %170 = vector.broadcast %c-1_i32_59 : i32 to vector<1x1024xi32>
    %171 = arith.addi %2, %170 : vector<1x1024xi32>
    %c0_i32_60 = arith.constant 0 : i32
    %172 = vector.broadcast %c0_i32_60 : i32 to vector<1x1024xi32>
    %173 = arith.cmpi sge, %171, %172 : vector<1x1024xi32>
    %c-1_i32_61 = arith.constant -1 : i32
    %174 = vector.broadcast %c-1_i32_61 : i32 to vector<1x1024xi32>
    %175 = arith.addi %2, %174 : vector<1x1024xi32>
    %c16_i32_62 = arith.constant 16 : i32
    %176 = vector.broadcast %c16_i32_62 : i32 to vector<1x1024xi32>
    %177 = arith.cmpi slt, %175, %176 : vector<1x1024xi32>
    %178 = arith.andi %173, %177 : vector<1x1024xi1>
    %c-1_i32_63 = arith.constant -1 : i32
    %179 = vector.broadcast %c-1_i32_63 : i32 to vector<1x1024xi32>
    %180 = arith.addi %3, %179 : vector<1x1024xi32>
    %c0_i32_64 = arith.constant 0 : i32
    %181 = vector.broadcast %c0_i32_64 : i32 to vector<1x1024xi32>
    %182 = arith.cmpi sge, %180, %181 : vector<1x1024xi32>
    %183 = arith.andi %178, %182 : vector<1x1024xi1>
    %c-1_i32_65 = arith.constant -1 : i32
    %184 = vector.broadcast %c-1_i32_65 : i32 to vector<1x1024xi32>
    %185 = arith.addi %3, %184 : vector<1x1024xi32>
    %c16_i32_66 = arith.constant 16 : i32
    %186 = vector.broadcast %c16_i32_66 : i32 to vector<1x1024xi32>
    %187 = arith.cmpi slt, %185, %186 : vector<1x1024xi32>
    %188 = arith.andi %183, %187 : vector<1x1024xi1>
    %cst_67 = arith.constant 0.000000e+00 : f32
    %189 = vector.shape_cast %188 : vector<1x1024xi1> to vector<1x1024xi1>
    %190 = vector.broadcast %189 : vector<1x1024xi1> to vector<4x1024xi1>
    %191 = vector.broadcast %cst_67 : f32 to vector<4x1024xf32>
    %192 = arith.select %190, %169, %191 : vector<4x1024xi1>, vector<4x1024xf32>
    %c24 = arith.constant 24 : index
    %c0_68 = arith.constant 0 : index
    %193 = vector.load %arg10[%c24, %c0_68] : memref<100x1024xf32, #tpu.memory_space<vmem>>, vector<4x1024xf32>
    tpu.vector_store %arg10[%c24, %c0_68], %192 {strides = array<i32>} : memref<100x1024xf32, #tpu.memory_space<vmem>>, vector<4x1024xf32>,
    %194 = vector.extract_strided_slice %1 {offsets = [0, 1008], sizes = [4, 16], strides = [1, 1]} : vector<4x1024xf32> to vector<4x16xf32>
    %195 = vector.extract_strided_slice %1 {offsets = [0, 0], sizes = [4, 1008], strides = [1, 1]} : vector<4x1024xf32> to vector<4x1008xf32>
    %196 = tpu.concatenate %194, %195 in 1 : vector<4x16xf32>, vector<4x1008xf32> -> vector<4x1024xf32>
    %c-1_i32_69 = arith.constant -1 : i32
    %197 = vector.broadcast %c-1_i32_69 : i32 to vector<1x1024xi32>
    %198 = arith.addi %2, %197 : vector<1x1024xi32>
    %c0_i32_70 = arith.constant 0 : i32
    %199 = vector.broadcast %c0_i32_70 : i32 to vector<1x1024xi32>
    %200 = arith.cmpi sge, %198, %199 : vector<1x1024xi32>
    %c-1_i32_71 = arith.constant -1 : i32
    %201 = vector.broadcast %c-1_i32_71 : i32 to vector<1x1024xi32>
    %202 = arith.addi %2, %201 : vector<1x1024xi32>
    %c16_i32_72 = arith.constant 16 : i32
    %203 = vector.broadcast %c16_i32_72 : i32 to vector<1x1024xi32>
    %204 = arith.cmpi slt, %202, %203 : vector<1x1024xi32>
    %205 = arith.andi %200, %204 : vector<1x1024xi1>
    %c0_i32_73 = arith.constant 0 : i32
    %206 = vector.broadcast %c0_i32_73 : i32 to vector<1x1024xi32>
    %207 = arith.addi %3, %206 : vector<1x1024xi32>
    %c0_i32_74 = arith.constant 0 : i32
    %208 = vector.broadcast %c0_i32_74 : i32 to vector<1x1024xi32>
    %209 = arith.cmpi sge, %207, %208 : vector<1x1024xi32>
    %210 = arith.andi %205, %209 : vector<1x1024xi1>
    %c0_i32_75 = arith.constant 0 : i32
    %211 = vector.broadcast %c0_i32_75 : i32 to vector<1x1024xi32>
    %212 = arith.addi %3, %211 : vector<1x1024xi32>
    %c16_i32_76 = arith.constant 16 : i32
    %213 = vector.broadcast %c16_i32_76 : i32 to vector<1x1024xi32>
    %214 = arith.cmpi slt, %212, %213 : vector<1x1024xi32>
    %215 = arith.andi %210, %214 : vector<1x1024xi1>
    %cst_77 = arith.constant 0.000000e+00 : f32
    %216 = vector.shape_cast %215 : vector<1x1024xi1> to vector<1x1024xi1>
    %217 = vector.broadcast %216 : vector<1x1024xi1> to vector<4x1024xi1>
    %218 = vector.broadcast %cst_77 : f32 to vector<4x1024xf32>
    %219 = arith.select %217, %196, %218 : vector<4x1024xi1>, vector<4x1024xf32>
    %c28 = arith.constant 28 : index
    %c0_78 = arith.constant 0 : index
    %220 = vector.load %arg10[%c28, %c0_78] : memref<100x1024xf32, #tpu.memory_space<vmem>>, vector<4x1024xf32>
    tpu.vector_store %arg10[%c28, %c0_78], %219 {strides = array<i32>} : memref<100x1024xf32, #tpu.memory_space<vmem>>, vector<4x1024xf32>,
    %221 = vector.extract_strided_slice %1 {offsets = [0, 1009], sizes = [4, 15], strides = [1, 1]} : vector<4x1024xf32> to vector<4x15xf32>
    %222 = vector.extract_strided_slice %1 {offsets = [0, 0], sizes = [4, 1009], strides = [1, 1]} : vector<4x1024xf32> to vector<4x1009xf32>
    %223 = tpu.concatenate %221, %222 in 1 : vector<4x15xf32>, vector<4x1009xf32> -> vector<4x1024xf32>
    %c-1_i32_79 = arith.constant -1 : i32
    %224 = vector.broadcast %c-1_i32_79 : i32 to vector<1x1024xi32>
    %225 = arith.addi %2, %224 : vector<1x1024xi32>
    %c0_i32_80 = arith.constant 0 : i32
    %226 = vector.broadcast %c0_i32_80 : i32 to vector<1x1024xi32>
    %227 = arith.cmpi sge, %225, %226 : vector<1x1024xi32>
    %c-1_i32_81 = arith.constant -1 : i32
    %228 = vector.broadcast %c-1_i32_81 : i32 to vector<1x1024xi32>
    %229 = arith.addi %2, %228 : vector<1x1024xi32>
    %c16_i32_82 = arith.constant 16 : i32
    %230 = vector.broadcast %c16_i32_82 : i32 to vector<1x1024xi32>
    %231 = arith.cmpi slt, %229, %230 : vector<1x1024xi32>
    %232 = arith.andi %227, %231 : vector<1x1024xi1>
    %c1_i32_83 = arith.constant 1 : i32
    %233 = vector.broadcast %c1_i32_83 : i32 to vector<1x1024xi32>
    %234 = arith.addi %3, %233 : vector<1x1024xi32>
    %c0_i32_84 = arith.constant 0 : i32
    %235 = vector.broadcast %c0_i32_84 : i32 to vector<1x1024xi32>
    %236 = arith.cmpi sge, %234, %235 : vector<1x1024xi32>
    %237 = arith.andi %232, %236 : vector<1x1024xi1>
    %c1_i32_85 = arith.constant 1 : i32
    %238 = vector.broadcast %c1_i32_85 : i32 to vector<1x1024xi32>
    %239 = arith.addi %3, %238 : vector<1x1024xi32>
    %c16_i32_86 = arith.constant 16 : i32
    %240 = vector.broadcast %c16_i32_86 : i32 to vector<1x1024xi32>
    %241 = arith.cmpi slt, %239, %240 : vector<1x1024xi32>
    %242 = arith.andi %237, %241 : vector<1x1024xi1>
    %cst_87 = arith.constant 0.000000e+00 : f32
    %243 = vector.shape_cast %242 : vector<1x1024xi1> to vector<1x1024xi1>
    %244 = vector.broadcast %243 : vector<1x1024xi1> to vector<4x1024xi1>
    %245 = vector.broadcast %cst_87 : f32 to vector<4x1024xf32>
    %246 = arith.select %244, %223, %245 : vector<4x1024xi1>, vector<4x1024xf32>
    %c32 = arith.constant 32 : index
    %c0_88 = arith.constant 0 : index
    %247 = vector.load %arg10[%c32, %c0_88] : memref<100x1024xf32, #tpu.memory_space<vmem>>, vector<4x1024xf32>
    tpu.vector_store %arg10[%c32, %c0_88], %246 {strides = array<i32>} : memref<100x1024xf32, #tpu.memory_space<vmem>>, vector<4x1024xf32>,
    %248 = vector.extract_strided_slice %1 {offsets = [0, 1010], sizes = [4, 14], strides = [1, 1]} : vector<4x1024xf32> to vector<4x14xf32>
    %249 = vector.extract_strided_slice %1 {offsets = [0, 0], sizes = [4, 1010], strides = [1, 1]} : vector<4x1024xf32> to vector<4x1010xf32>
    %250 = tpu.concatenate %248, %249 in 1 : vector<4x14xf32>, vector<4x1010xf32> -> vector<4x1024xf32>
    %c-1_i32_89 = arith.constant -1 : i32
    %251 = vector.broadcast %c-1_i32_89 : i32 to vector<1x1024xi32>
    %252 = arith.addi %2, %251 : vector<1x1024xi32>
    %c0_i32_90 = arith.constant 0 : i32
    %253 = vector.broadcast %c0_i32_90 : i32 to vector<1x1024xi32>
    %254 = arith.cmpi sge, %252, %253 : vector<1x1024xi32>
    %c-1_i32_91 = arith.constant -1 : i32
    %255 = vector.broadcast %c-1_i32_91 : i32 to vector<1x1024xi32>
    %256 = arith.addi %2, %255 : vector<1x1024xi32>
    %c16_i32_92 = arith.constant 16 : i32
    %257 = vector.broadcast %c16_i32_92 : i32 to vector<1x1024xi32>
    %258 = arith.cmpi slt, %256, %257 : vector<1x1024xi32>
    %259 = arith.andi %254, %258 : vector<1x1024xi1>
    %c2_i32_93 = arith.constant 2 : i32
    %260 = vector.broadcast %c2_i32_93 : i32 to vector<1x1024xi32>
    %261 = arith.addi %3, %260 : vector<1x1024xi32>
    %c0_i32_94 = arith.constant 0 : i32
    %262 = vector.broadcast %c0_i32_94 : i32 to vector<1x1024xi32>
    %263 = arith.cmpi sge, %261, %262 : vector<1x1024xi32>
    %264 = arith.andi %259, %263 : vector<1x1024xi1>
    %c2_i32_95 = arith.constant 2 : i32
    %265 = vector.broadcast %c2_i32_95 : i32 to vector<1x1024xi32>
    %266 = arith.addi %3, %265 : vector<1x1024xi32>
    %c16_i32_96 = arith.constant 16 : i32
    %267 = vector.broadcast %c16_i32_96 : i32 to vector<1x1024xi32>
    %268 = arith.cmpi slt, %266, %267 : vector<1x1024xi32>
    %269 = arith.andi %264, %268 : vector<1x1024xi1>
    %cst_97 = arith.constant 0.000000e+00 : f32
    %270 = vector.shape_cast %269 : vector<1x1024xi1> to vector<1x1024xi1>
    %271 = vector.broadcast %270 : vector<1x1024xi1> to vector<4x1024xi1>
    %272 = vector.broadcast %cst_97 : f32 to vector<4x1024xf32>
    %273 = arith.select %271, %250, %272 : vector<4x1024xi1>, vector<4x1024xf32>
    %c36 = arith.constant 36 : index
    %c0_98 = arith.constant 0 : index
    %274 = vector.load %arg10[%c36, %c0_98] : memref<100x1024xf32, #tpu.memory_space<vmem>>, vector<4x1024xf32>
    tpu.vector_store %arg10[%c36, %c0_98], %273 {strides = array<i32>} : memref<100x1024xf32, #tpu.memory_space<vmem>>, vector<4x1024xf32>,
    %275 = vector.extract_strided_slice %1 {offsets = [0, 1022], sizes = [4, 2], strides = [1, 1]} : vector<4x1024xf32> to vector<4x2xf32>
    %276 = vector.extract_strided_slice %1 {offsets = [0, 0], sizes = [4, 1022], strides = [1, 1]} : vector<4x1024xf32> to vector<4x1022xf32>
    %277 = tpu.concatenate %275, %276 in 1 : vector<4x2xf32>, vector<4x1022xf32> -> vector<4x1024xf32>
    %c0_i32_99 = arith.constant 0 : i32
    %278 = vector.broadcast %c0_i32_99 : i32 to vector<1x1024xi32>
    %279 = arith.addi %2, %278 : vector<1x1024xi32>
    %c0_i32_100 = arith.constant 0 : i32
    %280 = vector.broadcast %c0_i32_100 : i32 to vector<1x1024xi32>
    %281 = arith.cmpi sge, %279, %280 : vector<1x1024xi32>
    %c0_i32_101 = arith.constant 0 : i32
    %282 = vector.broadcast %c0_i32_101 : i32 to vector<1x1024xi32>
    %283 = arith.addi %2, %282 : vector<1x1024xi32>
    %c16_i32_102 = arith.constant 16 : i32
    %284 = vector.broadcast %c16_i32_102 : i32 to vector<1x1024xi32>
    %285 = arith.cmpi slt, %283, %284 : vector<1x1024xi32>
    %286 = arith.andi %281, %285 : vector<1x1024xi1>
    %c-2_i32_103 = arith.constant -2 : i32
    %287 = vector.broadcast %c-2_i32_103 : i32 to vector<1x1024xi32>
    %288 = arith.addi %3, %287 : vector<1x1024xi32>
    %c0_i32_104 = arith.constant 0 : i32
    %289 = vector.broadcast %c0_i32_104 : i32 to vector<1x1024xi32>
    %290 = arith.cmpi sge, %288, %289 : vector<1x1024xi32>
    %291 = arith.andi %286, %290 : vector<1x1024xi1>
    %c-2_i32_105 = arith.constant -2 : i32
    %292 = vector.broadcast %c-2_i32_105 : i32 to vector<1x1024xi32>
    %293 = arith.addi %3, %292 : vector<1x1024xi32>
    %c16_i32_106 = arith.constant 16 : i32
    %294 = vector.broadcast %c16_i32_106 : i32 to vector<1x1024xi32>
    %295 = arith.cmpi slt, %293, %294 : vector<1x1024xi32>
    %296 = arith.andi %291, %295 : vector<1x1024xi1>
    %cst_107 = arith.constant 0.000000e+00 : f32
    %297 = vector.shape_cast %296 : vector<1x1024xi1> to vector<1x1024xi1>
    %298 = vector.broadcast %297 : vector<1x1024xi1> to vector<4x1024xi1>
    %299 = vector.broadcast %cst_107 : f32 to vector<4x1024xf32>
    %300 = arith.select %298, %277, %299 : vector<4x1024xi1>, vector<4x1024xf32>
    %c40 = arith.constant 40 : index
    %c0_108 = arith.constant 0 : index
    %301 = vector.load %arg10[%c40, %c0_108] : memref<100x1024xf32, #tpu.memory_space<vmem>>, vector<4x1024xf32>
    tpu.vector_store %arg10[%c40, %c0_108], %300 {strides = array<i32>} : memref<100x1024xf32, #tpu.memory_space<vmem>>, vector<4x1024xf32>,
    %302 = vector.extract_strided_slice %1 {offsets = [0, 1023], sizes = [4, 1], strides = [1, 1]} : vector<4x1024xf32> to vector<4x1xf32>
    %303 = vector.extract_strided_slice %1 {offsets = [0, 0], sizes = [4, 1023], strides = [1, 1]} : vector<4x1024xf32> to vector<4x1023xf32>
    %304 = tpu.concatenate %302, %303 in 1 : vector<4x1xf32>, vector<4x1023xf32> -> vector<4x1024xf32>
    %c0_i32_109 = arith.constant 0 : i32
    %305 = vector.broadcast %c0_i32_109 : i32 to vector<1x1024xi32>
    %306 = arith.addi %2, %305 : vector<1x1024xi32>
    %c0_i32_110 = arith.constant 0 : i32
    %307 = vector.broadcast %c0_i32_110 : i32 to vector<1x1024xi32>
    %308 = arith.cmpi sge, %306, %307 : vector<1x1024xi32>
    %c0_i32_111 = arith.constant 0 : i32
    %309 = vector.broadcast %c0_i32_111 : i32 to vector<1x1024xi32>
    %310 = arith.addi %2, %309 : vector<1x1024xi32>
    %c16_i32_112 = arith.constant 16 : i32
    %311 = vector.broadcast %c16_i32_112 : i32 to vector<1x1024xi32>
    %312 = arith.cmpi slt, %310, %311 : vector<1x1024xi32>
    %313 = arith.andi %308, %312 : vector<1x1024xi1>
    %c-1_i32_113 = arith.constant -1 : i32
    %314 = vector.broadcast %c-1_i32_113 : i32 to vector<1x1024xi32>
    %315 = arith.addi %3, %314 : vector<1x1024xi32>
    %c0_i32_114 = arith.constant 0 : i32
    %316 = vector.broadcast %c0_i32_114 : i32 to vector<1x1024xi32>
    %317 = arith.cmpi sge, %315, %316 : vector<1x1024xi32>
    %318 = arith.andi %313, %317 : vector<1x1024xi1>
    %c-1_i32_115 = arith.constant -1 : i32
    %319 = vector.broadcast %c-1_i32_115 : i32 to vector<1x1024xi32>
    %320 = arith.addi %3, %319 : vector<1x1024xi32>
    %c16_i32_116 = arith.constant 16 : i32
    %321 = vector.broadcast %c16_i32_116 : i32 to vector<1x1024xi32>
    %322 = arith.cmpi slt, %320, %321 : vector<1x1024xi32>
    %323 = arith.andi %318, %322 : vector<1x1024xi1>
    %cst_117 = arith.constant 0.000000e+00 : f32
    %324 = vector.shape_cast %323 : vector<1x1024xi1> to vector<1x1024xi1>
    %325 = vector.broadcast %324 : vector<1x1024xi1> to vector<4x1024xi1>
    %326 = vector.broadcast %cst_117 : f32 to vector<4x1024xf32>
    %327 = arith.select %325, %304, %326 : vector<4x1024xi1>, vector<4x1024xf32>
    %c44 = arith.constant 44 : index
    %c0_118 = arith.constant 0 : index
    %328 = vector.load %arg10[%c44, %c0_118] : memref<100x1024xf32, #tpu.memory_space<vmem>>, vector<4x1024xf32>
    tpu.vector_store %arg10[%c44, %c0_118], %327 {strides = array<i32>} : memref<100x1024xf32, #tpu.memory_space<vmem>>, vector<4x1024xf32>,
    %c0_i32_119 = arith.constant 0 : i32
    %329 = vector.broadcast %c0_i32_119 : i32 to vector<1x1024xi32>
    %330 = arith.addi %2, %329 : vector<1x1024xi32>
    %c0_i32_120 = arith.constant 0 : i32
    %331 = vector.broadcast %c0_i32_120 : i32 to vector<1x1024xi32>
    %332 = arith.cmpi sge, %330, %331 : vector<1x1024xi32>
    %c0_i32_121 = arith.constant 0 : i32
    %333 = vector.broadcast %c0_i32_121 : i32 to vector<1x1024xi32>
    %334 = arith.addi %2, %333 : vector<1x1024xi32>
    %c16_i32_122 = arith.constant 16 : i32
    %335 = vector.broadcast %c16_i32_122 : i32 to vector<1x1024xi32>
    %336 = arith.cmpi slt, %334, %335 : vector<1x1024xi32>
    %337 = arith.andi %332, %336 : vector<1x1024xi1>
    %c0_i32_123 = arith.constant 0 : i32
    %338 = vector.broadcast %c0_i32_123 : i32 to vector<1x1024xi32>
    %339 = arith.addi %3, %338 : vector<1x1024xi32>
    %c0_i32_124 = arith.constant 0 : i32
    %340 = vector.broadcast %c0_i32_124 : i32 to vector<1x1024xi32>
    %341 = arith.cmpi sge, %339, %340 : vector<1x1024xi32>
    %342 = arith.andi %337, %341 : vector<1x1024xi1>
    %c0_i32_125 = arith.constant 0 : i32
    %343 = vector.broadcast %c0_i32_125 : i32 to vector<1x1024xi32>
    %344 = arith.addi %3, %343 : vector<1x1024xi32>
    %c16_i32_126 = arith.constant 16 : i32
    %345 = vector.broadcast %c16_i32_126 : i32 to vector<1x1024xi32>
    %346 = arith.cmpi slt, %344, %345 : vector<1x1024xi32>
    %347 = arith.andi %342, %346 : vector<1x1024xi1>
    %cst_127 = arith.constant 0.000000e+00 : f32
    %348 = vector.shape_cast %347 : vector<1x1024xi1> to vector<1x1024xi1>
    %349 = vector.broadcast %348 : vector<1x1024xi1> to vector<4x1024xi1>
    %350 = vector.broadcast %cst_127 : f32 to vector<4x1024xf32>
    %351 = arith.select %349, %1, %350 : vector<4x1024xi1>, vector<4x1024xf32>
    %c48 = arith.constant 48 : index
    %c0_128 = arith.constant 0 : index
    %352 = vector.load %arg10[%c48, %c0_128] : memref<100x1024xf32, #tpu.memory_space<vmem>>, vector<4x1024xf32>
    tpu.vector_store %arg10[%c48, %c0_128], %351 {strides = array<i32>} : memref<100x1024xf32, #tpu.memory_space<vmem>>, vector<4x1024xf32>,
    %353 = vector.extract_strided_slice %1 {offsets = [0, 1], sizes = [4, 1023], strides = [1, 1]} : vector<4x1024xf32> to vector<4x1023xf32>
    %354 = vector.extract_strided_slice %1 {offsets = [0, 0], sizes = [4, 1], strides = [1, 1]} : vector<4x1024xf32> to vector<4x1xf32>
    %355 = tpu.concatenate %353, %354 in 1 : vector<4x1023xf32>, vector<4x1xf32> -> vector<4x1024xf32>
    %c0_i32_129 = arith.constant 0 : i32
    %356 = vector.broadcast %c0_i32_129 : i32 to vector<1x1024xi32>
    %357 = arith.addi %2, %356 : vector<1x1024xi32>
    %c0_i32_130 = arith.constant 0 : i32
    %358 = vector.broadcast %c0_i32_130 : i32 to vector<1x1024xi32>
    %359 = arith.cmpi sge, %357, %358 : vector<1x1024xi32>
    %c0_i32_131 = arith.constant 0 : i32
    %360 = vector.broadcast %c0_i32_131 : i32 to vector<1x1024xi32>
    %361 = arith.addi %2, %360 : vector<1x1024xi32>
    %c16_i32_132 = arith.constant 16 : i32
    %362 = vector.broadcast %c16_i32_132 : i32 to vector<1x1024xi32>
    %363 = arith.cmpi slt, %361, %362 : vector<1x1024xi32>
    %364 = arith.andi %359, %363 : vector<1x1024xi1>
    %c1_i32_133 = arith.constant 1 : i32
    %365 = vector.broadcast %c1_i32_133 : i32 to vector<1x1024xi32>
    %366 = arith.addi %3, %365 : vector<1x1024xi32>
    %c0_i32_134 = arith.constant 0 : i32
    %367 = vector.broadcast %c0_i32_134 : i32 to vector<1x1024xi32>
    %368 = arith.cmpi sge, %366, %367 : vector<1x1024xi32>
    %369 = arith.andi %364, %368 : vector<1x1024xi1>
    %c1_i32_135 = arith.constant 1 : i32
    %370 = vector.broadcast %c1_i32_135 : i32 to vector<1x1024xi32>
    %371 = arith.addi %3, %370 : vector<1x1024xi32>
    %c16_i32_136 = arith.constant 16 : i32
    %372 = vector.broadcast %c16_i32_136 : i32 to vector<1x1024xi32>
    %373 = arith.cmpi slt, %371, %372 : vector<1x1024xi32>
    %374 = arith.andi %369, %373 : vector<1x1024xi1>
    %cst_137 = arith.constant 0.000000e+00 : f32
    %375 = vector.shape_cast %374 : vector<1x1024xi1> to vector<1x1024xi1>
    %376 = vector.broadcast %375 : vector<1x1024xi1> to vector<4x1024xi1>
    %377 = vector.broadcast %cst_137 : f32 to vector<4x1024xf32>
    %378 = arith.select %376, %355, %377 : vector<4x1024xi1>, vector<4x1024xf32>
    %c52 = arith.constant 52 : index
    %c0_138 = arith.constant 0 : index
    %379 = vector.load %arg10[%c52, %c0_138] : memref<100x1024xf32, #tpu.memory_space<vmem>>, vector<4x1024xf32>
    tpu.vector_store %arg10[%c52, %c0_138], %378 {strides = array<i32>} : memref<100x1024xf32, #tpu.memory_space<vmem>>, vector<4x1024xf32>,
    %380 = vector.extract_strided_slice %1 {offsets = [0, 2], sizes = [4, 1022], strides = [1, 1]} : vector<4x1024xf32> to vector<4x1022xf32>
    %381 = vector.extract_strided_slice %1 {offsets = [0, 0], sizes = [4, 2], strides = [1, 1]} : vector<4x1024xf32> to vector<4x2xf32>
    %382 = tpu.concatenate %380, %381 in 1 : vector<4x1022xf32>, vector<4x2xf32> -> vector<4x1024xf32>
    %c0_i32_139 = arith.constant 0 : i32
    %383 = vector.broadcast %c0_i32_139 : i32 to vector<1x1024xi32>
    %384 = arith.addi %2, %383 : vector<1x1024xi32>
    %c0_i32_140 = arith.constant 0 : i32
    %385 = vector.broadcast %c0_i32_140 : i32 to vector<1x1024xi32>
    %386 = arith.cmpi sge, %384, %385 : vector<1x1024xi32>
    %c0_i32_141 = arith.constant 0 : i32
    %387 = vector.broadcast %c0_i32_141 : i32 to vector<1x1024xi32>
    %388 = arith.addi %2, %387 : vector<1x1024xi32>
    %c16_i32_142 = arith.constant 16 : i32
    %389 = vector.broadcast %c16_i32_142 : i32 to vector<1x1024xi32>
    %390 = arith.cmpi slt, %388, %389 : vector<1x1024xi32>
    %391 = arith.andi %386, %390 : vector<1x1024xi1>
    %c2_i32_143 = arith.constant 2 : i32
    %392 = vector.broadcast %c2_i32_143 : i32 to vector<1x1024xi32>
    %393 = arith.addi %3, %392 : vector<1x1024xi32>
    %c0_i32_144 = arith.constant 0 : i32
    %394 = vector.broadcast %c0_i32_144 : i32 to vector<1x1024xi32>
    %395 = arith.cmpi sge, %393, %394 : vector<1x1024xi32>
    %396 = arith.andi %391, %395 : vector<1x1024xi1>
    %c2_i32_145 = arith.constant 2 : i32
    %397 = vector.broadcast %c2_i32_145 : i32 to vector<1x1024xi32>
    %398 = arith.addi %3, %397 : vector<1x1024xi32>
    %c16_i32_146 = arith.constant 16 : i32
    %399 = vector.broadcast %c16_i32_146 : i32 to vector<1x1024xi32>
    %400 = arith.cmpi slt, %398, %399 : vector<1x1024xi32>
    %401 = arith.andi %396, %400 : vector<1x1024xi1>
    %cst_147 = arith.constant 0.000000e+00 : f32
    %402 = vector.shape_cast %401 : vector<1x1024xi1> to vector<1x1024xi1>
    %403 = vector.broadcast %402 : vector<1x1024xi1> to vector<4x1024xi1>
    %404 = vector.broadcast %cst_147 : f32 to vector<4x1024xf32>
    %405 = arith.select %403, %382, %404 : vector<4x1024xi1>, vector<4x1024xf32>
    %c56 = arith.constant 56 : index
    %c0_148 = arith.constant 0 : index
    %406 = vector.load %arg10[%c56, %c0_148] : memref<100x1024xf32, #tpu.memory_space<vmem>>, vector<4x1024xf32>
    tpu.vector_store %arg10[%c56, %c0_148], %405 {strides = array<i32>} : memref<100x1024xf32, #tpu.memory_space<vmem>>, vector<4x1024xf32>,
    %407 = vector.extract_strided_slice %1 {offsets = [0, 14], sizes = [4, 1010], strides = [1, 1]} : vector<4x1024xf32> to vector<4x1010xf32>
    %408 = vector.extract_strided_slice %1 {offsets = [0, 0], sizes = [4, 14], strides = [1, 1]} : vector<4x1024xf32> to vector<4x14xf32>
    %409 = tpu.concatenate %407, %408 in 1 : vector<4x1010xf32>, vector<4x14xf32> -> vector<4x1024xf32>
    %c1_i32_149 = arith.constant 1 : i32
    %410 = vector.broadcast %c1_i32_149 : i32 to vector<1x1024xi32>
    %411 = arith.addi %2, %410 : vector<1x1024xi32>
    %c0_i32_150 = arith.constant 0 : i32
    %412 = vector.broadcast %c0_i32_150 : i32 to vector<1x1024xi32>
    %413 = arith.cmpi sge, %411, %412 : vector<1x1024xi32>
    %c1_i32_151 = arith.constant 1 : i32
    %414 = vector.broadcast %c1_i32_151 : i32 to vector<1x1024xi32>
    %415 = arith.addi %2, %414 : vector<1x1024xi32>
    %c16_i32_152 = arith.constant 16 : i32
    %416 = vector.broadcast %c16_i32_152 : i32 to vector<1x1024xi32>
    %417 = arith.cmpi slt, %415, %416 : vector<1x1024xi32>
    %418 = arith.andi %413, %417 : vector<1x1024xi1>
    %c-2_i32_153 = arith.constant -2 : i32
    %419 = vector.broadcast %c-2_i32_153 : i32 to vector<1x1024xi32>
    %420 = arith.addi %3, %419 : vector<1x1024xi32>
    %c0_i32_154 = arith.constant 0 : i32
    %421 = vector.broadcast %c0_i32_154 : i32 to vector<1x1024xi32>
    %422 = arith.cmpi sge, %420, %421 : vector<1x1024xi32>
    %423 = arith.andi %418, %422 : vector<1x1024xi1>
    %c-2_i32_155 = arith.constant -2 : i32
    %424 = vector.broadcast %c-2_i32_155 : i32 to vector<1x1024xi32>
    %425 = arith.addi %3, %424 : vector<1x1024xi32>
    %c16_i32_156 = arith.constant 16 : i32
    %426 = vector.broadcast %c16_i32_156 : i32 to vector<1x1024xi32>
    %427 = arith.cmpi slt, %425, %426 : vector<1x1024xi32>
    %428 = arith.andi %423, %427 : vector<1x1024xi1>
    %cst_157 = arith.constant 0.000000e+00 : f32
    %429 = vector.shape_cast %428 : vector<1x1024xi1> to vector<1x1024xi1>
    %430 = vector.broadcast %429 : vector<1x1024xi1> to vector<4x1024xi1>
    %431 = vector.broadcast %cst_157 : f32 to vector<4x1024xf32>
    %432 = arith.select %430, %409, %431 : vector<4x1024xi1>, vector<4x1024xf32>
    %c60 = arith.constant 60 : index
    %c0_158 = arith.constant 0 : index
    %433 = vector.load %arg10[%c60, %c0_158] : memref<100x1024xf32, #tpu.memory_space<vmem>>, vector<4x1024xf32>
    tpu.vector_store %arg10[%c60, %c0_158], %432 {strides = array<i32>} : memref<100x1024xf32, #tpu.memory_space<vmem>>, vector<4x1024xf32>,
    %434 = vector.extract_strided_slice %1 {offsets = [0, 15], sizes = [4, 1009], strides = [1, 1]} : vector<4x1024xf32> to vector<4x1009xf32>
    %435 = vector.extract_strided_slice %1 {offsets = [0, 0], sizes = [4, 15], strides = [1, 1]} : vector<4x1024xf32> to vector<4x15xf32>
    %436 = tpu.concatenate %434, %435 in 1 : vector<4x1009xf32>, vector<4x15xf32> -> vector<4x1024xf32>
    %c1_i32_159 = arith.constant 1 : i32
    %437 = vector.broadcast %c1_i32_159 : i32 to vector<1x1024xi32>
    %438 = arith.addi %2, %437 : vector<1x1024xi32>
    %c0_i32_160 = arith.constant 0 : i32
    %439 = vector.broadcast %c0_i32_160 : i32 to vector<1x1024xi32>
    %440 = arith.cmpi sge, %438, %439 : vector<1x1024xi32>
    %c1_i32_161 = arith.constant 1 : i32
    %441 = vector.broadcast %c1_i32_161 : i32 to vector<1x1024xi32>
    %442 = arith.addi %2, %441 : vector<1x1024xi32>
    %c16_i32_162 = arith.constant 16 : i32
    %443 = vector.broadcast %c16_i32_162 : i32 to vector<1x1024xi32>
    %444 = arith.cmpi slt, %442, %443 : vector<1x1024xi32>
    %445 = arith.andi %440, %444 : vector<1x1024xi1>
    %c-1_i32_163 = arith.constant -1 : i32
    %446 = vector.broadcast %c-1_i32_163 : i32 to vector<1x1024xi32>
    %447 = arith.addi %3, %446 : vector<1x1024xi32>
    %c0_i32_164 = arith.constant 0 : i32
    %448 = vector.broadcast %c0_i32_164 : i32 to vector<1x1024xi32>
    %449 = arith.cmpi sge, %447, %448 : vector<1x1024xi32>
    %450 = arith.andi %445, %449 : vector<1x1024xi1>
    %c-1_i32_165 = arith.constant -1 : i32
    %451 = vector.broadcast %c-1_i32_165 : i32 to vector<1x1024xi32>
    %452 = arith.addi %3, %451 : vector<1x1024xi32>
    %c16_i32_166 = arith.constant 16 : i32
    %453 = vector.broadcast %c16_i32_166 : i32 to vector<1x1024xi32>
    %454 = arith.cmpi slt, %452, %453 : vector<1x1024xi32>
    %455 = arith.andi %450, %454 : vector<1x1024xi1>
    %cst_167 = arith.constant 0.000000e+00 : f32
    %456 = vector.shape_cast %455 : vector<1x1024xi1> to vector<1x1024xi1>
    %457 = vector.broadcast %456 : vector<1x1024xi1> to vector<4x1024xi1>
    %458 = vector.broadcast %cst_167 : f32 to vector<4x1024xf32>
    %459 = arith.select %457, %436, %458 : vector<4x1024xi1>, vector<4x1024xf32>
    %c64 = arith.constant 64 : index
    %c0_168 = arith.constant 0 : index
    %460 = vector.load %arg10[%c64, %c0_168] : memref<100x1024xf32, #tpu.memory_space<vmem>>, vector<4x1024xf32>
    tpu.vector_store %arg10[%c64, %c0_168], %459 {strides = array<i32>} : memref<100x1024xf32, #tpu.memory_space<vmem>>, vector<4x1024xf32>,
    %461 = vector.extract_strided_slice %1 {offsets = [0, 16], sizes = [4, 1008], strides = [1, 1]} : vector<4x1024xf32> to vector<4x1008xf32>
    %462 = vector.extract_strided_slice %1 {offsets = [0, 0], sizes = [4, 16], strides = [1, 1]} : vector<4x1024xf32> to vector<4x16xf32>
    %463 = tpu.concatenate %461, %462 in 1 : vector<4x1008xf32>, vector<4x16xf32> -> vector<4x1024xf32>
    %c1_i32_169 = arith.constant 1 : i32
    %464 = vector.broadcast %c1_i32_169 : i32 to vector<1x1024xi32>
    %465 = arith.addi %2, %464 : vector<1x1024xi32>
    %c0_i32_170 = arith.constant 0 : i32
    %466 = vector.broadcast %c0_i32_170 : i32 to vector<1x1024xi32>
    %467 = arith.cmpi sge, %465, %466 : vector<1x1024xi32>
    %c1_i32_171 = arith.constant 1 : i32
    %468 = vector.broadcast %c1_i32_171 : i32 to vector<1x1024xi32>
    %469 = arith.addi %2, %468 : vector<1x1024xi32>
    %c16_i32_172 = arith.constant 16 : i32
    %470 = vector.broadcast %c16_i32_172 : i32 to vector<1x1024xi32>
    %471 = arith.cmpi slt, %469, %470 : vector<1x1024xi32>
    %472 = arith.andi %467, %471 : vector<1x1024xi1>
    %c0_i32_173 = arith.constant 0 : i32
    %473 = vector.broadcast %c0_i32_173 : i32 to vector<1x1024xi32>
    %474 = arith.addi %3, %473 : vector<1x1024xi32>
    %c0_i32_174 = arith.constant 0 : i32
    %475 = vector.broadcast %c0_i32_174 : i32 to vector<1x1024xi32>
    %476 = arith.cmpi sge, %474, %475 : vector<1x1024xi32>
    %477 = arith.andi %472, %476 : vector<1x1024xi1>
    %c0_i32_175 = arith.constant 0 : i32
    %478 = vector.broadcast %c0_i32_175 : i32 to vector<1x1024xi32>
    %479 = arith.addi %3, %478 : vector<1x1024xi32>
    %c16_i32_176 = arith.constant 16 : i32
    %480 = vector.broadcast %c16_i32_176 : i32 to vector<1x1024xi32>
    %481 = arith.cmpi slt, %479, %480 : vector<1x1024xi32>
    %482 = arith.andi %477, %481 : vector<1x1024xi1>
    %cst_177 = arith.constant 0.000000e+00 : f32
    %483 = vector.shape_cast %482 : vector<1x1024xi1> to vector<1x1024xi1>
    %484 = vector.broadcast %483 : vector<1x1024xi1> to vector<4x1024xi1>
    %485 = vector.broadcast %cst_177 : f32 to vector<4x1024xf32>
    %486 = arith.select %484, %463, %485 : vector<4x1024xi1>, vector<4x1024xf32>
    %c68 = arith.constant 68 : index
    %c0_178 = arith.constant 0 : index
    %487 = vector.load %arg10[%c68, %c0_178] : memref<100x1024xf32, #tpu.memory_space<vmem>>, vector<4x1024xf32>
    tpu.vector_store %arg10[%c68, %c0_178], %486 {strides = array<i32>} : memref<100x1024xf32, #tpu.memory_space<vmem>>, vector<4x1024xf32>,
    %488 = vector.extract_strided_slice %1 {offsets = [0, 17], sizes = [4, 1007], strides = [1, 1]} : vector<4x1024xf32> to vector<4x1007xf32>
    %489 = vector.extract_strided_slice %1 {offsets = [0, 0], sizes = [4, 17], strides = [1, 1]} : vector<4x1024xf32> to vector<4x17xf32>
    %490 = tpu.concatenate %488, %489 in 1 : vector<4x1007xf32>, vector<4x17xf32> -> vector<4x1024xf32>
    %c1_i32_179 = arith.constant 1 : i32
    %491 = vector.broadcast %c1_i32_179 : i32 to vector<1x1024xi32>
    %492 = arith.addi %2, %491 : vector<1x1024xi32>
    %c0_i32_180 = arith.constant 0 : i32
    %493 = vector.broadcast %c0_i32_180 : i32 to vector<1x1024xi32>
    %494 = arith.cmpi sge, %492, %493 : vector<1x1024xi32>
    %c1_i32_181 = arith.constant 1 : i32
    %495 = vector.broadcast %c1_i32_181 : i32 to vector<1x1024xi32>
    %496 = arith.addi %2, %495 : vector<1x1024xi32>
    %c16_i32_182 = arith.constant 16 : i32
    %497 = vector.broadcast %c16_i32_182 : i32 to vector<1x1024xi32>
    %498 = arith.cmpi slt, %496, %497 : vector<1x1024xi32>
    %499 = arith.andi %494, %498 : vector<1x1024xi1>
    %c1_i32_183 = arith.constant 1 : i32
    %500 = vector.broadcast %c1_i32_183 : i32 to vector<1x1024xi32>
    %501 = arith.addi %3, %500 : vector<1x1024xi32>
    %c0_i32_184 = arith.constant 0 : i32
    %502 = vector.broadcast %c0_i32_184 : i32 to vector<1x1024xi32>
    %503 = arith.cmpi sge, %501, %502 : vector<1x1024xi32>
    %504 = arith.andi %499, %503 : vector<1x1024xi1>
    %c1_i32_185 = arith.constant 1 : i32
    %505 = vector.broadcast %c1_i32_185 : i32 to vector<1x1024xi32>
    %506 = arith.addi %3, %505 : vector<1x1024xi32>
    %c16_i32_186 = arith.constant 16 : i32
    %507 = vector.broadcast %c16_i32_186 : i32 to vector<1x1024xi32>
    %508 = arith.cmpi slt, %506, %507 : vector<1x1024xi32>
    %509 = arith.andi %504, %508 : vector<1x1024xi1>
    %cst_187 = arith.constant 0.000000e+00 : f32
    %510 = vector.shape_cast %509 : vector<1x1024xi1> to vector<1x1024xi1>
    %511 = vector.broadcast %510 : vector<1x1024xi1> to vector<4x1024xi1>
    %512 = vector.broadcast %cst_187 : f32 to vector<4x1024xf32>
    %513 = arith.select %511, %490, %512 : vector<4x1024xi1>, vector<4x1024xf32>
    %c72 = arith.constant 72 : index
    %c0_188 = arith.constant 0 : index
    %514 = vector.load %arg10[%c72, %c0_188] : memref<100x1024xf32, #tpu.memory_space<vmem>>, vector<4x1024xf32>
    tpu.vector_store %arg10[%c72, %c0_188], %513 {strides = array<i32>} : memref<100x1024xf32, #tpu.memory_space<vmem>>, vector<4x1024xf32>,
    %515 = vector.extract_strided_slice %1 {offsets = [0, 18], sizes = [4, 1006], strides = [1, 1]} : vector<4x1024xf32> to vector<4x1006xf32>
    %516 = vector.extract_strided_slice %1 {offsets = [0, 0], sizes = [4, 18], strides = [1, 1]} : vector<4x1024xf32> to vector<4x18xf32>
    %517 = tpu.concatenate %515, %516 in 1 : vector<4x1006xf32>, vector<4x18xf32> -> vector<4x1024xf32>
    %c1_i32_189 = arith.constant 1 : i32
    %518 = vector.broadcast %c1_i32_189 : i32 to vector<1x1024xi32>
    %519 = arith.addi %2, %518 : vector<1x1024xi32>
    %c0_i32_190 = arith.constant 0 : i32
    %520 = vector.broadcast %c0_i32_190 : i32 to vector<1x1024xi32>
    %521 = arith.cmpi sge, %519, %520 : vector<1x1024xi32>
    %c1_i32_191 = arith.constant 1 : i32
    %522 = vector.broadcast %c1_i32_191 : i32 to vector<1x1024xi32>
    %523 = arith.addi %2, %522 : vector<1x1024xi32>
    %c16_i32_192 = arith.constant 16 : i32
    %524 = vector.broadcast %c16_i32_192 : i32 to vector<1x1024xi32>
    %525 = arith.cmpi slt, %523, %524 : vector<1x1024xi32>
    %526 = arith.andi %521, %525 : vector<1x1024xi1>
    %c2_i32_193 = arith.constant 2 : i32
    %527 = vector.broadcast %c2_i32_193 : i32 to vector<1x1024xi32>
    %528 = arith.addi %3, %527 : vector<1x1024xi32>
    %c0_i32_194 = arith.constant 0 : i32
    %529 = vector.broadcast %c0_i32_194 : i32 to vector<1x1024xi32>
    %530 = arith.cmpi sge, %528, %529 : vector<1x1024xi32>
    %531 = arith.andi %526, %530 : vector<1x1024xi1>
    %c2_i32_195 = arith.constant 2 : i32
    %532 = vector.broadcast %c2_i32_195 : i32 to vector<1x1024xi32>
    %533 = arith.addi %3, %532 : vector<1x1024xi32>
    %c16_i32_196 = arith.constant 16 : i32
    %534 = vector.broadcast %c16_i32_196 : i32 to vector<1x1024xi32>
    %535 = arith.cmpi slt, %533, %534 : vector<1x1024xi32>
    %536 = arith.andi %531, %535 : vector<1x1024xi1>
    %cst_197 = arith.constant 0.000000e+00 : f32
    %537 = vector.shape_cast %536 : vector<1x1024xi1> to vector<1x1024xi1>
    %538 = vector.broadcast %537 : vector<1x1024xi1> to vector<4x1024xi1>
    %539 = vector.broadcast %cst_197 : f32 to vector<4x1024xf32>
    %540 = arith.select %538, %517, %539 : vector<4x1024xi1>, vector<4x1024xf32>
    %c76 = arith.constant 76 : index
    %c0_198 = arith.constant 0 : index
    %541 = vector.load %arg10[%c76, %c0_198] : memref<100x1024xf32, #tpu.memory_space<vmem>>, vector<4x1024xf32>
    tpu.vector_store %arg10[%c76, %c0_198], %540 {strides = array<i32>} : memref<100x1024xf32, #tpu.memory_space<vmem>>, vector<4x1024xf32>,
    %542 = vector.extract_strided_slice %1 {offsets = [0, 30], sizes = [4, 994], strides = [1, 1]} : vector<4x1024xf32> to vector<4x994xf32>
    %543 = vector.extract_strided_slice %1 {offsets = [0, 0], sizes = [4, 30], strides = [1, 1]} : vector<4x1024xf32> to vector<4x30xf32>
    %544 = tpu.concatenate %542, %543 in 1 : vector<4x994xf32>, vector<4x30xf32> -> vector<4x1024xf32>
    %c2_i32_199 = arith.constant 2 : i32
    %545 = vector.broadcast %c2_i32_199 : i32 to vector<1x1024xi32>
    %546 = arith.addi %2, %545 : vector<1x1024xi32>
    %c0_i32_200 = arith.constant 0 : i32
    %547 = vector.broadcast %c0_i32_200 : i32 to vector<1x1024xi32>
    %548 = arith.cmpi sge, %546, %547 : vector<1x1024xi32>
    %c2_i32_201 = arith.constant 2 : i32
    %549 = vector.broadcast %c2_i32_201 : i32 to vector<1x1024xi32>
    %550 = arith.addi %2, %549 : vector<1x1024xi32>
    %c16_i32_202 = arith.constant 16 : i32
    %551 = vector.broadcast %c16_i32_202 : i32 to vector<1x1024xi32>
    %552 = arith.cmpi slt, %550, %551 : vector<1x1024xi32>
    %553 = arith.andi %548, %552 : vector<1x1024xi1>
    %c-2_i32_203 = arith.constant -2 : i32
    %554 = vector.broadcast %c-2_i32_203 : i32 to vector<1x1024xi32>
    %555 = arith.addi %3, %554 : vector<1x1024xi32>
    %c0_i32_204 = arith.constant 0 : i32
    %556 = vector.broadcast %c0_i32_204 : i32 to vector<1x1024xi32>
    %557 = arith.cmpi sge, %555, %556 : vector<1x1024xi32>
    %558 = arith.andi %553, %557 : vector<1x1024xi1>
    %c-2_i32_205 = arith.constant -2 : i32
    %559 = vector.broadcast %c-2_i32_205 : i32 to vector<1x1024xi32>
    %560 = arith.addi %3, %559 : vector<1x1024xi32>
    %c16_i32_206 = arith.constant 16 : i32
    %561 = vector.broadcast %c16_i32_206 : i32 to vector<1x1024xi32>
    %562 = arith.cmpi slt, %560, %561 : vector<1x1024xi32>
    %563 = arith.andi %558, %562 : vector<1x1024xi1>
    %cst_207 = arith.constant 0.000000e+00 : f32
    %564 = vector.shape_cast %563 : vector<1x1024xi1> to vector<1x1024xi1>
    %565 = vector.broadcast %564 : vector<1x1024xi1> to vector<4x1024xi1>
    %566 = vector.broadcast %cst_207 : f32 to vector<4x1024xf32>
    %567 = arith.select %565, %544, %566 : vector<4x1024xi1>, vector<4x1024xf32>
    %c80 = arith.constant 80 : index
    %c0_208 = arith.constant 0 : index
    %568 = vector.load %arg10[%c80, %c0_208] : memref<100x1024xf32, #tpu.memory_space<vmem>>, vector<4x1024xf32>
    tpu.vector_store %arg10[%c80, %c0_208], %567 {strides = array<i32>} : memref<100x1024xf32, #tpu.memory_space<vmem>>, vector<4x1024xf32>,
    %569 = vector.extract_strided_slice %1 {offsets = [0, 31], sizes = [4, 993], strides = [1, 1]} : vector<4x1024xf32> to vector<4x993xf32>
    %570 = vector.extract_strided_slice %1 {offsets = [0, 0], sizes = [4, 31], strides = [1, 1]} : vector<4x1024xf32> to vector<4x31xf32>
    %571 = tpu.concatenate %569, %570 in 1 : vector<4x993xf32>, vector<4x31xf32> -> vector<4x1024xf32>
    %c2_i32_209 = arith.constant 2 : i32
    %572 = vector.broadcast %c2_i32_209 : i32 to vector<1x1024xi32>
    %573 = arith.addi %2, %572 : vector<1x1024xi32>
    %c0_i32_210 = arith.constant 0 : i32
    %574 = vector.broadcast %c0_i32_210 : i32 to vector<1x1024xi32>
    %575 = arith.cmpi sge, %573, %574 : vector<1x1024xi32>
    %c2_i32_211 = arith.constant 2 : i32
    %576 = vector.broadcast %c2_i32_211 : i32 to vector<1x1024xi32>
    %577 = arith.addi %2, %576 : vector<1x1024xi32>
    %c16_i32_212 = arith.constant 16 : i32
    %578 = vector.broadcast %c16_i32_212 : i32 to vector<1x1024xi32>
    %579 = arith.cmpi slt, %577, %578 : vector<1x1024xi32>
    %580 = arith.andi %575, %579 : vector<1x1024xi1>
    %c-1_i32_213 = arith.constant -1 : i32
    %581 = vector.broadcast %c-1_i32_213 : i32 to vector<1x1024xi32>
    %582 = arith.addi %3, %581 : vector<1x1024xi32>
    %c0_i32_214 = arith.constant 0 : i32
    %583 = vector.broadcast %c0_i32_214 : i32 to vector<1x1024xi32>
    %584 = arith.cmpi sge, %582, %583 : vector<1x1024xi32>
    %585 = arith.andi %580, %584 : vector<1x1024xi1>
    %c-1_i32_215 = arith.constant -1 : i32
    %586 = vector.broadcast %c-1_i32_215 : i32 to vector<1x1024xi32>
    %587 = arith.addi %3, %586 : vector<1x1024xi32>
    %c16_i32_216 = arith.constant 16 : i32
    %588 = vector.broadcast %c16_i32_216 : i32 to vector<1x1024xi32>
    %589 = arith.cmpi slt, %587, %588 : vector<1x1024xi32>
    %590 = arith.andi %585, %589 : vector<1x1024xi1>
    %cst_217 = arith.constant 0.000000e+00 : f32
    %591 = vector.shape_cast %590 : vector<1x1024xi1> to vector<1x1024xi1>
    %592 = vector.broadcast %591 : vector<1x1024xi1> to vector<4x1024xi1>
    %593 = vector.broadcast %cst_217 : f32 to vector<4x1024xf32>
    %594 = arith.select %592, %571, %593 : vector<4x1024xi1>, vector<4x1024xf32>
    %c84 = arith.constant 84 : index
    %c0_218 = arith.constant 0 : index
    %595 = vector.load %arg10[%c84, %c0_218] : memref<100x1024xf32, #tpu.memory_space<vmem>>, vector<4x1024xf32>
    tpu.vector_store %arg10[%c84, %c0_218], %594 {strides = array<i32>} : memref<100x1024xf32, #tpu.memory_space<vmem>>, vector<4x1024xf32>,
    %596 = vector.extract_strided_slice %1 {offsets = [0, 32], sizes = [4, 992], strides = [1, 1]} : vector<4x1024xf32> to vector<4x992xf32>
    %597 = vector.extract_strided_slice %1 {offsets = [0, 0], sizes = [4, 32], strides = [1, 1]} : vector<4x1024xf32> to vector<4x32xf32>
    %598 = tpu.concatenate %596, %597 in 1 : vector<4x992xf32>, vector<4x32xf32> -> vector<4x1024xf32>
    %c2_i32_219 = arith.constant 2 : i32
    %599 = vector.broadcast %c2_i32_219 : i32 to vector<1x1024xi32>
    %600 = arith.addi %2, %599 : vector<1x1024xi32>
    %c0_i32_220 = arith.constant 0 : i32
    %601 = vector.broadcast %c0_i32_220 : i32 to vector<1x1024xi32>
    %602 = arith.cmpi sge, %600, %601 : vector<1x1024xi32>
    %c2_i32_221 = arith.constant 2 : i32
    %603 = vector.broadcast %c2_i32_221 : i32 to vector<1x1024xi32>
    %604 = arith.addi %2, %603 : vector<1x1024xi32>
    %c16_i32_222 = arith.constant 16 : i32
    %605 = vector.broadcast %c16_i32_222 : i32 to vector<1x1024xi32>
    %606 = arith.cmpi slt, %604, %605 : vector<1x1024xi32>
    %607 = arith.andi %602, %606 : vector<1x1024xi1>
    %c0_i32_223 = arith.constant 0 : i32
    %608 = vector.broadcast %c0_i32_223 : i32 to vector<1x1024xi32>
    %609 = arith.addi %3, %608 : vector<1x1024xi32>
    %c0_i32_224 = arith.constant 0 : i32
    %610 = vector.broadcast %c0_i32_224 : i32 to vector<1x1024xi32>
    %611 = arith.cmpi sge, %609, %610 : vector<1x1024xi32>
    %612 = arith.andi %607, %611 : vector<1x1024xi1>
    %c0_i32_225 = arith.constant 0 : i32
    %613 = vector.broadcast %c0_i32_225 : i32 to vector<1x1024xi32>
    %614 = arith.addi %3, %613 : vector<1x1024xi32>
    %c16_i32_226 = arith.constant 16 : i32
    %615 = vector.broadcast %c16_i32_226 : i32 to vector<1x1024xi32>
    %616 = arith.cmpi slt, %614, %615 : vector<1x1024xi32>
    %617 = arith.andi %612, %616 : vector<1x1024xi1>
    %cst_227 = arith.constant 0.000000e+00 : f32
    %618 = vector.shape_cast %617 : vector<1x1024xi1> to vector<1x1024xi1>
    %619 = vector.broadcast %618 : vector<1x1024xi1> to vector<4x1024xi1>
    %620 = vector.broadcast %cst_227 : f32 to vector<4x1024xf32>
    %621 = arith.select %619, %598, %620 : vector<4x1024xi1>, vector<4x1024xf32>
    %c88 = arith.constant 88 : index
    %c0_228 = arith.constant 0 : index
    %622 = vector.load %arg10[%c88, %c0_228] : memref<100x1024xf32, #tpu.memory_space<vmem>>, vector<4x1024xf32>
    tpu.vector_store %arg10[%c88, %c0_228], %621 {strides = array<i32>} : memref<100x1024xf32, #tpu.memory_space<vmem>>, vector<4x1024xf32>,
    %623 = vector.extract_strided_slice %1 {offsets = [0, 33], sizes = [4, 991], strides = [1, 1]} : vector<4x1024xf32> to vector<4x991xf32>
    %624 = vector.extract_strided_slice %1 {offsets = [0, 0], sizes = [4, 33], strides = [1, 1]} : vector<4x1024xf32> to vector<4x33xf32>
    %625 = tpu.concatenate %623, %624 in 1 : vector<4x991xf32>, vector<4x33xf32> -> vector<4x1024xf32>
    %c2_i32_229 = arith.constant 2 : i32
    %626 = vector.broadcast %c2_i32_229 : i32 to vector<1x1024xi32>
    %627 = arith.addi %2, %626 : vector<1x1024xi32>
    %c0_i32_230 = arith.constant 0 : i32
    %628 = vector.broadcast %c0_i32_230 : i32 to vector<1x1024xi32>
    %629 = arith.cmpi sge, %627, %628 : vector<1x1024xi32>
    %c2_i32_231 = arith.constant 2 : i32
    %630 = vector.broadcast %c2_i32_231 : i32 to vector<1x1024xi32>
    %631 = arith.addi %2, %630 : vector<1x1024xi32>
    %c16_i32_232 = arith.constant 16 : i32
    %632 = vector.broadcast %c16_i32_232 : i32 to vector<1x1024xi32>
    %633 = arith.cmpi slt, %631, %632 : vector<1x1024xi32>
    %634 = arith.andi %629, %633 : vector<1x1024xi1>
    %c1_i32_233 = arith.constant 1 : i32
    %635 = vector.broadcast %c1_i32_233 : i32 to vector<1x1024xi32>
    %636 = arith.addi %3, %635 : vector<1x1024xi32>
    %c0_i32_234 = arith.constant 0 : i32
    %637 = vector.broadcast %c0_i32_234 : i32 to vector<1x1024xi32>
    %638 = arith.cmpi sge, %636, %637 : vector<1x1024xi32>
    %639 = arith.andi %634, %638 : vector<1x1024xi1>
    %c1_i32_235 = arith.constant 1 : i32
    %640 = vector.broadcast %c1_i32_235 : i32 to vector<1x1024xi32>
    %641 = arith.addi %3, %640 : vector<1x1024xi32>
    %c16_i32_236 = arith.constant 16 : i32
    %642 = vector.broadcast %c16_i32_236 : i32 to vector<1x1024xi32>
    %643 = arith.cmpi slt, %641, %642 : vector<1x1024xi32>
    %644 = arith.andi %639, %643 : vector<1x1024xi1>
    %cst_237 = arith.constant 0.000000e+00 : f32
    %645 = vector.shape_cast %644 : vector<1x1024xi1> to vector<1x1024xi1>
    %646 = vector.broadcast %645 : vector<1x1024xi1> to vector<4x1024xi1>
    %647 = vector.broadcast %cst_237 : f32 to vector<4x1024xf32>
    %648 = arith.select %646, %625, %647 : vector<4x1024xi1>, vector<4x1024xf32>
    %c92 = arith.constant 92 : index
    %c0_238 = arith.constant 0 : index
    %649 = vector.load %arg10[%c92, %c0_238] : memref<100x1024xf32, #tpu.memory_space<vmem>>, vector<4x1024xf32>
    tpu.vector_store %arg10[%c92, %c0_238], %648 {strides = array<i32>} : memref<100x1024xf32, #tpu.memory_space<vmem>>, vector<4x1024xf32>,
    %650 = vector.extract_strided_slice %1 {offsets = [0, 34], sizes = [4, 990], strides = [1, 1]} : vector<4x1024xf32> to vector<4x990xf32>
    %651 = vector.extract_strided_slice %1 {offsets = [0, 0], sizes = [4, 34], strides = [1, 1]} : vector<4x1024xf32> to vector<4x34xf32>
    %652 = tpu.concatenate %650, %651 in 1 : vector<4x990xf32>, vector<4x34xf32> -> vector<4x1024xf32>
    %c2_i32_239 = arith.constant 2 : i32
    %653 = vector.broadcast %c2_i32_239 : i32 to vector<1x1024xi32>
    %654 = arith.addi %2, %653 : vector<1x1024xi32>
    %c0_i32_240 = arith.constant 0 : i32
    %655 = vector.broadcast %c0_i32_240 : i32 to vector<1x1024xi32>
    %656 = arith.cmpi sge, %654, %655 : vector<1x1024xi32>
    %c2_i32_241 = arith.constant 2 : i32
    %657 = vector.broadcast %c2_i32_241 : i32 to vector<1x1024xi32>
    %658 = arith.addi %2, %657 : vector<1x1024xi32>
    %c16_i32_242 = arith.constant 16 : i32
    %659 = vector.broadcast %c16_i32_242 : i32 to vector<1x1024xi32>
    %660 = arith.cmpi slt, %658, %659 : vector<1x1024xi32>
    %661 = arith.andi %656, %660 : vector<1x1024xi1>
    %c2_i32_243 = arith.constant 2 : i32
    %662 = vector.broadcast %c2_i32_243 : i32 to vector<1x1024xi32>
    %663 = arith.addi %3, %662 : vector<1x1024xi32>
    %c0_i32_244 = arith.constant 0 : i32
    %664 = vector.broadcast %c0_i32_244 : i32 to vector<1x1024xi32>
    %665 = arith.cmpi sge, %663, %664 : vector<1x1024xi32>
    %666 = arith.andi %661, %665 : vector<1x1024xi1>
    %c2_i32_245 = arith.constant 2 : i32
    %667 = vector.broadcast %c2_i32_245 : i32 to vector<1x1024xi32>
    %668 = arith.addi %3, %667 : vector<1x1024xi32>
    %c16_i32_246 = arith.constant 16 : i32
    %669 = vector.broadcast %c16_i32_246 : i32 to vector<1x1024xi32>
    %670 = arith.cmpi slt, %668, %669 : vector<1x1024xi32>
    %671 = arith.andi %666, %670 : vector<1x1024xi1>
    %cst_247 = arith.constant 0.000000e+00 : f32
    %672 = vector.shape_cast %671 : vector<1x1024xi1> to vector<1x1024xi1>
    %673 = vector.broadcast %672 : vector<1x1024xi1> to vector<4x1024xi1>
    %674 = vector.broadcast %cst_247 : f32 to vector<4x1024xf32>
    %675 = arith.select %673, %652, %674 : vector<4x1024xi1>, vector<4x1024xf32>
    %c96 = arith.constant 96 : index
    %c0_248 = arith.constant 0 : index
    %676 = vector.load %arg10[%c96, %c0_248] : memref<100x1024xf32, #tpu.memory_space<vmem>>, vector<4x1024xf32>
    tpu.vector_store %arg10[%c96, %c0_248], %675 {strides = array<i32>} : memref<100x1024xf32, #tpu.memory_space<vmem>>, vector<4x1024xf32>,
    %c0_249 = arith.constant 0 : index
    %c0_250 = arith.constant 0 : index
    %677 = vector.load %arg3[%c0_249, %c0_250] : memref<16x100xf32, #tpu.memory_space<vmem>>, vector<16x100xf32>
    %c0_251 = arith.constant 0 : index
    %c0_252 = arith.constant 0 : index
    %678 = vector.load %arg10[%c0_251, %c0_252] : memref<100x1024xf32, #tpu.memory_space<vmem>>, vector<100x1024xf32>
    %cst_253 = arith.constant dense<0.000000e+00> : vector<16x1024xf32>
    %679 = tpu.matmul %677, %678, %cst_253 {dimension_numbers = #tpu.dot_dimension_numbers<[1], [0], [0], [1], [0, 0, 1, 1], [], []>} : vector<16x100xf32>, vector<100x1024xf32>, vector<16x1024xf32> -> vector<16x1024xf32>
    %c0_254 = arith.constant 0 : index
    %c0_255 = arith.constant 0 : index
    %680 = vector.load %arg4[%c0_254, %c0_255] : memref<16x1xf32, #tpu.memory_space<vmem>>, vector<16x1xf32>
    %681 = vector.broadcast %680 : vector<16x1xf32> to vector<16x1024xf32>
    %682 = arith.addf %679, %681 : vector<16x1024xf32>
    %cst_256 = arith.constant 0.000000e+00 : f32
    %683 = vector.broadcast %cst_256 : f32 to vector<16x1024xf32>
    %684 = arith.maximumf %682, %683 : vector<16x1024xf32>
    %685 = vector.extract_strided_slice %684 {offsets = [0, 0], sizes = [8, 1024], strides = [1, 1]} : vector<16x1024xf32> to vector<8x1024xf32>
    %686 = vector.extract_strided_slice %684 {offsets = [8, 0], sizes = [8, 1024], strides = [1, 1]} : vector<16x1024xf32> to vector<8x1024xf32>
    %687 = vector.extract_strided_slice %685 {offsets = [0, 768], sizes = [8, 256], strides = [1, 1]} : vector<8x1024xf32> to vector<8x256xf32>
    %688 = vector.extract_strided_slice %685 {offsets = [0, 0], sizes = [8, 768], strides = [1, 1]} : vector<8x1024xf32> to vector<8x768xf32>
    %689 = tpu.concatenate %687, %688 in 1 : vector<8x256xf32>, vector<8x768xf32> -> vector<8x1024xf32>
    %c-256_i32 = arith.constant -256 : i32
    %690 = vector.broadcast %c-256_i32 : i32 to vector<1x1024xi32>
    %691 = arith.addi %4, %690 : vector<1x1024xi32>
    %c0_i32_257 = arith.constant 0 : i32
    %692 = vector.broadcast %c0_i32_257 : i32 to vector<1x1024xi32>
    %693 = arith.cmpi sge, %691, %692 : vector<1x1024xi32>
    %c-256_i32_258 = arith.constant -256 : i32
    %694 = vector.broadcast %c-256_i32_258 : i32 to vector<1x1024xi32>
    %695 = arith.addi %4, %694 : vector<1x1024xi32>
    %c1024_i32 = arith.constant 1024 : i32
    %696 = vector.broadcast %c1024_i32 : i32 to vector<1x1024xi32>
    %697 = arith.cmpi slt, %695, %696 : vector<1x1024xi32>
    %698 = arith.andi %693, %697 : vector<1x1024xi1>
    %cst_259 = arith.constant 0.000000e+00 : f32
    %699 = vector.shape_cast %698 : vector<1x1024xi1> to vector<1x1024xi1>
    %700 = vector.broadcast %699 : vector<1x1024xi1> to vector<8x1024xi1>
    %701 = vector.broadcast %cst_259 : f32 to vector<8x1024xf32>
    %702 = arith.select %700, %689, %701 : vector<8x1024xi1>, vector<8x1024xf32>
    %c0_260 = arith.constant 0 : index
    %c0_261 = arith.constant 0 : index
    %703 = vector.load %arg11[%c0_260, %c0_261] : memref<64x1024xf32, #tpu.memory_space<vmem>>, vector<8x1024xf32>
    tpu.vector_store %arg11[%c0_260, %c0_261], %702 {strides = array<i32>} : memref<64x1024xf32, #tpu.memory_space<vmem>>, vector<8x1024xf32>,
    %c0_i32_262 = arith.constant 0 : i32
    %704 = vector.broadcast %c0_i32_262 : i32 to vector<1x1024xi32>
    %705 = arith.addi %4, %704 : vector<1x1024xi32>
    %c0_i32_263 = arith.constant 0 : i32
    %706 = vector.broadcast %c0_i32_263 : i32 to vector<1x1024xi32>
    %707 = arith.cmpi sge, %705, %706 : vector<1x1024xi32>
    %c0_i32_264 = arith.constant 0 : i32
    %708 = vector.broadcast %c0_i32_264 : i32 to vector<1x1024xi32>
    %709 = arith.addi %4, %708 : vector<1x1024xi32>
    %c1024_i32_265 = arith.constant 1024 : i32
    %710 = vector.broadcast %c1024_i32_265 : i32 to vector<1x1024xi32>
    %711 = arith.cmpi slt, %709, %710 : vector<1x1024xi32>
    %712 = arith.andi %707, %711 : vector<1x1024xi1>
    %cst_266 = arith.constant 0.000000e+00 : f32
    %713 = vector.shape_cast %712 : vector<1x1024xi1> to vector<1x1024xi1>
    %714 = vector.broadcast %713 : vector<1x1024xi1> to vector<8x1024xi1>
    %715 = vector.broadcast %cst_266 : f32 to vector<8x1024xf32>
    %716 = arith.select %714, %685, %715 : vector<8x1024xi1>, vector<8x1024xf32>
    %c8_267 = arith.constant 8 : index
    %c0_268 = arith.constant 0 : index
    %717 = vector.load %arg11[%c8_267, %c0_268] : memref<64x1024xf32, #tpu.memory_space<vmem>>, vector<8x1024xf32>
    tpu.vector_store %arg11[%c8_267, %c0_268], %716 {strides = array<i32>} : memref<64x1024xf32, #tpu.memory_space<vmem>>, vector<8x1024xf32>,
    %718 = vector.extract_strided_slice %685 {offsets = [0, 256], sizes = [8, 768], strides = [1, 1]} : vector<8x1024xf32> to vector<8x768xf32>
    %719 = vector.extract_strided_slice %685 {offsets = [0, 0], sizes = [8, 256], strides = [1, 1]} : vector<8x1024xf32> to vector<8x256xf32>
    %720 = tpu.concatenate %718, %719 in 1 : vector<8x768xf32>, vector<8x256xf32> -> vector<8x1024xf32>
    %c256_i32 = arith.constant 256 : i32
    %721 = vector.broadcast %c256_i32 : i32 to vector<1x1024xi32>
    %722 = arith.addi %4, %721 : vector<1x1024xi32>
    %c0_i32_269 = arith.constant 0 : i32
    %723 = vector.broadcast %c0_i32_269 : i32 to vector<1x1024xi32>
    %724 = arith.cmpi sge, %722, %723 : vector<1x1024xi32>
    %c256_i32_270 = arith.constant 256 : i32
    %725 = vector.broadcast %c256_i32_270 : i32 to vector<1x1024xi32>
    %726 = arith.addi %4, %725 : vector<1x1024xi32>
    %c1024_i32_271 = arith.constant 1024 : i32
    %727 = vector.broadcast %c1024_i32_271 : i32 to vector<1x1024xi32>
    %728 = arith.cmpi slt, %726, %727 : vector<1x1024xi32>
    %729 = arith.andi %724, %728 : vector<1x1024xi1>
    %cst_272 = arith.constant 0.000000e+00 : f32
    %730 = vector.shape_cast %729 : vector<1x1024xi1> to vector<1x1024xi1>
    %731 = vector.broadcast %730 : vector<1x1024xi1> to vector<8x1024xi1>
    %732 = vector.broadcast %cst_272 : f32 to vector<8x1024xf32>
    %733 = arith.select %731, %720, %732 : vector<8x1024xi1>, vector<8x1024xf32>
    %c16_273 = arith.constant 16 : index
    %c0_274 = arith.constant 0 : index
    %734 = vector.load %arg11[%c16_273, %c0_274] : memref<64x1024xf32, #tpu.memory_space<vmem>>, vector<8x1024xf32>
    tpu.vector_store %arg11[%c16_273, %c0_274], %733 {strides = array<i32>} : memref<64x1024xf32, #tpu.memory_space<vmem>>, vector<8x1024xf32>,
    %735 = vector.extract_strided_slice %686 {offsets = [0, 512], sizes = [8, 512], strides = [1, 1]} : vector<8x1024xf32> to vector<8x512xf32>
    %736 = vector.extract_strided_slice %686 {offsets = [0, 0], sizes = [8, 512], strides = [1, 1]} : vector<8x1024xf32> to vector<8x512xf32>
    %737 = tpu.concatenate %735, %736 in 1 : vector<8x512xf32>, vector<8x512xf32> -> vector<8x1024xf32>
    %c-512_i32 = arith.constant -512 : i32
    %738 = vector.broadcast %c-512_i32 : i32 to vector<1x1024xi32>
    %739 = arith.addi %4, %738 : vector<1x1024xi32>
    %c0_i32_275 = arith.constant 0 : i32
    %740 = vector.broadcast %c0_i32_275 : i32 to vector<1x1024xi32>
    %741 = arith.cmpi sge, %739, %740 : vector<1x1024xi32>
    %c-512_i32_276 = arith.constant -512 : i32
    %742 = vector.broadcast %c-512_i32_276 : i32 to vector<1x1024xi32>
    %743 = arith.addi %4, %742 : vector<1x1024xi32>
    %c1024_i32_277 = arith.constant 1024 : i32
    %744 = vector.broadcast %c1024_i32_277 : i32 to vector<1x1024xi32>
    %745 = arith.cmpi slt, %743, %744 : vector<1x1024xi32>
    %746 = arith.andi %741, %745 : vector<1x1024xi1>
    %cst_278 = arith.constant 0.000000e+00 : f32
    %747 = vector.shape_cast %746 : vector<1x1024xi1> to vector<1x1024xi1>
    %748 = vector.broadcast %747 : vector<1x1024xi1> to vector<8x1024xi1>
    %749 = vector.broadcast %cst_278 : f32 to vector<8x1024xf32>
    %750 = arith.select %748, %737, %749 : vector<8x1024xi1>, vector<8x1024xf32>
    %c24_279 = arith.constant 24 : index
    %c0_280 = arith.constant 0 : index
    %751 = vector.load %arg11[%c24_279, %c0_280] : memref<64x1024xf32, #tpu.memory_space<vmem>>, vector<8x1024xf32>
    tpu.vector_store %arg11[%c24_279, %c0_280], %750 {strides = array<i32>} : memref<64x1024xf32, #tpu.memory_space<vmem>>, vector<8x1024xf32>,
    %752 = vector.extract_strided_slice %686 {offsets = [0, 768], sizes = [8, 256], strides = [1, 1]} : vector<8x1024xf32> to vector<8x256xf32>
    %753 = vector.extract_strided_slice %686 {offsets = [0, 0], sizes = [8, 768], strides = [1, 1]} : vector<8x1024xf32> to vector<8x768xf32>
    %754 = tpu.concatenate %752, %753 in 1 : vector<8x256xf32>, vector<8x768xf32> -> vector<8x1024xf32>
    %c-256_i32_281 = arith.constant -256 : i32
    %755 = vector.broadcast %c-256_i32_281 : i32 to vector<1x1024xi32>
    %756 = arith.addi %4, %755 : vector<1x1024xi32>
    %c0_i32_282 = arith.constant 0 : i32
    %757 = vector.broadcast %c0_i32_282 : i32 to vector<1x1024xi32>
    %758 = arith.cmpi sge, %756, %757 : vector<1x1024xi32>
    %c-256_i32_283 = arith.constant -256 : i32
    %759 = vector.broadcast %c-256_i32_283 : i32 to vector<1x1024xi32>
    %760 = arith.addi %4, %759 : vector<1x1024xi32>
    %c1024_i32_284 = arith.constant 1024 : i32
    %761 = vector.broadcast %c1024_i32_284 : i32 to vector<1x1024xi32>
    %762 = arith.cmpi slt, %760, %761 : vector<1x1024xi32>
    %763 = arith.andi %758, %762 : vector<1x1024xi1>
    %cst_285 = arith.constant 0.000000e+00 : f32
    %764 = vector.shape_cast %763 : vector<1x1024xi1> to vector<1x1024xi1>
    %765 = vector.broadcast %764 : vector<1x1024xi1> to vector<8x1024xi1>
    %766 = vector.broadcast %cst_285 : f32 to vector<8x1024xf32>
    %767 = arith.select %765, %754, %766 : vector<8x1024xi1>, vector<8x1024xf32>
    %c32_286 = arith.constant 32 : index
    %c0_287 = arith.constant 0 : index
    %768 = vector.load %arg11[%c32_286, %c0_287] : memref<64x1024xf32, #tpu.memory_space<vmem>>, vector<8x1024xf32>
    tpu.vector_store %arg11[%c32_286, %c0_287], %767 {strides = array<i32>} : memref<64x1024xf32, #tpu.memory_space<vmem>>, vector<8x1024xf32>,
    %c0_i32_288 = arith.constant 0 : i32
    %769 = vector.broadcast %c0_i32_288 : i32 to vector<1x1024xi32>
    %770 = arith.addi %4, %769 : vector<1x1024xi32>
    %c0_i32_289 = arith.constant 0 : i32
    %771 = vector.broadcast %c0_i32_289 : i32 to vector<1x1024xi32>
    %772 = arith.cmpi sge, %770, %771 : vector<1x1024xi32>
    %c0_i32_290 = arith.constant 0 : i32
    %773 = vector.broadcast %c0_i32_290 : i32 to vector<1x1024xi32>
    %774 = arith.addi %4, %773 : vector<1x1024xi32>
    %c1024_i32_291 = arith.constant 1024 : i32
    %775 = vector.broadcast %c1024_i32_291 : i32 to vector<1x1024xi32>
    %776 = arith.cmpi slt, %774, %775 : vector<1x1024xi32>
    %777 = arith.andi %772, %776 : vector<1x1024xi1>
    %cst_292 = arith.constant 0.000000e+00 : f32
    %778 = vector.shape_cast %777 : vector<1x1024xi1> to vector<1x1024xi1>
    %779 = vector.broadcast %778 : vector<1x1024xi1> to vector<8x1024xi1>
    %780 = vector.broadcast %cst_292 : f32 to vector<8x1024xf32>
    %781 = arith.select %779, %686, %780 : vector<8x1024xi1>, vector<8x1024xf32>
    %c40_293 = arith.constant 40 : index
    %c0_294 = arith.constant 0 : index
    %782 = vector.load %arg11[%c40_293, %c0_294] : memref<64x1024xf32, #tpu.memory_space<vmem>>, vector<8x1024xf32>
    tpu.vector_store %arg11[%c40_293, %c0_294], %781 {strides = array<i32>} : memref<64x1024xf32, #tpu.memory_space<vmem>>, vector<8x1024xf32>,
    %783 = vector.extract_strided_slice %686 {offsets = [0, 256], sizes = [8, 768], strides = [1, 1]} : vector<8x1024xf32> to vector<8x768xf32>
    %784 = vector.extract_strided_slice %686 {offsets = [0, 0], sizes = [8, 256], strides = [1, 1]} : vector<8x1024xf32> to vector<8x256xf32>
    %785 = tpu.concatenate %783, %784 in 1 : vector<8x768xf32>, vector<8x256xf32> -> vector<8x1024xf32>
    %c256_i32_295 = arith.constant 256 : i32
    %786 = vector.broadcast %c256_i32_295 : i32 to vector<1x1024xi32>
    %787 = arith.addi %4, %786 : vector<1x1024xi32>
    %c0_i32_296 = arith.constant 0 : i32
    %788 = vector.broadcast %c0_i32_296 : i32 to vector<1x1024xi32>
    %789 = arith.cmpi sge, %787, %788 : vector<1x1024xi32>
    %c256_i32_297 = arith.constant 256 : i32
    %790 = vector.broadcast %c256_i32_297 : i32 to vector<1x1024xi32>
    %791 = arith.addi %4, %790 : vector<1x1024xi32>
    %c1024_i32_298 = arith.constant 1024 : i32
    %792 = vector.broadcast %c1024_i32_298 : i32 to vector<1x1024xi32>
    %793 = arith.cmpi slt, %791, %792 : vector<1x1024xi32>
    %794 = arith.andi %789, %793 : vector<1x1024xi1>
    %cst_299 = arith.constant 0.000000e+00 : f32
    %795 = vector.shape_cast %794 : vector<1x1024xi1> to vector<1x1024xi1>
    %796 = vector.broadcast %795 : vector<1x1024xi1> to vector<8x1024xi1>
    %797 = vector.broadcast %cst_299 : f32 to vector<8x1024xf32>
    %798 = arith.select %796, %785, %797 : vector<8x1024xi1>, vector<8x1024xf32>
    %c48_300 = arith.constant 48 : index
    %c0_301 = arith.constant 0 : index
    %799 = vector.load %arg11[%c48_300, %c0_301] : memref<64x1024xf32, #tpu.memory_space<vmem>>, vector<8x1024xf32>
    tpu.vector_store %arg11[%c48_300, %c0_301], %798 {strides = array<i32>} : memref<64x1024xf32, #tpu.memory_space<vmem>>, vector<8x1024xf32>,
    %800 = vector.extract_strided_slice %686 {offsets = [0, 512], sizes = [8, 512], strides = [1, 1]} : vector<8x1024xf32> to vector<8x512xf32>
    %801 = vector.extract_strided_slice %686 {offsets = [0, 0], sizes = [8, 512], strides = [1, 1]} : vector<8x1024xf32> to vector<8x512xf32>
    %802 = tpu.concatenate %800, %801 in 1 : vector<8x512xf32>, vector<8x512xf32> -> vector<8x1024xf32>
    %c512_i32 = arith.constant 512 : i32
    %803 = vector.broadcast %c512_i32 : i32 to vector<1x1024xi32>
    %804 = arith.addi %4, %803 : vector<1x1024xi32>
    %c0_i32_302 = arith.constant 0 : i32
    %805 = vector.broadcast %c0_i32_302 : i32 to vector<1x1024xi32>
    %806 = arith.cmpi sge, %804, %805 : vector<1x1024xi32>
    %c512_i32_303 = arith.constant 512 : i32
    %807 = vector.broadcast %c512_i32_303 : i32 to vector<1x1024xi32>
    %808 = arith.addi %4, %807 : vector<1x1024xi32>
    %c1024_i32_304 = arith.constant 1024 : i32
    %809 = vector.broadcast %c1024_i32_304 : i32 to vector<1x1024xi32>
    %810 = arith.cmpi slt, %808, %809 : vector<1x1024xi32>
    %811 = arith.andi %806, %810 : vector<1x1024xi1>
    %cst_305 = arith.constant 0.000000e+00 : f32
    %812 = vector.shape_cast %811 : vector<1x1024xi1> to vector<1x1024xi1>
    %813 = vector.broadcast %812 : vector<1x1024xi1> to vector<8x1024xi1>
    %814 = vector.broadcast %cst_305 : f32 to vector<8x1024xf32>
    %815 = arith.select %813, %802, %814 : vector<8x1024xi1>, vector<8x1024xf32>
    %c56_306 = arith.constant 56 : index
    %c0_307 = arith.constant 0 : index
    %816 = vector.load %arg11[%c56_306, %c0_307] : memref<64x1024xf32, #tpu.memory_space<vmem>>, vector<8x1024xf32>
    tpu.vector_store %arg11[%c56_306, %c0_307], %815 {strides = array<i32>} : memref<64x1024xf32, #tpu.memory_space<vmem>>, vector<8x1024xf32>,
    %c0_308 = arith.constant 0 : index
    %c0_309 = arith.constant 0 : index
    %817 = vector.load %arg5[%c0_308, %c0_309] : memref<16x64xf32, #tpu.memory_space<vmem>>, vector<16x64xf32>
    %c0_310 = arith.constant 0 : index
    %c0_311 = arith.constant 0 : index
    %818 = vector.load %arg11[%c0_310, %c0_311] : memref<64x1024xf32, #tpu.memory_space<vmem>>, vector<64x1024xf32>
    %cst_312 = arith.constant dense<0.000000e+00> : vector<16x1024xf32>
    %819 = tpu.matmul %817, %818, %cst_312 {dimension_numbers = #tpu.dot_dimension_numbers<[1], [0], [0], [1], [0, 0, 1, 1], [], []>} : vector<16x64xf32>, vector<64x1024xf32>, vector<16x1024xf32> -> vector<16x1024xf32>
    %c0_313 = arith.constant 0 : index
    %c0_314 = arith.constant 0 : index
    %820 = vector.load %arg6[%c0_313, %c0_314] : memref<16x1xf32, #tpu.memory_space<vmem>>, vector<16x1xf32>
    %821 = vector.broadcast %820 : vector<16x1xf32> to vector<16x1024xf32>
    %822 = arith.addf %819, %821 : vector<16x1024xf32>
    %cst_315 = arith.constant 0.000000e+00 : f32
    %823 = vector.broadcast %cst_315 : f32 to vector<16x1024xf32>
    %824 = arith.maximumf %822, %823 : vector<16x1024xf32>
    %825 = vector.extract_strided_slice %824 {offsets = [0, 0], sizes = [8, 1024], strides = [1, 1]} : vector<16x1024xf32> to vector<8x1024xf32>
    %826 = vector.extract_strided_slice %824 {offsets = [8, 0], sizes = [8, 1024], strides = [1, 1]} : vector<16x1024xf32> to vector<8x1024xf32>
    %827 = arith.addf %825, %826 : vector<8x1024xf32>
    %c0_316 = arith.constant 0 : index
    %c0_317 = arith.constant 0 : index
    %828 = vector.load %arg7[%c0_316, %c0_317] : memref<8x8xf32, #tpu.memory_space<vmem>>, vector<8x8xf32>
    %cst_318 = arith.constant dense<0.000000e+00> : vector<8x1024xf32>
    %829 = tpu.matmul %828, %827, %cst_318 {dimension_numbers = #tpu.dot_dimension_numbers<[1], [0], [0], [1], [0, 0, 1, 1], [], []>} : vector<8x8xf32>, vector<8x1024xf32>, vector<8x1024xf32> -> vector<8x1024xf32>
    %c0_319 = arith.constant 0 : index
    %c0_320 = arith.constant 0 : index
    %830 = vector.load %arg8[%c0_319, %c0_320] : memref<8x1xf32, #tpu.memory_space<vmem>>, vector<8x1xf32>
    %831 = vector.broadcast %830 : vector<8x1xf32> to vector<8x1024xf32>
    %832 = arith.addf %829, %831 : vector<8x1024xf32>
    %cst_321 = arith.constant 0.000000e+00 : f32
    %833 = vector.broadcast %cst_321 : f32 to vector<8x1024xf32>
    %834 = arith.maximumf %832, %833 : vector<8x1024xf32>
    %c0_322 = arith.constant 0 : index
    %c0_323 = arith.constant 0 : index
    %c0_324 = arith.constant 0 : index
    %835 = vector.load %arg9[%c0_322, %c0_323, %c0_324] : memref<1x8x1024xf32, #tpu.memory_space<vmem>>, vector<1x8x1024xf32>
    %836 = vector.shape_cast %835 : vector<1x8x1024xf32> to vector<8x1024xf32>
    %837 = vector.shape_cast %834 : vector<8x1024xf32> to vector<1x8x1024xf32>
    tpu.vector_store %arg9[%c0_322, %c0_323, %c0_324], %837 {strides = array<i32>} : memref<1x8x1024xf32, #tpu.memory_space<vmem>>, vector<1x8x1024xf32>,
    return
  }
  func.func @transform_0(%arg0: i32) -> (i32, i32, i32) {
    %c0_i32 = arith.constant 0 : i32
    %c0_i32_0 = arith.constant 0 : i32
    %c0_i32_1 = arith.constant 0 : i32
    return %arg0, %c0_i32, %c0_i32_0 : i32, i32, i32
  }
  func.func @transform_1(%arg0: i32) -> (i32, i32) {
    %c0_i32 = arith.constant 0 : i32
    %c0_i32_0 = arith.constant 0 : i32
    %c0_i32_1 = arith.constant 0 : i32
    return %c0_i32, %c0_i32_0 : i32, i32
  }
  func.func @transform_2(%arg0: i32) -> (i32, i32) {
    %c0_i32 = arith.constant 0 : i32
    %c0_i32_0 = arith.constant 0 : i32
    %c0_i32_1 = arith.constant 0 : i32
    return %c0_i32, %c0_i32_0 : i32, i32
  }
  func.func @transform_3(%arg0: i32) -> (i32, i32) {
    %c0_i32 = arith.constant 0 : i32
    %c0_i32_0 = arith.constant 0 : i32
    %c0_i32_1 = arith.constant 0 : i32
    return %c0_i32, %c0_i32_0 : i32, i32
  }
  func.func @transform_4(%arg0: i32) -> (i32, i32) {
    %c0_i32 = arith.constant 0 : i32
    %c0_i32_0 = arith.constant 0 : i32
    %c0_i32_1 = arith.constant 0 : i32
    return %c0_i32, %c0_i32_0 : i32, i32
  }
  func.func @transform_5(%arg0: i32) -> (i32, i32) {
    %c0_i32 = arith.constant 0 : i32
    %c0_i32_0 = arith.constant 0 : i32
    %c0_i32_1 = arith.constant 0 : i32
    return %c0_i32, %c0_i32_0 : i32, i32
  }
  func.func @transform_6(%arg0: i32) -> (i32, i32) {
    %c0_i32 = arith.constant 0 : i32
    %c0_i32_0 = arith.constant 0 : i32
    %c0_i32_1 = arith.constant 0 : i32
    return %c0_i32, %c0_i32_0 : i32, i32
  }
  func.func @transform_7(%arg0: i32) -> (i32, i32) {
    %c0_i32 = arith.constant 0 : i32
    %c0_i32_0 = arith.constant 0 : i32
    %c0_i32_1 = arith.constant 0 : i32
    return %c0_i32, %c0_i32_0 : i32, i32
  }
  func.func @transform_8(%arg0: i32) -> (i32, i32, i32) {
    %c0_i32 = arith.constant 0 : i32
    %c0_i32_0 = arith.constant 0 : i32
    %c0_i32_1 = arith.constant 0 : i32
    return %arg0, %c0_i32, %c0_i32_0 : i32, i32, i32
  }
}

</mosaic_0001>

<llo_original>
// kernel: visual_block_pallas.1
$region0: #{visual_block_pallas.1}
  #allocation0 [shape = 'u32[]', space=smem, size = 0x4, offset = 0x4, fixed_abs, tag = 'smem constant byte address 0x4 - core index']
  #allocation1 [shape = 'u32[144,128]{1,0:T(1,128)}', space=vmem, size = 0x12000, scoped, tag = 'internal scratch']
  #allocation2 [shape = 'f32[100,1024]{1,0:T(8,128)}', space=vmem, size = 0x68000, scoped, tag = 'scratch operand']
  #allocation3 [shape = 'f32[64,1024]{1,0:T(8,128)}', space=vmem, size = 0x40000, scoped, tag = 'scratch operand']
  %s0 = inlined_call_operand.vmem [shape: f32[2,4,1024], index: 0, kind: input, shape index: {}]
  %s1 = inlined_call_operand.vmem [shape: s32[2,1024], index: 1, kind: input, shape index: {}]
  %s2 = inlined_call_operand.vmem [shape: f32[16,100], index: 2, kind: input, shape index: {}]
  %s3 = inlined_call_operand.vmem [shape: f32[16,1], index: 3, kind: input, shape index: {}]
  %s4 = inlined_call_operand.vmem [shape: f32[16,64], index: 4, kind: input, shape index: {}]
  %s5 = inlined_call_operand.vmem [shape: f32[16,1], index: 5, kind: input, shape index: {}]
  %s6 = inlined_call_operand.vmem [shape: f32[8,8], index: 6, kind: input, shape index: {}]
  %s7 = inlined_call_operand.vmem [shape: f32[8,1], index: 7, kind: input, shape index: {}]
  %s8 = inlined_call_operand.vmem [shape: f32[2,8,1024], index: 8, kind: output, shape index: {}]
  %s9 = sld [smem:[#allocation0]]
  $region65: #{visual_block_pallas.1} parent=0
    _
  %s11 = ssub.s32 1, %s9
  %s12 = scalar_select 0, %s11, %s9
  loop: start=0, step=1, limit=4
  $region2: #{visual_block_pallas.1} parent=0 // loop_pre_header
    _
  $region3: #{visual_block_pallas.1} parent=0 // loop_header
    %s14 = sphi 0, %s18
    %p15 = scmp.ge.s32.totalorder %s14, 4
    %s24 = sphi 0, %s26
    %s27 = sphi 0, %s24
    %s28 = sphi 0, %s27
    %s44 = sphi 0, %s28
    %s48 = sphi 0, %s48
    %s50 = sphi 0, %s48
    %s51 = sphi 0, %s50
    %s65 = sphi 0, %s51
    %s69 = sphi 0, %s69
    %s71 = sphi 0, %s69
    %s72 = sphi 0, %s71
    %s86 = sphi 0, %s72
    %s90 = sphi 0, %s90
    %s92 = sphi 0, %s90
    %s93 = sphi 0, %s92
    %s107 = sphi 0, %s93
    %s111 = sphi 0, %s111
    %s113 = sphi 0, %s111
    %s114 = sphi 0, %s113
    %s128 = sphi 0, %s114
    %s132 = sphi 0, %s132
    %s134 = sphi 0, %s132
    %s135 = sphi 0, %s134
    %s149 = sphi 0, %s135
    %s153 = sphi 0, %s153
    %s155 = sphi 0, %s153
    %s156 = sphi 0, %s155
    %s170 = sphi 0, %s156
    %s174 = sphi 0, %s174
    %s176 = sphi 0, %s174
    %s177 = sphi 0, %s176
    %s191 = sphi 0, %s177
    %s197 = sphi 0, %s199
    %s200 = sphi 0, %s197
    %s201 = sphi 0, %s200
    %s217 = sphi 0, %s201
  $region4: #{visual_block_pallas.1} parent=0 // loop_header_branch
    %17 = sbr.rel (%p15) target = $region8
  $region5: #{visual_block_pallas.1} parent=0 // loop_body
    %s19 = ssub.s32 %s14, 1
    %s20 = ssub.s32 %s14, 2
    %s21 = sadd.s32 %s14, 1
    %s22 = ssub.s32 %s14, %s21
    %p23 = scmp.eq.s32.totalorder %s22, 0
    %s25 = sadd.s32 %s24, 1
    %s26 = scalar_select %p23, %s24, %s25
    %p29 = pneg %p23
    %p30 = scmp.eq.s32.totalorder %s14, 1
    %p31 = por %p29, %p30
    %p32 = scmp.ne.s32.totalorder %s24, %s27
    %p33 = scmp.eq.s32.totalorder %s14, 0
    %p34 = por %p32, %p33
    %p35 = scmp.ne.s32.totalorder %s24, %s27
    %p36 = scmp.eq.s32.totalorder %s19, 1
    %p37 = por %p35, %p36
    %p38 = scmp.ne.s32.totalorder %s27, %s28
    %p39 = scmp.eq.s32.totalorder %s19, 0
    %p40 = por %p38, %p39
    %p41 = scmp.ne.s32.totalorder %s27, %s28
    %p42 = scmp.eq.s32.totalorder %s20, 1
    %p43 = por %p41, %p42
    %p45 = scmp.ne.s32.totalorder %s28, %s44
    %p46 = scmp.eq.s32.totalorder %s20, 0
    %p47 = por %p45, %p46
    %s49 = sadd.s32 %s48, 1
    %p52 = scmp.eq.s32.totalorder %s14, 1
    %p53 = scmp.ne.s32.totalorder %s48, %s50
    %p54 = scmp.eq.s32.totalorder %s14, 0
    %p55 = por %p53, %p54
    %p56 = scmp.ne.s32.totalorder %s48, %s50
    %p57 = scmp.eq.s32.totalorder %s19, 1
    %p58 = por %p56, %p57
    %p59 = scmp.ne.s32.totalorder %s50, %s51
    %p60 = scmp.eq.s32.totalorder %s19, 0
    %p61 = por %p59, %p60
    %p62 = scmp.ne.s32.totalorder %s50, %s51
    %p63 = scmp.eq.s32.totalorder %s20, 1
    %p64 = por %p62, %p63
    %p66 = scmp.ne.s32.totalorder %s51, %s65
    %p67 = scmp.eq.s32.totalorder %s20, 0
    %p68 = por %p66, %p67
    %s70 = sadd.s32 %s69, 1
    %p73 = scmp.eq.s32.totalorder %s14, 1
    %p74 = scmp.ne.s32.totalorder %s69, %s71
    %p75 = scmp.eq.s32.totalorder %s14, 0
    %p76 = por %p74, %p75
    %p77 = scmp.ne.s32.totalorder %s69, %s71
    %p78 = scmp.eq.s32.totalorder %s19, 1
    %p79 = por %p77, %p78
    %p80 = scmp.ne.s32.totalorder %s71, %s72
    %p81 = scmp.eq.s32.totalorder %s19, 0
    %p82 = por %p80, %p81
    %p83 = scmp.ne.s32.totalorder %s71, %s72
    %p84 = scmp.eq.s32.totalorder %s20, 1
    %p85 = por %p83, %p84
    %p87 = scmp.ne.s32.totalorder %s72, %s86
    %p88 = scmp.eq.s32.totalorder %s20, 0
    %p89 = por %p87, %p88
    %s91 = sadd.s32 %s90, 1
    %p94 = scmp.eq.s32.totalorder %s14, 1
    %p95 = scmp.ne.s32.totalorder %s90, %s92
    %p96 = scmp.eq.s32.totalorder %s14, 0
    %p97 = por %p95, %p96
    %p98 = scmp.ne.s32.totalorder %s90, %s92
    %p99 = scmp.eq.s32.totalorder %s19, 1
    %p100 = por %p98, %p99
    %p101 = scmp.ne.s32.totalorder %s92, %s93
    %p102 = scmp.eq.s32.totalorder %s19, 0
    %p103 = por %p101, %p102
    %p104 = scmp.ne.s32.totalorder %s92, %s93
    %p105 = scmp.eq.s32.totalorder %s20, 1
    %p106 = por %p104, %p105
    %p108 = scmp.ne.s32.totalorder %s93, %s107
    %p109 = scmp.eq.s32.totalorder %s20, 0
    %p110 = por %p108, %p109
    %s112 = sadd.s32 %s111, 1
    %p115 = scmp.eq.s32.totalorder %s14, 1
    %p116 = scmp.ne.s32.totalorder %s111, %s113
    %p117 = scmp.eq.s32.totalorder %s14, 0
    %p118 = por %p116, %p117
    %p119 = scmp.ne.s32.totalorder %s111, %s113
    %p120 = scmp.eq.s32.totalorder %s19, 1
    %p121 = por %p119, %p120
    %p122 = scmp.ne.s32.totalorder %s113, %s114
    %p123 = scmp.eq.s32.totalorder %s19, 0
    %p124 = por %p122, %p123
    %p125 = scmp.ne.s32.totalorder %s113, %s114
    %p126 = scmp.eq.s32.totalorder %s20, 1
    %p127 = por %p125, %p126
    %p129 = scmp.ne.s32.totalorder %s114, %s128
    %p130 = scmp.eq.s32.totalorder %s20, 0
    %p131 = por %p129, %p130
    %s133 = sadd.s32 %s132, 1
    %p136 = scmp.eq.s32.totalorder %s14, 1
    %p137 = scmp.ne.s32.totalorder %s132, %s134
    %p138 = scmp.eq.s32.totalorder %s14, 0
    %p139 = por %p137, %p138
    %p140 = scmp.ne.s32.totalorder %s132, %s134
    %p141 = scmp.eq.s32.totalorder %s19, 1
    %p142 = por %p140, %p141
    %p143 = scmp.ne.s32.totalorder %s134, %s135
    %p144 = scmp.eq.s32.totalorder %s19, 0
    %p145 = por %p143, %p144
    %p146 = scmp.ne.s32.totalorder %s134, %s135
    %p147 = scmp.eq.s32.totalorder %s20, 1
    %p148 = por %p146, %p147
    %p150 = scmp.ne.s32.totalorder %s135, %s149
    %p151 = scmp.eq.s32.totalorder %s20, 0
    %p152 = por %p150, %p151
    %s154 = sadd.s32 %s153, 1
    %p157 = scmp.eq.s32.totalorder %s14, 1
    %p158 = scmp.ne.s32.totalorder %s153, %s155
    %p159 = scmp.eq.s32.totalorder %s14, 0
    %p160 = por %p158, %p159
    %p161 = scmp.ne.s32.totalorder %s153, %s155
    %p162 = scmp.eq.s32.totalorder %s19, 1
    %p163 = por %p161, %p162
    %p164 = scmp.ne.s32.totalorder %s155, %s156
    %p165 = scmp.eq.s32.totalorder %s19, 0
    %p166 = por %p164, %p165
    %p167 = scmp.ne.s32.totalorder %s155, %s156
    %p168 = scmp.eq.s32.totalorder %s20, 1
    %p169 = por %p167, %p168
    %p171 = scmp.ne.s32.totalorder %s156, %s170
    %p172 = scmp.eq.s32.totalorder %s20, 0
    %p173 = por %p171, %p172
    %s175 = sadd.s32 %s174, 1
    %p178 = scmp.eq.s32.totalorder %s14, 1
    %p179 = scmp.ne.s32.totalorder %s174, %s176
    %p180 = scmp.eq.s32.totalorder %s14, 0
    %p181 = por %p179, %p180
    %p182 = scmp.ne.s32.totalorder %s174, %s176
    %p183 = scmp.eq.s32.totalorder %s19, 1
    %p184 = por %p182, %p183
    %p185 = scmp.ne.s32.totalorder %s176, %s177
    %p186 = scmp.eq.s32.totalorder %s19, 0
    %p187 = por %p185, %p186
    %p188 = scmp.ne.s32.totalorder %s176, %s177
    %p189 = scmp.eq.s32.totalorder %s20, 1
    %p190 = por %p188, %p189
    %p192 = scmp.ne.s32.totalorder %s177, %s191
    %p193 = scmp.eq.s32.totalorder %s20, 0
    %p194 = por %p192, %p193
    %s195 = ssub.s32 %s14, %s21
    %p196 = scmp.eq.s32.totalorder %s195, 0
    %s198 = sadd.s32 %s197, 1
    %s199 = scalar_select %p196, %s197, %s198
    %p202 = pneg %p196
    %p203 = scmp.eq.s32.totalorder %s14, 1
    %p204 = por %p202, %p203
    %p205 = scmp.ne.s32.totalorder %s197, %s200
    %p206 = scmp.eq.s32.totalorder %s14, 0
    %p207 = por %p205, %p206
    %p208 = scmp.ne.s32.totalorder %s197, %s200
    %p209 = scmp.eq.s32.totalorder %s19, 1
    %p210 = por %p208, %p209
    %p211 = scmp.ne.s32.totalorder %s200, %s201
    %p212 = scmp.eq.s32.totalorder %s19, 0
    %p213 = por %p211, %p212
    %p214 = scmp.ne.s32.totalorder %s200, %s201
    %p215 = scmp.eq.s32.totalorder %s20, 1
    %p216 = por %p214, %p215
    %p218 = scmp.ne.s32.totalorder %s201, %s217
    %p219 = scmp.eq.s32.totalorder %s20, 0
    %p220 = por %p218, %p219
    %p221 = scmp.le.s32.totalorder 1, %s14
    %p222 = scmp.lt.s32.totalorder %s14, 3
    %p223 = pnand %p221, %p222
    %p224 = pneg %p223
    // Predicated region
    $region9: #{visual_block_pallas.1} parent=5 // pred_check
      _
    $region10: #{visual_block_pallas.1} parent=5 // pred_check_branch
      %226 = sbr.rel (%p223) target = $region12
    $region11: #{visual_block_pallas.1} parent=5 // pred_region
      %s227 = ssub.s32 %s14, 1
      // Predicated region
      $region13: #{visual_block_pallas.1} parent=11 // pred_check
        %p228 = pneg %p61
      $region14: #{visual_block_pallas.1} parent=11 // pred_check_branch
        %230 = sbr.rel (%p228) target = $region16
      $region15: #{visual_block_pallas.1} parent=11 // pred_region
        _
      $region16: #{visual_block_pallas.1} parent=11 // pred_fallthru
        _
      // Predicated region
      $region17: #{visual_block_pallas.1} parent=11 // pred_check
        %p231 = pneg %p82
      $region18: #{visual_block_pallas.1} parent=11 // pred_check_branch
        %233 = sbr.rel (%p231) target = $region20
      $region19: #{visual_block_pallas.1} parent=11 // pred_region
        _
      $region20: #{visual_block_pallas.1} parent=11 // pred_fallthru
        _
      // Predicated region
      $region21: #{visual_block_pallas.1} parent=11 // pred_check
        %p234 = pneg %p103
      $region22: #{visual_block_pallas.1} parent=11 // pred_check_branch
        %236 = sbr.rel (%p234) target = $region24
      $region23: #{visual_block_pallas.1} parent=11 // pred_region
        _
      $region24: #{visual_block_pallas.1} parent=11 // pred_fallthru
        _
      // Predicated region
      $region25: #{visual_block_pallas.1} parent=11 // pred_check
        %p237 = pneg %p124
      $region26: #{visual_block_pallas.1} parent=11 // pred_check_branch
        %239 = sbr.rel (%p237) target = $region28
      $region27: #{visual_block_pallas.1} parent=11 // pred_region
        _
      $region28: #{visual_block_pallas.1} parent=11 // pred_fallthru
        _
      // Predicated region
      $region29: #{visual_block_pallas.1} parent=11 // pred_check
        %p240 = pneg %p145
      $region30: #{visual_block_pallas.1} parent=11 // pred_check_branch
        %242 = sbr.rel (%p240) target = $region32
      $region31: #{visual_block_pallas.1} parent=11 // pred_region
        _
      $region32: #{visual_block_pallas.1} parent=11 // pred_fallthru
        _
      // Predicated region
      $region33: #{visual_block_pallas.1} parent=11 // pred_check
        %p243 = pneg %p166
      $region34: #{visual_block_pallas.1} parent=11 // pred_check_branch
        %245 = sbr.rel (%p243) target = $region36
      $region35: #{visual_block_pallas.1} parent=11 // pred_region
        _
      $region36: #{visual_block_pallas.1} parent=11 // pred_fallthru
        _
      // Predicated region
      $region37: #{visual_block_pallas.1} parent=11 // pred_check
        %p246 = pneg %p187
      $region38: #{visual_block_pallas.1} parent=11 // pred_check_branch
        %248 = sbr.rel (%p246) target = $region40
      $region39: #{visual_block_pallas.1} parent=11 // pred_region
        _
      $region40: #{visual_block_pallas.1} parent=11 // pred_fallthru
        _
    $region12: #{visual_block_pallas.1} parent=5 // pred_fallthru
      _
    %p249 = scmp.lt.s32.totalorder %s14, 2
    // Predicated region
    $region41: #{visual_block_pallas.1} parent=5 // pred_check
      %p250 = pneg %p249
    $region42: #{visual_block_pallas.1} parent=5 // pred_check_branch
      %252 = sbr.rel (%p250) target = $region44
    $region43: #{visual_block_pallas.1} parent=5 // pred_region
      // Predicated region
      $region45: #{visual_block_pallas.1} parent=43 // pred_check
        %p253 = pneg %p34
      $region46: #{visual_block_pallas.1} parent=43 // pred_check_branch
        %255 = sbr.rel (%p253) target = $region48
      $region47: #{visual_block_pallas.1} parent=43 // pred_region
        %p256 = scmp.lt.s32.totalorder %s14, 1
        %s257 = scalar_select %p256, %s14, 1
        %s258 = smul.addr %s257, 8
        %s259 = smul.addr %s258, 4
        %s260 = scalar_lea.vmem %s0, %s259
      $region48: #{visual_block_pallas.1} parent=43 // pred_fallthru
        _
    $region44: #{visual_block_pallas.1} parent=5 // pred_fallthru
      _
    %p261 = scmp.le.s32.totalorder 1, %s14
    %p262 = scmp.lt.s32.totalorder %s14, 3
    %p263 = pnand %p261, %p262
    %p264 = pneg %p263
    // Predicated region
    $region49: #{visual_block_pallas.1} parent=5 // pred_check
      _
    $region50: #{visual_block_pallas.1} parent=5 // pred_check_branch
      %266 = sbr.rel (%p263) target = $region52
    $region51: #{visual_block_pallas.1} parent=5 // pred_region
      %s267 = ssub.s32 %s14, 1
      %p268 = scmp.lt.s32.totalorder %s19, 1
      %s269 = scalar_select %p268, %s19, 1
      %s270 = smul.addr %s269, 8
      %s271 = smul.addr %s270, 4
      %s272 = scalar_lea.vmem %s0, %s271
      %p273 = pneg %p40
      %p274 = pneg %p37
      %p275 = pneg %p61
      %p276 = pneg %p58
      %p277 = pneg %p82
      %p278 = pneg %p79
      %p279 = pneg %p103
      %p280 = pneg %p100
      %p281 = pneg %p124
      %p282 = pneg %p121
      %p283 = pneg %p145
      %p284 = pneg %p142
      %p285 = pneg %p166
      %p286 = pneg %p163
      %p287 = pneg %p187
      %p288 = pneg %p184
      %p289 = pneg %p213
      %p290 = pneg %p210
      %p291 = scmp.lt.s32.totalorder %s19, 1
      %s292 = scalar_select %p291, %s19, 1
      %s293 = smul.addr %s292, 8
      %s294 = smul.addr %s293, 8
      %s295 = scalar_lea.vmem %s8, %s294
      %p296 = scmp.lt.s32.totalorder %s19, 1
      %s297 = scalar_select %p296, %s19, 1
      %s298 = smul.addr %s297, 8
      %s299 = smul.addr %s298, 4
      %s300 = scalar_lea.vmem %s0, %s299
      %p301 = scmp.lt.s32.totalorder %s19, 1
      %s302 = scalar_select %p301, %s19, 1
      %s303 = smul.addr %s302, 8
      %s304 = smul.addr %s303, 8
      %s305 = scalar_lea.vmem %s8, %s304
      %v306 = vld [vmem:[%s300] sm:$0xff]
      %v307 = vld [vmem:[%s300 + $0x8] sm:$0xff]
      %v308 = vld [vmem:[%s300 + $0x10] sm:$0xff]
      %v309 = vld [vmem:[%s300 + $0x18] sm:$0xff]
      %v310 = vld [vmem:[%s1] ss:$2 sm:$0xff]
      %s311 = scalar_lea.vmem %s1, 1
      %v312 = vld [vmem:[%s311] ss:$2 sm:$0xff]
      %v313 = vlaneseq
      %v314 = vand.u32 %v313, 127
      %v315 = vadd.s32 %v314, 128
      %v316 = vadd.s32 %v314, 256
      %v317 = vadd.s32 %v314, 384
      %v318 = vadd.s32 %v314, 512
      %v319 = vadd.s32 %v314, 640
      %v320 = vadd.s32 %v314, 768
      %v321 = vadd.s32 %v314, 896
      %v323 = vcombine.high %v309, %v309
      %324 = vrot.lane.b32.xlu0 %v323, 34
      %v325 = vpop.permute.xlu0 %324
      %v330 = vcombine.high %v306, %v306
      %v331 = vcombine.high %v307, %v307
      %v332 = vcombine.high %v308, %v308
      %333 = vrot.lane.b32.xlu0 %v306, 34
      %v334 = vpop.permute.xlu0 %333
      %335 = vrot.lane.b32.xlu0 %v330, 34
      %v336 = vpop.permute.xlu0 %335
      %337 = vrot.lane.b32.xlu0 %v307, 34
      %v338 = vpop.permute.xlu0 %337
      %339 = vrot.lane.b32.xlu0 %v331, 34
      %v340 = vpop.permute.xlu0 %339
      %341 = vrot.lane.b32.xlu0 %v308, 34
      %v342 = vpop.permute.xlu0 %341
      %343 = vrot.lane.b32.xlu0 %v332, 34
      %v344 = vpop.permute.xlu0 %343
      %345 = vrot.lane.b32.xlu0 %v309, 34
      %v346 = vpop.permute.xlu0 %345
      %vm347 = vcmask 277504
      %v348 = vsel %vm347, %v334, %v336
      %v349 = vsel %vm347, %v336, %v338
      %v350 = vsel %vm347, %v338, %v340
      %v351 = vsel %vm347, %v340, %v342
      %v352 = vsel %vm347, %v342, %v344
      %v353 = vsel %vm347, %v344, %v346
      %v354 = vsel %vm347, %v346, %v325
      %v363 = vsel %vm347, %v325, %v334
      %v364 = vadd.s32 %v310, 4294967294
      %vm365 = vcmp.ge.s32.totalorder %v364, 0
      %vm366 = vcmp.lt.s32.totalorder %v364, 16
      %vm367 = vmand %vm365, %vm366
      %v368 = vadd.s32 %v312, 4294967294
      %vm369 = vcmp.ge.s32.totalorder %v368, 0
      %vm370 = vmand %vm367, %vm369
      %vm371 = vcmp.lt.s32.totalorder %v368, 16
      %vm372 = vmand %vm370, %vm371
      %v373 = vsel %vm372, 1, 0
      %v374 = vlaneseq
      %v375 = vshrl.u32 %v374, 7
      %v376 = vsub.s32 0, %v375
      %v377 = vrot.slane %v373, %v376
      %v378 = vlaneseq
      %v379 = vshrl.u32 %v378, 7
      %v380 = vsub.s32 1, %v379
      %v381 = vrot.slane %v373, %v380
      %v382 = vlaneseq
      %v383 = vshrl.u32 %v382, 7
      %v384 = vsub.s32 2, %v383
      %v385 = vrot.slane %v373, %v384
      %v386 = vlaneseq
      %v387 = vshrl.u32 %v386, 7
      %v388 = vsub.s32 3, %v387
      %v389 = vrot.slane %v373, %v388
      %v390 = vlaneseq
      %v391 = vshrl.u32 %v390, 7
      %v392 = vsub.s32 4, %v391
      %v393 = vrot.slane %v373, %v392
      %v394 = vlaneseq
      %v395 = vshrl.u32 %v394, 7
      %v396 = vsub.s32 5, %v395
      %v397 = vrot.slane %v373, %v396
      %v398 = vlaneseq
      %v399 = vshrl.u32 %v398, 7
      %v400 = vsub.s32 6, %v399
      %v401 = vrot.slane %v373, %v400
      %v402 = vlaneseq
      %v403 = vshrl.u32 %v402, 7
      %v404 = vsub.s32 7, %v403
      %v405 = vrot.slane %v373, %v404
      %vm406 = vcmp.eq.s32.totalorder %v377, 1
      %vm407 = vcmp.eq.s32.totalorder %v381, 1
      %vm408 = vcmp.eq.s32.totalorder %v385, 1
      %vm409 = vcmp.eq.s32.totalorder %v389, 1
      %vm410 = vcmp.eq.s32.totalorder %v393, 1
      %vm411 = vcmp.eq.s32.totalorder %v397, 1
      %vm412 = vcmp.eq.s32.totalorder %v401, 1
      %vm413 = vcmp.eq.s32.totalorder %v405, 1
      %v414 = vsel %vm406, %v363, 0.0
      %v415 = vsel %vm407, %v348, 0.0
      %v416 = vsel %vm408, %v349, 0.0
      %v417 = vsel %vm409, %v350, 0.0
      %v418 = vsel %vm410, %v351, 0.0
      %v419 = vsel %vm411, %v352, 0.0
      %v420 = vsel %vm412, %v353, 0.0
      %v421 = vsel %vm413, %v354, 0.0
      %422 = vst [vmem:[#allocation2] sm:$0xf] %v414
      %423 = vst [vmem:[#allocation2 + $0x8] sm:$0xf] %v415
      %424 = vst [vmem:[#allocation2 + $0x10] sm:$0xf] %v416
      %425 = vst [vmem:[#allocation2 + $0x18] sm:$0xf] %v417
      %426 = vst [vmem:[#allocation2 + $0x20] sm:$0xf] %v418
      %427 = vst [vmem:[#allocation2 + $0x28] sm:$0xf] %v419
      %428 = vst [vmem:[#allocation2 + $0x30] sm:$0xf] %v420
      %429 = vst [vmem:[#allocation2 + $0x38] sm:$0xf] %v421
      %430 = vrot.lane.b32.xlu0 %v323, 33
      %v431 = vpop.permute.xlu0 %430
      %433 = vrot.lane.b32.xlu0 %v306, 33
      %v434 = vpop.permute.xlu0 %433
      %435 = vrot.lane.b32.xlu0 %v330, 33
      %v436 = vpop.permute.xlu0 %435
      %437 = vrot.lane.b32.xlu0 %v307, 33
      %v438 = vpop.permute.xlu0 %437
      %439 = vrot.lane.b32.xlu0 %v331, 33
      %v440 = vpop.permute.xlu0 %439
      %441 = vrot.lane.b32.xlu0 %v308, 33
      %v442 = vpop.permute.xlu0 %441
      %443 = vrot.lane.b32.xlu0 %v332, 33
      %v444 = vpop.permute.xlu0 %443
      %445 = vrot.lane.b32.xlu0 %v309, 33
      %v446 = vpop.permute.xlu0 %445
      %vm447 = vcmask 269312
      %v448 = vsel %vm447, %v434, %v436
      %v449 = vsel %vm447, %v436, %v438
      %v450 = vsel %vm447, %v438, %v440
      %v451 = vsel %vm447, %v440, %v442
      %v452 = vsel %vm447, %v442, %v444
      %v453 = vsel %vm447, %v444, %v446
      %v454 = vsel %vm447, %v446, %v431
      %v463 = vsel %vm447, %v431, %v434
      %v464 = vadd.s32 %v312, 4294967295
      %vm465 = vcmp.ge.s32.totalorder %v464, 0
      %vm466 = vmand %vm367, %vm465
      %vm467 = vcmp.lt.s32.totalorder %v464, 16
      %vm468 = vmand %vm466, %vm467
      %v469 = vsel %vm468, 1, 0
      %v470 = vlaneseq
      %v471 = vshrl.u32 %v470, 7
      %v472 = vsub.s32 0, %v471
      %v473 = vrot.slane %v469, %v472
      %v474 = vlaneseq
      %v475 = vshrl.u32 %v474, 7
      %v476 = vsub.s32 1, %v475
      %v477 = vrot.slane %v469, %v476
      %v478 = vlaneseq
      %v479 = vshrl.u32 %v478, 7
      %v480 = vsub.s32 2, %v479
      %v481 = vrot.slane %v469, %v480
      %v482 = vlaneseq
      %v483 = vshrl.u32 %v482, 7
      %v484 = vsub.s32 3, %v483
      %v485 = vrot.slane %v469, %v484
      %v486 = vlaneseq
      %v487 = vshrl.u32 %v486, 7
      %v488 = vsub.s32 4, %v487
      %v489 = vrot.slane %v469, %v488
      %v490 = vlaneseq
      %v491 = vshrl.u32 %v490, 7
      %v492 = vsub.s32 5, %v491
      %v493 = vrot.slane %v469, %v492
      %v494 = vlaneseq
      %v495 = vshrl.u32 %v494, 7
      %v496 = vsub.s32 6, %v495
      %v497 = vrot.slane %v469, %v496
      %v498 = vlaneseq
      %v499 = vshrl.u32 %v498, 7
      %v500 = vsub.s32 7, %v499
      %v501 = vrot.slane %v469, %v500
      %vm502 = vcmp.eq.s32.totalorder %v473, 1
      %vm503 = vcmp.eq.s32.totalorder %v477, 1
      %vm504 = vcmp.eq.s32.totalorder %v481, 1
      %vm505 = vcmp.eq.s32.totalorder %v485, 1
      %vm506 = vcmp.eq.s32.totalorder %v489, 1
      %vm507 = vcmp.eq.s32.totalorder %v493, 1
      %vm508 = vcmp.eq.s32.totalorder %v497, 1
      %vm509 = vcmp.eq.s32.totalorder %v501, 1
      %v510 = vsel %vm502, %v463, 0.0
      %v511 = vsel %vm503, %v448, 0.0
      %v512 = vsel %vm504, %v449, 0.0
      %v513 = vsel %vm505, %v450, 0.0
      %v514 = vsel %vm506, %v451, 0.0
      %v515 = vsel %vm507, %v452, 0.0
      %v516 = vsel %vm508, %v453, 0.0
      %v517 = vsel %vm509, %v454, 0.0
      %v526 = vrot.slane %v510, 4
      %v527 = vrot.slane %v511, 4
      %v528 = vrot.slane %v512, 4
      %v529 = vrot.slane %v513, 4
      %v530 = vrot.slane %v514, 4
      %v531 = vrot.slane %v515, 4
      %v532 = vrot.slane %v516, 4
      %v533 = vrot.slane %v517, 4
      %542 = vst [vmem:[#allocation2] sm:$0xf0] %v526
      %543 = vst [vmem:[#allocation2 + $0x8] sm:$0xf0] %v527
      %544 = vst [vmem:[#allocation2 + $0x10] sm:$0xf0] %v528
      %545 = vst [vmem:[#allocation2 + $0x18] sm:$0xf0] %v529
      %546 = vst [vmem:[#allocation2 + $0x20] sm:$0xf0] %v530
      %547 = vst [vmem:[#allocation2 + $0x28] sm:$0xf0] %v531
      %548 = vst [vmem:[#allocation2 + $0x30] sm:$0xf0] %v532
      %549 = vst [vmem:[#allocation2 + $0x38] sm:$0xf0] %v533
      %550 = vrot.lane.b32.xlu0 %v323, 32
      %v551 = vpop.permute.xlu0 %550
      %553 = vrot.lane.b32.xlu0 %v306, 32
      %v554 = vpop.permute.xlu0 %553
      %555 = vrot.lane.b32.xlu0 %v330, 32
      %v556 = vpop.permute.xlu0 %555
      %557 = vrot.lane.b32.xlu0 %v307, 32
      %v558 = vpop.permute.xlu0 %557
      %559 = vrot.lane.b32.xlu0 %v331, 32
      %v560 = vpop.permute.xlu0 %559
      %561 = vrot.lane.b32.xlu0 %v308, 32
      %v562 = vpop.permute.xlu0 %561
      %563 = vrot.lane.b32.xlu0 %v332, 32
      %v564 = vpop.permute.xlu0 %563
      %565 = vrot.lane.b32.xlu0 %v309, 32
      %v566 = vpop.permute.xlu0 %565
      %vm567 = vcmask 261120
      %v568 = vsel %vm567, %v554, %v556
      %v569 = vsel %vm567, %v556, %v558
      %v570 = vsel %vm567, %v558, %v560
      %v571 = vsel %vm567, %v560, %v562
      %v572 = vsel %vm567, %v562, %v564
      %v573 = vsel %vm567, %v564, %v566
      %v574 = vsel %vm567, %v566, %v551
      %v583 = vsel %vm567, %v551, %v554
      %vm584 = vcmp.ge.s32.totalorder %v312, 0
      %vm585 = vmand %vm367, %vm584
      %vm586 = vcmp.lt.s32.totalorder %v312, 16
      %vm587 = vmand %vm585, %vm586
      %v588 = vsel %vm587, 1, 0
      %v589 = vlaneseq
      %v590 = vshrl.u32 %v589, 7
      %v591 = vsub.s32 0, %v590
      %v592 = vrot.slane %v588, %v591
      %v593 = vlaneseq
      %v594 = vshrl.u32 %v593, 7
      %v595 = vsub.s32 1, %v594
      %v596 = vrot.slane %v588, %v595
      %v597 = vlaneseq
      %v598 = vshrl.u32 %v597, 7
      %v599 = vsub.s32 2, %v598
      %v600 = vrot.slane %v588, %v599
      %v601 = vlaneseq
      %v602 = vshrl.u32 %v601, 7
      %v603 = vsub.s32 3, %v602
      %v604 = vrot.slane %v588, %v603
      %v605 = vlaneseq
      %v606 = vshrl.u32 %v605, 7
      %v607 = vsub.s32 4, %v606
      %v608 = vrot.slane %v588, %v607
      %v609 = vlaneseq
      %v610 = vshrl.u32 %v609, 7
      %v611 = vsub.s32 5, %v610
      %v612 = vrot.slane %v588, %v611
      %v613 = vlaneseq
      %v614 = vshrl.u32 %v613, 7
      %v615 = vsub.s32 6, %v614
      %v616 = vrot.slane %v588, %v615
      %v617 = vlaneseq
      %v618 = vshrl.u32 %v617, 7
      %v619 = vsub.s32 7, %v618
      %v620 = vrot.slane %v588, %v619
      %vm621 = vcmp.eq.s32.totalorder %v592, 1
      %vm622 = vcmp.eq.s32.totalorder %v596, 1
      %vm623 = vcmp.eq.s32.totalorder %v600, 1
      %vm624 = vcmp.eq.s32.totalorder %v604, 1
      %vm625 = vcmp.eq.s32.totalorder %v608, 1
      %vm626 = vcmp.eq.s32.totalorder %v612, 1
      %vm627 = vcmp.eq.s32.totalorder %v616, 1
      %vm628 = vcmp.eq.s32.totalorder %v620, 1
      %v629 = vsel %vm621, %v583, 0.0
      %v630 = vsel %vm622, %v568, 0.0
      %v631 = vsel %vm623, %v569, 0.0
      %v632 = vsel %vm624, %v570, 0.0
      %v633 = vsel %vm625, %v571, 0.0
      %v634 = vsel %vm626, %v572, 0.0
      %v635 = vsel %vm627, %v573, 0.0
      %v636 = vsel %vm628, %v574, 0.0
      %637 = vst [vmem:[#allocation2 + $0x40] sm:$0xf] %v629
      %638 = vst [vmem:[#allocation2 + $0x48] sm:$0xf] %v630
      %639 = vst [vmem:[#allocation2 + $0x50] sm:$0xf] %v631
      %640 = vst [vmem:[#allocation2 + $0x58] sm:$0xf] %v632
      %641 = vst [vmem:[#allocation2 + $0x60] sm:$0xf] %v633
      %642 = vst [vmem:[#allocation2 + $0x68] sm:$0xf] %v634
      %643 = vst [vmem:[#allocation2 + $0x70] sm:$0xf] %v635
      %644 = vst [vmem:[#allocation2 + $0x78] sm:$0xf] %v636
      %645 = vrot.lane.b32.xlu0 %v323, 31
      %v646 = vpop.permute.xlu0 %645
      %648 = vrot.lane.b32.xlu0 %v306, 31
      %v649 = vpop.permute.xlu0 %648
      %650 = vrot.lane.b32.xlu0 %v330, 31
      %v651 = vpop.permute.xlu0 %650
      %652 = vrot.lane.b32.xlu0 %v307, 31
      %v653 = vpop.permute.xlu0 %652
      %654 = vrot.lane.b32.xlu0 %v331, 31
      %v655 = vpop.permute.xlu0 %654
      %656 = vrot.lane.b32.xlu0 %v308, 31
      %v657 = vpop.permute.xlu0 %656
      %658 = vrot.lane.b32.xlu0 %v332, 31
      %v659 = vpop.permute.xlu0 %658
      %660 = vrot.lane.b32.xlu0 %v309, 31
      %v661 = vpop.permute.xlu0 %660
      %vm662 = vcmask 252928
      %v663 = vsel %vm662, %v649, %v651
      %v664 = vsel %vm662, %v651, %v653
      %v665 = vsel %vm662, %v653, %v655
      %v666 = vsel %vm662, %v655, %v657
      %v667 = vsel %vm662, %v657, %v659
      %v668 = vsel %vm662, %v659, %v661
      %v669 = vsel %vm662, %v661, %v646
      %v678 = vsel %vm662, %v646, %v649
      %v679 = vadd.s32 %v312, 1
      %vm680 = vcmp.ge.s32.totalorder %v679, 0
      %vm681 = vmand %vm367, %vm680
      %vm682 = vcmp.lt.s32.totalorder %v679, 16
      %vm683 = vmand %vm681, %vm682
      %v684 = vsel %vm683, 1, 0
      %v685 = vlaneseq
      %v686 = vshrl.u32 %v685, 7
      %v687 = vsub.s32 0, %v686
      %v688 = vrot.slane %v684, %v687
      %v689 = vlaneseq
      %v690 = vshrl.u32 %v689, 7
      %v691 = vsub.s32 1, %v690
      %v692 = vrot.slane %v684, %v691
      %v693 = vlaneseq
      %v694 = vshrl.u32 %v693, 7
      %v695 = vsub.s32 2, %v694
      %v696 = vrot.slane %v684, %v695
      %v697 = vlaneseq
      %v698 = vshrl.u32 %v697, 7
      %v699 = vsub.s32 3, %v698
      %v700 = vrot.slane %v684, %v699
      %v701 = vlaneseq
      %v702 = vshrl.u32 %v701, 7
      %v703 = vsub.s32 4, %v702
      %v704 = vrot.slane %v684, %v703
      %v705 = vlaneseq
      %v706 = vshrl.u32 %v705, 7
      %v707 = vsub.s32 5, %v706
      %v708 = vrot.slane %v684, %v707
      %v709 = vlaneseq
      %v710 = vshrl.u32 %v709, 7
      %v711 = vsub.s32 6, %v710
      %v712 = vrot.slane %v684, %v711
      %v713 = vlaneseq
      %v714 = vshrl.u32 %v713, 7
      %v715 = vsub.s32 7, %v714
      %v716 = vrot.slane %v684, %v715
      %vm717 = vcmp.eq.s32.totalorder %v688, 1
      %vm718 = vcmp.eq.s32.totalorder %v692, 1
      %vm719 = vcmp.eq.s32.totalorder %v696, 1
      %vm720 = vcmp.eq.s32.totalorder %v700, 1
      %vm721 = vcmp.eq.s32.totalorder %v704, 1
      %vm722 = vcmp.eq.s32.totalorder %v708, 1
      %vm723 = vcmp.eq.s32.totalorder %v712, 1
      %vm724 = vcmp.eq.s32.totalorder %v716, 1
      %v725 = vsel %vm717, %v678, 0.0
      %v726 = vsel %vm718, %v663, 0.0
      %v727 = vsel %vm719, %v664, 0.0
      %v728 = vsel %vm720, %v665, 0.0
      %v729 = vsel %vm721, %v666, 0.0
      %v730 = vsel %vm722, %v667, 0.0
      %v731 = vsel %vm723, %v668, 0.0
      %v732 = vsel %vm724, %v669, 0.0
      %v741 = vrot.slane %v725, 4
      %v742 = vrot.slane %v726, 4
      %v743 = vrot.slane %v727, 4
      %v744 = vrot.slane %v728, 4
      %v745 = vrot.slane %v729, 4
      %v746 = vrot.slane %v730, 4
      %v747 = vrot.slane %v731, 4
      %v748 = vrot.slane %v732, 4
      %757 = vst [vmem:[#allocation2 + $0x40] sm:$0xf0] %v741
      %758 = vst [vmem:[#allocation2 + $0x48] sm:$0xf0] %v742
      %759 = vst [vmem:[#allocation2 + $0x50] sm:$0xf0] %v743
      %760 = vst [vmem:[#allocation2 + $0x58] sm:$0xf0] %v744
      %761 = vst [vmem:[#allocation2 + $0x60] sm:$0xf0] %v745
      %762 = vst [vmem:[#allocation2 + $0x68] sm:$0xf0] %v746
      %763 = vst [vmem:[#allocation2 + $0x70] sm:$0xf0] %v747
      %764 = vst [vmem:[#allocation2 + $0x78] sm:$0xf0] %v748
      %765 = vrot.lane.b32.xlu0 %v323, 30
      %v766 = vpop.permute.xlu0 %765
      %768 = vrot.lane.b32.xlu0 %v306, 30
      %v769 = vpop.permute.xlu0 %768
      %770 = vrot.lane.b32.xlu0 %v330, 30
      %v771 = vpop.permute.xlu0 %770
      %772 = vrot.lane.b32.xlu0 %v307, 30
      %v773 = vpop.permute.xlu0 %772
      %774 = vrot.lane.b32.xlu0 %v331, 30
      %v775 = vpop.permute.xlu0 %774
      %776 = vrot.lane.b32.xlu0 %v308, 30
      %v777 = vpop.permute.xlu0 %776
      %778 = vrot.lane.b32.xlu0 %v332, 30
      %v779 = vpop.permute.xlu0 %778
      %780 = vrot.lane.b32.xlu0 %v309, 30
      %v781 = vpop.permute.xlu0 %780
      %vm782 = vcmask 244736
      %v783 = vsel %vm782, %v769, %v771
      %v784 = vsel %vm782, %v771, %v773
      %v785 = vsel %vm782, %v773, %v775
      %v786 = vsel %vm782, %v775, %v777
      %v787 = vsel %vm782, %v777, %v779
      %v788 = vsel %vm782, %v779, %v781
      %v789 = vsel %vm782, %v781, %v766
      %v798 = vsel %vm782, %v766, %v769
      %v799 = vadd.s32 %v312, 2
      %vm800 = vcmp.ge.s32.totalorder %v799, 0
      %vm801 = vmand %vm367, %vm800
      %vm802 = vcmp.lt.s32.totalorder %v799, 16
      %vm803 = vmand %vm801, %vm802
      %v804 = vsel %vm803, 1, 0
      %v805 = vlaneseq
      %v806 = vshrl.u32 %v805, 7
      %v807 = vsub.s32 0, %v806
      %v808 = vrot.slane %v804, %v807
      %v809 = vlaneseq
      %v810 = vshrl.u32 %v809, 7
      %v811 = vsub.s32 1, %v810
      %v812 = vrot.slane %v804, %v811
      %v813 = vlaneseq
      %v814 = vshrl.u32 %v813, 7
      %v815 = vsub.s32 2, %v814
      %v816 = vrot.slane %v804, %v815
      %v817 = vlaneseq
      %v818 = vshrl.u32 %v817, 7
      %v819 = vsub.s32 3, %v818
      %v820 = vrot.slane %v804, %v819
      %v821 = vlaneseq
      %v822 = vshrl.u32 %v821, 7
      %v823 = vsub.s32 4, %v822
      %v824 = vrot.slane %v804, %v823
      %v825 = vlaneseq
      %v826 = vshrl.u32 %v825, 7
      %v827 = vsub.s32 5, %v826
      %v828 = vrot.slane %v804, %v827
      %v829 = vlaneseq
      %v830 = vshrl.u32 %v829, 7
      %v831 = vsub.s32 6, %v830
      %v832 = vrot.slane %v804, %v831
      %v833 = vlaneseq
      %v834 = vshrl.u32 %v833, 7
      %v835 = vsub.s32 7, %v834
      %v836 = vrot.slane %v804, %v835
      %vm837 = vcmp.eq.s32.totalorder %v808, 1
      %vm838 = vcmp.eq.s32.totalorder %v812, 1
      %vm839 = vcmp.eq.s32.totalorder %v816, 1
      %vm840 = vcmp.eq.s32.totalorder %v820, 1
      %vm841 = vcmp.eq.s32.totalorder %v824, 1
      %vm842 = vcmp.eq.s32.totalorder %v828, 1
      %vm843 = vcmp.eq.s32.totalorder %v832, 1
      %vm844 = vcmp.eq.s32.totalorder %v836, 1
      %v845 = vsel %vm837, %v798, 0.0
      %v846 = vsel %vm838, %v783, 0.0
      %v847 = vsel %vm839, %v784, 0.0
      %v848 = vsel %vm840, %v785, 0.0
      %v849 = vsel %vm841, %v786, 0.0
      %v850 = vsel %vm842, %v787, 0.0
      %v851 = vsel %vm843, %v788, 0.0
      %v852 = vsel %vm844, %v789, 0.0
      %853 = vst [vmem:[#allocation2 + $0x80] sm:$0xf] %v845
      %854 = vst [vmem:[#allocation2 + $0x88] sm:$0xf] %v846
      %855 = vst [vmem:[#allocation2 + $0x90] sm:$0xf] %v847
      %856 = vst [vmem:[#allocation2 + $0x98] sm:$0xf] %v848
      %857 = vst [vmem:[#allocation2 + $0xa0] sm:$0xf] %v849
      %858 = vst [vmem:[#allocation2 + $0xa8] sm:$0xf] %v850
      %859 = vst [vmem:[#allocation2 + $0xb0] sm:$0xf] %v851
      %860 = vst [vmem:[#allocation2 + $0xb8] sm:$0xf] %v852
      %861 = vrot.lane.b32.xlu0 %v323, 18
      %v862 = vpop.permute.xlu0 %861
      %864 = vrot.lane.b32.xlu0 %v306, 18
      %v865 = vpop.permute.xlu0 %864
      %866 = vrot.lane.b32.xlu0 %v330, 18
      %v867 = vpop.permute.xlu0 %866
      %868 = vrot.lane.b32.xlu0 %v307, 18
      %v869 = vpop.permute.xlu0 %868
      %870 = vrot.lane.b32.xlu0 %v331, 18
      %v871 = vpop.permute.xlu0 %870
      %872 = vrot.lane.b32.xlu0 %v308, 18
      %v873 = vpop.permute.xlu0 %872
      %874 = vrot.lane.b32.xlu0 %v332, 18
      %v875 = vpop.permute.xlu0 %874
      %876 = vrot.lane.b32.xlu0 %v309, 18
      %v877 = vpop.permute.xlu0 %876
      %vm878 = vcmask 146432
      %v879 = vsel %vm878, %v865, %v867
      %v880 = vsel %vm878, %v867, %v869
      %v881 = vsel %vm878, %v869, %v871
      %v882 = vsel %vm878, %v871, %v873
      %v883 = vsel %vm878, %v873, %v875
      %v884 = vsel %vm878, %v875, %v877
      %v885 = vsel %vm878, %v877, %v862
      %v894 = vsel %vm878, %v862, %v865
      %v895 = vadd.s32 %v310, 4294967295
      %vm896 = vcmp.ge.s32.totalorder %v895, 0
      %vm897 = vcmp.lt.s32.totalorder %v895, 16
      %vm898 = vmand %vm896, %vm897
      %vm899 = vmand %vm898, %vm369
      %vm900 = vmand %vm899, %vm371
      %v901 = vsel %vm900, 1, 0
      %v902 = vlaneseq
      %v903 = vshrl.u32 %v902, 7
      %v904 = vsub.s32 0, %v903
      %v905 = vrot.slane %v901, %v904
      %v906 = vlaneseq
      %v907 = vshrl.u32 %v906, 7
      %v908 = vsub.s32 1, %v907
      %v909 = vrot.slane %v901, %v908
      %v910 = vlaneseq
      %v911 = vshrl.u32 %v910, 7
      %v912 = vsub.s32 2, %v911
      %v913 = vrot.slane %v901, %v912
      %v914 = vlaneseq
      %v915 = vshrl.u32 %v914, 7
      %v916 = vsub.s32 3, %v915
      %v917 = vrot.slane %v901, %v916
      %v918 = vlaneseq
      %v919 = vshrl.u32 %v918, 7
      %v920 = vsub.s32 4, %v919
      %v921 = vrot.slane %v901, %v920
      %v922 = vlaneseq
      %v923 = vshrl.u32 %v922, 7
      %v924 = vsub.s32 5, %v923
      %v925 = vrot.slane %v901, %v924
      %v926 = vlaneseq
      %v927 = vshrl.u32 %v926, 7
      %v928 = vsub.s32 6, %v927
      %v929 = vrot.slane %v901, %v928
      %v930 = vlaneseq
      %v931 = vshrl.u32 %v930, 7
      %v932 = vsub.s32 7, %v931
      %v933 = vrot.slane %v901, %v932
      %vm934 = vcmp.eq.s32.totalorder %v905, 1
      %vm935 = vcmp.eq.s32.totalorder %v909, 1
      %vm936 = vcmp.eq.s32.totalorder %v913, 1
      %vm937 = vcmp.eq.s32.totalorder %v917, 1
      %vm938 = vcmp.eq.s32.totalorder %v921, 1
      %vm939 = vcmp.eq.s32.totalorder %v925, 1
      %vm940 = vcmp.eq.s32.totalorder %v929, 1
      %vm941 = vcmp.eq.s32.totalorder %v933, 1
      %v942 = vsel %vm934, %v894, 0.0
      %v943 = vsel %vm935, %v879, 0.0
      %v944 = vsel %vm936, %v880, 0.0
      %v945 = vsel %vm937, %v881, 0.0
      %v946 = vsel %vm938, %v882, 0.0
      %v947 = vsel %vm939, %v883, 0.0
      %v948 = vsel %vm940, %v884, 0.0
      %v949 = vsel %vm941, %v885, 0.0
      %v958 = vrot.slane %v942, 4
      %v959 = vrot.slane %v943, 4
      %v960 = vrot.slane %v944, 4
      %v961 = vrot.slane %v945, 4
      %v962 = vrot.slane %v946, 4
      %v963 = vrot.slane %v947, 4
      %v964 = vrot.slane %v948, 4
      %v965 = vrot.slane %v949, 4
      %974 = vst [vmem:[#allocation2 + $0x80] sm:$0xf0] %v958
      %975 = vst [vmem:[#allocation2 + $0x88] sm:$0xf0] %v959
      %976 = vst [vmem:[#allocation2 + $0x90] sm:$0xf0] %v960
      %977 = vst [vmem:[#allocation2 + $0x98] sm:$0xf0] %v961
      %978 = vst [vmem:[#allocation2 + $0xa0] sm:$0xf0] %v962
      %979 = vst [vmem:[#allocation2 + $0xa8] sm:$0xf0] %v963
      %980 = vst [vmem:[#allocation2 + $0xb0] sm:$0xf0] %v964
      %981 = vst [vmem:[#allocation2 + $0xb8] sm:$0xf0] %v965
      %982 = vrot.lane.b32.xlu0 %v323, 17
      %v983 = vpop.permute.xlu0 %982
      %985 = vrot.lane.b32.xlu0 %v306, 17
      %v986 = vpop.permute.xlu0 %985
      %987 = vrot.lane.b32.xlu0 %v330, 17
      %v988 = vpop.permute.xlu0 %987
      %989 = vrot.lane.b32.xlu0 %v307, 17
      %v990 = vpop.permute.xlu0 %989
      %991 = vrot.lane.b32.xlu0 %v331, 17
      %v992 = vpop.permute.xlu0 %991
      %993 = vrot.lane.b32.xlu0 %v308, 17
      %v994 = vpop.permute.xlu0 %993
      %995 = vrot.lane.b32.xlu0 %v332, 17
      %v996 = vpop.permute.xlu0 %995
      %997 = vrot.lane.b32.xlu0 %v309, 17
      %v998 = vpop.permute.xlu0 %997
      %vm999 = vcmask 138240
      %v1000 = vsel %vm999, %v986, %v988
      %v1001 = vsel %vm999, %v988, %v990
      %v1002 = vsel %vm999, %v990, %v992
      %v1003 = vsel %vm999, %v992, %v994
      %v1004 = vsel %vm999, %v994, %v996
      %v1005 = vsel %vm999, %v996, %v998
      %v1006 = vsel %vm999, %v998, %v983
      %v1015 = vsel %vm999, %v983, %v986
      %vm1016 = vmand %vm898, %vm465
      %vm1017 = vmand %vm1016, %vm467
      %v1018 = vsel %vm1017, 1, 0
      %v1019 = vlaneseq
      %v1020 = vshrl.u32 %v1019, 7
      %v1021 = vsub.s32 0, %v1020
      %v1022 = vrot.slane %v1018, %v1021
      %v1023 = vlaneseq
      %v1024 = vshrl.u32 %v1023, 7
      %v1025 = vsub.s32 1, %v1024
      %v1026 = vrot.slane %v1018, %v1025
      %v1027 = vlaneseq
      %v1028 = vshrl.u32 %v1027, 7
      %v1029 = vsub.s32 2, %v1028
      %v1030 = vrot.slane %v1018, %v1029
      %v1031 = vlaneseq
      %v1032 = vshrl.u32 %v1031, 7
      %v1033 = vsub.s32 3, %v1032
      %v1034 = vrot.slane %v1018, %v1033
      %v1035 = vlaneseq
      %v1036 = vshrl.u32 %v1035, 7
      %v1037 = vsub.s32 4, %v1036
      %v1038 = vrot.slane %v1018, %v1037
      %v1039 = vlaneseq
      %v1040 = vshrl.u32 %v1039, 7
      %v1041 = vsub.s32 5, %v1040
      %v1042 = vrot.slane %v1018, %v1041
      %v1043 = vlaneseq
      %v1044 = vshrl.u32 %v1043, 7
      %v1045 = vsub.s32 6, %v1044
      %v1046 = vrot.slane %v1018, %v1045
      %v1047 = vlaneseq
      %v1048 = vshrl.u32 %v1047, 7
      %v1049 = vsub.s32 7, %v1048
      %v1050 = vrot.slane %v1018, %v1049
      %vm1051 = vcmp.eq.s32.totalorder %v1022, 1
      %vm1052 = vcmp.eq.s32.totalorder %v1026, 1
      %vm1053 = vcmp.eq.s32.totalorder %v1030, 1
      %vm1054 = vcmp.eq.s32.totalorder %v1034, 1
      %vm1055 = vcmp.eq.s32.totalorder %v1038, 1
      %vm1056 = vcmp.eq.s32.totalorder %v1042, 1
      %vm1057 = vcmp.eq.s32.totalorder %v1046, 1
      %vm1058 = vcmp.eq.s32.totalorder %v1050, 1
      %v1059 = vsel %vm1051, %v1015, 0.0
      %v1060 = vsel %vm1052, %v1000, 0.0
      %v1061 = vsel %vm1053, %v1001, 0.0
      %v1062 = vsel %vm1054, %v1002, 0.0
      %v1063 = vsel %vm1055, %v1003, 0.0
      %v1064 = vsel %vm1056, %v1004, 0.0
      %v1065 = vsel %vm1057, %v1005, 0.0
      %v1066 = vsel %vm1058, %v1006, 0.0
      %1067 = vst [vmem:[#allocation2 + $0xc0] sm:$0xf] %v1059
      %1068 = vst [vmem:[#allocation2 + $0xc8] sm:$0xf] %v1060
      %1069 = vst [vmem:[#allocation2 + $0xd0] sm:$0xf] %v1061
      %1070 = vst [vmem:[#allocation2 + $0xd8] sm:$0xf] %v1062
      %1071 = vst [vmem:[#allocation2 + $0xe0] sm:$0xf] %v1063
      %1072 = vst [vmem:[#allocation2 + $0xe8] sm:$0xf] %v1064
      %1073 = vst [vmem:[#allocation2 + $0xf0] sm:$0xf] %v1065
      %1074 = vst [vmem:[#allocation2 + $0xf8] sm:$0xf] %v1066
      %1075 = vrot.lane.b32.xlu0 %v323, 16
      %v1076 = vpop.permute.xlu0 %1075
      %1078 = vrot.lane.b32.xlu0 %v306, 16
      %v1079 = vpop.permute.xlu0 %1078
      %1080 = vrot.lane.b32.xlu0 %v330, 16
      %v1081 = vpop.permute.xlu0 %1080
      %1082 = vrot.lane.b32.xlu0 %v307, 16
      %v1083 = vpop.permute.xlu0 %1082
      %1084 = vrot.lane.b32.xlu0 %v331, 16
      %v1085 = vpop.permute.xlu0 %1084
      %1086 = vrot.lane.b32.xlu0 %v308, 16
      %v1087 = vpop.permute.xlu0 %1086
      %1088 = vrot.lane.b32.xlu0 %v332, 16
      %v1089 = vpop.permute.xlu0 %1088
      %1090 = vrot.lane.b32.xlu0 %v309, 16
      %v1091 = vpop.permute.xlu0 %1090
      %vm1092 = vcmask 130048
      %v1093 = vsel %vm1092, %v1079, %v1081
      %v1094 = vsel %vm1092, %v1081, %v1083
      %v1095 = vsel %vm1092, %v1083, %v1085
      %v1096 = vsel %vm1092, %v1085, %v1087
      %v1097 = vsel %vm1092, %v1087, %v1089
      %v1098 = vsel %vm1092, %v1089, %v1091
      %v1099 = vsel %vm1092, %v1091, %v1076
      %v1108 = vsel %vm1092, %v1076, %v1079
      %vm1109 = vmand %vm898, %vm584
      %vm1110 = vmand %vm1109, %vm586
      %v1111 = vsel %vm1110, 1, 0
      %v1112 = vlaneseq
      %v1113 = vshrl.u32 %v1112, 7
      %v1114 = vsub.s32 0, %v1113
      %v1115 = vrot.slane %v1111, %v1114
      %v1116 = vlaneseq
      %v1117 = vshrl.u32 %v1116, 7
      %v1118 = vsub.s32 1, %v1117
      %v1119 = vrot.slane %v1111, %v1118
      %v1120 = vlaneseq
      %v1121 = vshrl.u32 %v1120, 7
      %v1122 = vsub.s32 2, %v1121
      %v1123 = vrot.slane %v1111, %v1122
      %v1124 = vlaneseq
      %v1125 = vshrl.u32 %v1124, 7
      %v1126 = vsub.s32 3, %v1125
      %v1127 = vrot.slane %v1111, %v1126
      %v1128 = vlaneseq
      %v1129 = vshrl.u32 %v1128, 7
      %v1130 = vsub.s32 4, %v1129
      %v1131 = vrot.slane %v1111, %v1130
      %v1132 = vlaneseq
      %v1133 = vshrl.u32 %v1132, 7
      %v1134 = vsub.s32 5, %v1133
      %v1135 = vrot.slane %v1111, %v1134
      %v1136 = vlaneseq
      %v1137 = vshrl.u32 %v1136, 7
      %v1138 = vsub.s32 6, %v1137
      %v1139 = vrot.slane %v1111, %v1138
      %v1140 = vlaneseq
      %v1141 = vshrl.u32 %v1140, 7
      %v1142 = vsub.s32 7, %v1141
      %v1143 = vrot.slane %v1111, %v1142
      %vm1144 = vcmp.eq.s32.totalorder %v1115, 1
      %vm1145 = vcmp.eq.s32.totalorder %v1119, 1
      %vm1146 = vcmp.eq.s32.totalorder %v1123, 1
      %vm1147 = vcmp.eq.s32.totalorder %v1127, 1
      %vm1148 = vcmp.eq.s32.totalorder %v1131, 1
      %vm1149 = vcmp.eq.s32.totalorder %v1135, 1
      %vm1150 = vcmp.eq.s32.totalorder %v1139, 1
      %vm1151 = vcmp.eq.s32.totalorder %v1143, 1
      %v1152 = vsel %vm1144, %v1108, 0.0
      %v1153 = vsel %vm1145, %v1093, 0.0
      %v1154 = vsel %vm1146, %v1094, 0.0
      %v1155 = vsel %vm1147, %v1095, 0.0
      %v1156 = vsel %vm1148, %v1096, 0.0
      %v1157 = vsel %vm1149, %v1097, 0.0
      %v1158 = vsel %vm1150, %v1098, 0.0
      %v1159 = vsel %vm1151, %v1099, 0.0
      %v1168 = vrot.slane %v1152, 4
      %v1169 = vrot.slane %v1153, 4
      %v1170 = vrot.slane %v1154, 4
      %v1171 = vrot.slane %v1155, 4
      %v1172 = vrot.slane %v1156, 4
      %v1173 = vrot.slane %v1157, 4
      %v1174 = vrot.slane %v1158, 4
      %v1175 = vrot.slane %v1159, 4
      %1184 = vst [vmem:[#allocation2 + $0xc0] sm:$0xf0] %v1168
      %1185 = vst [vmem:[#allocation2 + $0xc8] sm:$0xf0] %v1169
      %1186 = vst [vmem:[#allocation2 + $0xd0] sm:$0xf0] %v1170
      %1187 = vst [vmem:[#allocation2 + $0xd8] sm:$0xf0] %v1171
      %1188 = vst [vmem:[#allocation2 + $0xe0] sm:$0xf0] %v1172
      %1189 = vst [vmem:[#allocation2 + $0xe8] sm:$0xf0] %v1173
      %1190 = vst [vmem:[#allocation2 + $0xf0] sm:$0xf0] %v1174
      %1191 = vst [vmem:[#allocation2 + $0xf8] sm:$0xf0] %v1175
      %1192 = vrot.lane.b32.xlu0 %v323, 15
      %v1193 = vpop.permute.xlu0 %1192
      %1195 = vrot.lane.b32.xlu0 %v306, 15
      %v1196 = vpop.permute.xlu0 %1195
      %1197 = vrot.lane.b32.xlu0 %v330, 15
      %v1198 = vpop.permute.xlu0 %1197
      %1199 = vrot.lane.b32.xlu0 %v307, 15
      %v1200 = vpop.permute.xlu0 %1199
      %1201 = vrot.lane.b32.xlu0 %v331, 15
      %v1202 = vpop.permute.xlu0 %1201
      %1203 = vrot.lane.b32.xlu0 %v308, 15
      %v1204 = vpop.permute.xlu0 %1203
      %1205 = vrot.lane.b32.xlu0 %v332, 15
      %v1206 = vpop.permute.xlu0 %1205
      %1207 = vrot.lane.b32.xlu0 %v309, 15
      %v1208 = vpop.permute.xlu0 %1207
      %vm1209 = vcmask 121856
      %v1210 = vsel %vm1209, %v1196, %v1198
      %v1211 = vsel %vm1209, %v1198, %v1200
      %v1212 = vsel %vm1209, %v1200, %v1202
      %v1213 = vsel %vm1209, %v1202, %v1204
      %v1214 = vsel %vm1209, %v1204, %v1206
      %v1215 = vsel %vm1209, %v1206, %v1208
      %v1216 = vsel %vm1209, %v1208, %v1193
      %v1225 = vsel %vm1209, %v1193, %v1196
      %vm1226 = vmand %vm898, %vm680
      %vm1227 = vmand %vm1226, %vm682
      %v1228 = vsel %vm1227, 1, 0
      %v1229 = vlaneseq
      %v1230 = vshrl.u32 %v1229, 7
      %v1231 = vsub.s32 0, %v1230
      %v1232 = vrot.slane %v1228, %v1231
      %v1233 = vlaneseq
      %v1234 = vshrl.u32 %v1233, 7
      %v1235 = vsub.s32 1, %v1234
      %v1236 = vrot.slane %v1228, %v1235
      %v1237 = vlaneseq
      %v1238 = vshrl.u32 %v1237, 7
      %v1239 = vsub.s32 2, %v1238
      %v1240 = vrot.slane %v1228, %v1239
      %v1241 = vlaneseq
      %v1242 = vshrl.u32 %v1241, 7
      %v1243 = vsub.s32 3, %v1242
      %v1244 = vrot.slane %v1228, %v1243
      %v1245 = vlaneseq
      %v1246 = vshrl.u32 %v1245, 7
      %v1247 = vsub.s32 4, %v1246
      %v1248 = vrot.slane %v1228, %v1247
      %v1249 = vlaneseq
      %v1250 = vshrl.u32 %v1249, 7
      %v1251 = vsub.s32 5, %v1250
      %v1252 = vrot.slane %v1228, %v1251
      %v1253 = vlaneseq
      %v1254 = vshrl.u32 %v1253, 7
      %v1255 = vsub.s32 6, %v1254
      %v1256 = vrot.slane %v1228, %v1255
      %v1257 = vlaneseq
      %v1258 = vshrl.u32 %v1257, 7
      %v1259 = vsub.s32 7, %v1258
      %v1260 = vrot.slane %v1228, %v1259
      %vm1261 = vcmp.eq.s32.totalorder %v1232, 1
      %vm1262 = vcmp.eq.s32.totalorder %v1236, 1
      %vm1263 = vcmp.eq.s32.totalorder %v1240, 1
      %vm1264 = vcmp.eq.s32.totalorder %v1244, 1
      %vm1265 = vcmp.eq.s32.totalorder %v1248, 1
      %vm1266 = vcmp.eq.s32.totalorder %v1252, 1
      %vm1267 = vcmp.eq.s32.totalorder %v1256, 1
      %vm1268 = vcmp.eq.s32.totalorder %v1260, 1
      %v1269 = vsel %vm1261, %v1225, 0.0
      %v1270 = vsel %vm1262, %v1210, 0.0
      %v1271 = vsel %vm1263, %v1211, 0.0
      %v1272 = vsel %vm1264, %v1212, 0.0
      %v1273 = vsel %vm1265, %v1213, 0.0
      %v1274 = vsel %vm1266, %v1214, 0.0
      %v1275 = vsel %vm1267, %v1215, 0.0
      %v1276 = vsel %vm1268, %v1216, 0.0
      %1277 = vst [vmem:[#allocation2 + $0x100] sm:$0xf] %v1269
      %1278 = vst [vmem:[#allocation2 + $0x108] sm:$0xf] %v1270
      %1279 = vst [vmem:[#allocation2 + $0x110] sm:$0xf] %v1271
      %1280 = vst [vmem:[#allocation2 + $0x118] sm:$0xf] %v1272
      %1281 = vst [vmem:[#allocation2 + $0x120] sm:$0xf] %v1273
      %1282 = vst [vmem:[#allocation2 + $0x128] sm:$0xf] %v1274
      %1283 = vst [vmem:[#allocation2 + $0x130] sm:$0xf] %v1275
      %1284 = vst [vmem:[#allocation2 + $0x138] sm:$0xf] %v1276
      %1285 = vrot.lane.b32.xlu0 %v323, 14
      %v1286 = vpop.permute.xlu0 %1285
      %1288 = vrot.lane.b32.xlu0 %v306, 14
      %v1289 = vpop.permute.xlu0 %1288
      %1290 = vrot.lane.b32.xlu0 %v330, 14
      %v1291 = vpop.permute.xlu0 %1290
      %1292 = vrot.lane.b32.xlu0 %v307, 14
      %v1293 = vpop.permute.xlu0 %1292
      %1294 = vrot.lane.b32.xlu0 %v331, 14
      %v1295 = vpop.permute.xlu0 %1294
      %1296 = vrot.lane.b32.xlu0 %v308, 14
      %v1297 = vpop.permute.xlu0 %1296
      %1298 = vrot.lane.b32.xlu0 %v332, 14
      %v1299 = vpop.permute.xlu0 %1298
      %1300 = vrot.lane.b32.xlu0 %v309, 14
      %v1301 = vpop.permute.xlu0 %1300
      %vm1302 = vcmask 113664
      %v1303 = vsel %vm1302, %v1289, %v1291
      %v1304 = vsel %vm1302, %v1291, %v1293
      %v1305 = vsel %vm1302, %v1293, %v1295
      %v1306 = vsel %vm1302, %v1295, %v1297
      %v1307 = vsel %vm1302, %v1297, %v1299
      %v1308 = vsel %vm1302, %v1299, %v1301
      %v1309 = vsel %vm1302, %v1301, %v1286
      %v1318 = vsel %vm1302, %v1286, %v1289
      %vm1319 = vmand %vm898, %vm800
      %vm1320 = vmand %vm1319, %vm802
      %v1321 = vsel %vm1320, 1, 0
      %v1322 = vlaneseq
      %v1323 = vshrl.u32 %v1322, 7
      %v1324 = vsub.s32 0, %v1323
      %v1325 = vrot.slane %v1321, %v1324
      %v1326 = vlaneseq
      %v1327 = vshrl.u32 %v1326, 7
      %v1328 = vsub.s32 1, %v1327
      %v1329 = vrot.slane %v1321, %v1328
      %v1330 = vlaneseq
      %v1331 = vshrl.u32 %v1330, 7
      %v1332 = vsub.s32 2, %v1331
      %v1333 = vrot.slane %v1321, %v1332
      %v1334 = vlaneseq
      %v1335 = vshrl.u32 %v1334, 7
      %v1336 = vsub.s32 3, %v1335
      %v1337 = vrot.slane %v1321, %v1336
      %v1338 = vlaneseq
      %v1339 = vshrl.u32 %v1338, 7
      %v1340 = vsub.s32 4, %v1339
      %v1341 = vrot.slane %v1321, %v1340
      %v1342 = vlaneseq
      %v1343 = vshrl.u32 %v1342, 7
      %v1344 = vsub.s32 5, %v1343
      %v1345 = vrot.slane %v1321, %v1344
      %v1346 = vlaneseq
      %v1347 = vshrl.u32 %v1346, 7
      %v1348 = vsub.s32 6, %v1347
      %v1349 = vrot.slane %v1321, %v1348
      %v1350 = vlaneseq
      %v1351 = vshrl.u32 %v1350, 7
      %v1352 = vsub.s32 7, %v1351
      %v1353 = vrot.slane %v1321, %v1352
      %vm1354 = vcmp.eq.s32.totalorder %v1325, 1
      %vm1355 = vcmp.eq.s32.totalorder %v1329, 1
      %vm1356 = vcmp.eq.s32.totalorder %v1333, 1
      %vm1357 = vcmp.eq.s32.totalorder %v1337, 1
      %vm1358 = vcmp.eq.s32.totalorder %v1341, 1
      %vm1359 = vcmp.eq.s32.totalorder %v1345, 1
      %vm1360 = vcmp.eq.s32.totalorder %v1349, 1
      %vm1361 = vcmp.eq.s32.totalorder %v1353, 1
      %v1362 = vsel %vm1354, %v1318, 0.0
      %v1363 = vsel %vm1355, %v1303, 0.0
      %v1364 = vsel %vm1356, %v1304, 0.0
      %v1365 = vsel %vm1357, %v1305, 0.0
      %v1366 = vsel %vm1358, %v1306, 0.0
      %v1367 = vsel %vm1359, %v1307, 0.0
      %v1368 = vsel %vm1360, %v1308, 0.0
      %v1369 = vsel %vm1361, %v1309, 0.0
      %v1378 = vrot.slane %v1362, 4
      %v1379 = vrot.slane %v1363, 4
      %v1380 = vrot.slane %v1364, 4
      %v1381 = vrot.slane %v1365, 4
      %v1382 = vrot.slane %v1366, 4
      %v1383 = vrot.slane %v1367, 4
      %v1384 = vrot.slane %v1368, 4
      %v1385 = vrot.slane %v1369, 4
      %1394 = vst [vmem:[#allocation2 + $0x100] sm:$0xf0] %v1378
      %1395 = vst [vmem:[#allocation2 + $0x108] sm:$0xf0] %v1379
      %1396 = vst [vmem:[#allocation2 + $0x110] sm:$0xf0] %v1380
      %1397 = vst [vmem:[#allocation2 + $0x118] sm:$0xf0] %v1381
      %1398 = vst [vmem:[#allocation2 + $0x120] sm:$0xf0] %v1382
      %1399 = vst [vmem:[#allocation2 + $0x128] sm:$0xf0] %v1383
      %1400 = vst [vmem:[#allocation2 + $0x130] sm:$0xf0] %v1384
      %1401 = vst [vmem:[#allocation2 + $0x138] sm:$0xf0] %v1385
      %1402 = vrot.lane.b32.xlu0 %v323, 2
      %v1403 = vpop.permute.xlu0 %1402
      %1405 = vrot.lane.b32.xlu0 %v306, 2
      %v1406 = vpop.permute.xlu0 %1405
      %1407 = vrot.lane.b32.xlu0 %v330, 2
      %v1408 = vpop.permute.xlu0 %1407
      %1409 = vrot.lane.b32.xlu0 %v307, 2
      %v1410 = vpop.permute.xlu0 %1409
      %1411 = vrot.lane.b32.xlu0 %v331, 2
      %v1412 = vpop.permute.xlu0 %1411
      %1413 = vrot.lane.b32.xlu0 %v308, 2
      %v1414 = vpop.permute.xlu0 %1413
      %1415 = vrot.lane.b32.xlu0 %v332, 2
      %v1416 = vpop.permute.xlu0 %1415
      %1417 = vrot.lane.b32.xlu0 %v309, 2
      %v1418 = vpop.permute.xlu0 %1417
      %vm1419 = vcmask 15360
      %v1420 = vsel %vm1419, %v1406, %v1408
      %v1421 = vsel %vm1419, %v1408, %v1410
      %v1422 = vsel %vm1419, %v1410, %v1412
      %v1423 = vsel %vm1419, %v1412, %v1414
      %v1424 = vsel %vm1419, %v1414, %v1416
      %v1425 = vsel %vm1419, %v1416, %v1418
      %v1426 = vsel %vm1419, %v1418, %v1403
      %v1435 = vsel %vm1419, %v1403, %v1406
      %vm1436 = vcmp.ge.s32.totalorder %v310, 0
      %vm1437 = vcmp.lt.s32.totalorder %v310, 16
      %vm1438 = vmand %vm1436, %vm1437
      %vm1439 = vmand %vm1438, %vm369
      %vm1440 = vmand %vm1439, %vm371
      %v1441 = vsel %vm1440, 1, 0
      %v1442 = vlaneseq
      %v1443 = vshrl.u32 %v1442, 7
      %v1444 = vsub.s32 0, %v1443
      %v1445 = vrot.slane %v1441, %v1444
      %v1446 = vlaneseq
      %v1447 = vshrl.u32 %v1446, 7
      %v1448 = vsub.s32 1, %v1447
      %v1449 = vrot.slane %v1441, %v1448
      %v1450 = vlaneseq
      %v1451 = vshrl.u32 %v1450, 7
      %v1452 = vsub.s32 2, %v1451
      %v1453 = vrot.slane %v1441, %v1452
      %v1454 = vlaneseq
      %v1455 = vshrl.u32 %v1454, 7
      %v1456 = vsub.s32 3, %v1455
      %v1457 = vrot.slane %v1441, %v1456
      %v1458 = vlaneseq
      %v1459 = vshrl.u32 %v1458, 7
      %v1460 = vsub.s32 4, %v1459
      %v1461 = vrot.slane %v1441, %v1460
      %v1462 = vlaneseq
      %v1463 = vshrl.u32 %v1462, 7
      %v1464 = vsub.s32 5, %v1463
      %v1465 = vrot.slane %v1441, %v1464
      %v1466 = vlaneseq
      %v1467 = vshrl.u32 %v1466, 7
      %v1468 = vsub.s32 6, %v1467
      %v1469 = vrot.slane %v1441, %v1468
      %v1470 = vlaneseq
      %v1471 = vshrl.u32 %v1470, 7
      %v1472 = vsub.s32 7, %v1471
      %v1473 = vrot.slane %v1441, %v1472
      %vm1474 = vcmp.eq.s32.totalorder %v1445, 1
      %vm1475 = vcmp.eq.s32.totalorder %v1449, 1
      %vm1476 = vcmp.eq.s32.totalorder %v1453, 1
      %vm1477 = vcmp.eq.s32.totalorder %v1457, 1
      %vm1478 = vcmp.eq.s32.totalorder %v1461, 1
      %vm1479 = vcmp.eq.s32.totalorder %v1465, 1
      %vm1480 = vcmp.eq.s32.totalorder %v1469, 1
      %vm1481 = vcmp.eq.s32.totalorder %v1473, 1
      %v1482 = vsel %vm1474, %v1435, 0.0
      %v1483 = vsel %vm1475, %v1420, 0.0
      %v1484 = vsel %vm1476, %v1421, 0.0
      %v1485 = vsel %vm1477, %v1422, 0.0
      %v1486 = vsel %vm1478, %v1423, 0.0
      %v1487 = vsel %vm1479, %v1424, 0.0
      %v1488 = vsel %vm1480, %v1425, 0.0
      %v1489 = vsel %vm1481, %v1426, 0.0
      %1490 = vst [vmem:[#allocation2 + $0x140] sm:$0xf] %v1482
      %1491 = vst [vmem:[#allocation2 + $0x148] sm:$0xf] %v1483
      %1492 = vst [vmem:[#allocation2 + $0x150] sm:$0xf] %v1484
      %1493 = vst [vmem:[#allocation2 + $0x158] sm:$0xf] %v1485
      %1494 = vst [vmem:[#allocation2 + $0x160] sm:$0xf] %v1486
      %1495 = vst [vmem:[#allocation2 + $0x168] sm:$0xf] %v1487
      %1496 = vst [vmem:[#allocation2 + $0x170] sm:$0xf] %v1488
      %1497 = vst [vmem:[#allocation2 + $0x178] sm:$0xf] %v1489
      %1498 = vrot.lane.b32.xlu0 %v323, 1
      %v1499 = vpop.permute.xlu0 %1498
      %1501 = vrot.lane.b32.xlu0 %v306, 1
      %v1502 = vpop.permute.xlu0 %1501
      %1503 = vrot.lane.b32.xlu0 %v330, 1
      %v1504 = vpop.permute.xlu0 %1503
      %1505 = vrot.lane.b32.xlu0 %v307, 1
      %v1506 = vpop.permute.xlu0 %1505
      %1507 = vrot.lane.b32.xlu0 %v331, 1
      %v1508 = vpop.permute.xlu0 %1507
      %1509 = vrot.lane.b32.xlu0 %v308, 1
      %v1510 = vpop.permute.xlu0 %1509
      %1511 = vrot.lane.b32.xlu0 %v332, 1
      %v1512 = vpop.permute.xlu0 %1511
      %1513 = vrot.lane.b32.xlu0 %v309, 1
      %v1514 = vpop.permute.xlu0 %1513
      %vm1515 = vcmask 7168
      %v1516 = vsel %vm1515, %v1502, %v1504
      %v1517 = vsel %vm1515, %v1504, %v1506
      %v1518 = vsel %vm1515, %v1506, %v1508
      %v1519 = vsel %vm1515, %v1508, %v1510
      %v1520 = vsel %vm1515, %v1510, %v1512
      %v1521 = vsel %vm1515, %v1512, %v1514
      %v1522 = vsel %vm1515, %v1514, %v1499
      %v1531 = vsel %vm1515, %v1499, %v1502
      %vm1532 = vmand %vm1438, %vm465
      %vm1533 = vmand %vm1532, %vm467
      %v1534 = vsel %vm1533, 1, 0
      %v1535 = vlaneseq
      %v1536 = vshrl.u32 %v1535, 7
      %v1537 = vsub.s32 0, %v1536
      %v1538 = vrot.slane %v1534, %v1537
      %v1539 = vlaneseq
      %v1540 = vshrl.u32 %v1539, 7
      %v1541 = vsub.s32 1, %v1540
      %v1542 = vrot.slane %v1534, %v1541
      %v1543 = vlaneseq
      %v1544 = vshrl.u32 %v1543, 7
      %v1545 = vsub.s32 2, %v1544
      %v1546 = vrot.slane %v1534, %v1545
      %v1547 = vlaneseq
      %v1548 = vshrl.u32 %v1547, 7
      %v1549 = vsub.s32 3, %v1548
      %v1550 = vrot.slane %v1534, %v1549
      %v1551 = vlaneseq
      %v1552 = vshrl.u32 %v1551, 7
      %v1553 = vsub.s32 4, %v1552
      %v1554 = vrot.slane %v1534, %v1553
      %v1555 = vlaneseq
      %v1556 = vshrl.u32 %v1555, 7
      %v1557 = vsub.s32 5, %v1556
      %v1558 = vrot.slane %v1534, %v1557
      %v1559 = vlaneseq
      %v1560 = vshrl.u32 %v1559, 7
      %v1561 = vsub.s32 6, %v1560
      %v1562 = vrot.slane %v1534, %v1561
      %v1563 = vlaneseq
      %v1564 = vshrl.u32 %v1563, 7
      %v1565 = vsub.s32 7, %v1564
      %v1566 = vrot.slane %v1534, %v1565
      %vm1567 = vcmp.eq.s32.totalorder %v1538, 1
      %vm1568 = vcmp.eq.s32.totalorder %v1542, 1
      %vm1569 = vcmp.eq.s32.totalorder %v1546, 1
      %vm1570 = vcmp.eq.s32.totalorder %v1550, 1
      %vm1571 = vcmp.eq.s32.totalorder %v1554, 1
      %vm1572 = vcmp.eq.s32.totalorder %v1558, 1
      %vm1573 = vcmp.eq.s32.totalorder %v1562, 1
      %vm1574 = vcmp.eq.s32.totalorder %v1566, 1
      %v1575 = vsel %vm1567, %v1531, 0.0
      %v1576 = vsel %vm1568, %v1516, 0.0
      %v1577 = vsel %vm1569, %v1517, 0.0
      %v1578 = vsel %vm1570, %v1518, 0.0
      %v1579 = vsel %vm1571, %v1519, 0.0
      %v1580 = vsel %vm1572, %v1520, 0.0
      %v1581 = vsel %vm1573, %v1521, 0.0
      %v1582 = vsel %vm1574, %v1522, 0.0
      %v1591 = vrot.slane %v1575, 4
      %v1592 = vrot.slane %v1576, 4
      %v1593 = vrot.slane %v1577, 4
      %v1594 = vrot.slane %v1578, 4
      %v1595 = vrot.slane %v1579, 4
      %v1596 = vrot.slane %v1580, 4
      %v1597 = vrot.slane %v1581, 4
      %v1598 = vrot.slane %v1582, 4
      %1607 = vst [vmem:[#allocation2 + $0x140] sm:$0xf0] %v1591
      %1608 = vst [vmem:[#allocation2 + $0x148] sm:$0xf0] %v1592
      %1609 = vst [vmem:[#allocation2 + $0x150] sm:$0xf0] %v1593
      %1610 = vst [vmem:[#allocation2 + $0x158] sm:$0xf0] %v1594
      %1611 = vst [vmem:[#allocation2 + $0x160] sm:$0xf0] %v1595
      %1612 = vst [vmem:[#allocation2 + $0x168] sm:$0xf0] %v1596
      %1613 = vst [vmem:[#allocation2 + $0x170] sm:$0xf0] %v1597
      %1614 = vst [vmem:[#allocation2 + $0x178] sm:$0xf0] %v1598
      %vm1615 = vmand %vm1438, %vm584
      %vm1616 = vmand %vm1615, %vm586
      %v1617 = vsel %vm1616, 1, 0
      %v1618 = vlaneseq
      %v1619 = vshrl.u32 %v1618, 7
      %v1620 = vsub.s32 0, %v1619
      %v1621 = vrot.slane %v1617, %v1620
      %v1622 = vlaneseq
      %v1623 = vshrl.u32 %v1622, 7
      %v1624 = vsub.s32 1, %v1623
      %v1625 = vrot.slane %v1617, %v1624
      %v1626 = vlaneseq
      %v1627 = vshrl.u32 %v1626, 7
      %v1628 = vsub.s32 2, %v1627
      %v1629 = vrot.slane %v1617, %v1628
      %v1630 = vlaneseq
      %v1631 = vshrl.u32 %v1630, 7
      %v1632 = vsub.s32 3, %v1631
      %v1633 = vrot.slane %v1617, %v1632
      %v1634 = vlaneseq
      %v1635 = vshrl.u32 %v1634, 7
      %v1636 = vsub.s32 4, %v1635
      %v1637 = vrot.slane %v1617, %v1636
      %v1638 = vlaneseq
      %v1639 = vshrl.u32 %v1638, 7
      %v1640 = vsub.s32 5, %v1639
      %v1641 = vrot.slane %v1617, %v1640
      %v1642 = vlaneseq
      %v1643 = vshrl.u32 %v1642, 7
      %v1644 = vsub.s32 6, %v1643
      %v1645 = vrot.slane %v1617, %v1644
      %v1646 = vlaneseq
      %v1647 = vshrl.u32 %v1646, 7
      %v1648 = vsub.s32 7, %v1647
      %v1649 = vrot.slane %v1617, %v1648
      %vm1650 = vcmp.eq.s32.totalorder %v1621, 1
      %vm1651 = vcmp.eq.s32.totalorder %v1625, 1
      %vm1652 = vcmp.eq.s32.totalorder %v1629, 1
      %vm1653 = vcmp.eq.s32.totalorder %v1633, 1
      %vm1654 = vcmp.eq.s32.totalorder %v1637, 1
      %vm1655 = vcmp.eq.s32.totalorder %v1641, 1
      %vm1656 = vcmp.eq.s32.totalorder %v1645, 1
      %vm1657 = vcmp.eq.s32.totalorder %v1649, 1
      %v1662 = vsel %vm1650, %v306, 0.0
      %v1663 = vsel %vm1651, %v330, 0.0
      %v1664 = vsel %vm1652, %v307, 0.0
      %v1665 = vsel %vm1653, %v331, 0.0
      %v1666 = vsel %vm1654, %v308, 0.0
      %v1667 = vsel %vm1655, %v332, 0.0
      %v1668 = vsel %vm1656, %v309, 0.0
      %v1669 = vsel %vm1657, %v323, 0.0
      %1670 = vst [vmem:[#allocation2 + $0x180] sm:$0xf] %v1662
      %1671 = vst [vmem:[#allocation2 + $0x188] sm:$0xf] %v1663
      %1672 = vst [vmem:[#allocation2 + $0x190] sm:$0xf] %v1664
      %1673 = vst [vmem:[#allocation2 + $0x198] sm:$0xf] %v1665
      %1674 = vst [vmem:[#allocation2 + $0x1a0] sm:$0xf] %v1666
      %1675 = vst [vmem:[#allocation2 + $0x1a8] sm:$0xf] %v1667
      %1676 = vst [vmem:[#allocation2 + $0x1b0] sm:$0xf] %v1668
      %1677 = vst [vmem:[#allocation2 + $0x1b8] sm:$0xf] %v1669
      %1678 = vrot.lane.b32.xlu0 %v306, 127
      %v1679 = vpop.permute.xlu0 %1678
      %1680 = vrot.lane.b32.xlu0 %v330, 127
      %v1681 = vpop.permute.xlu0 %1680
      %1682 = vrot.lane.b32.xlu0 %v307, 127
      %v1683 = vpop.permute.xlu0 %1682
      %1684 = vrot.lane.b32.xlu0 %v331, 127
      %v1685 = vpop.permute.xlu0 %1684
      %1686 = vrot.lane.b32.xlu0 %v308, 127
      %v1687 = vpop.permute.xlu0 %1686
      %1688 = vrot.lane.b32.xlu0 %v332, 127
      %v1689 = vpop.permute.xlu0 %1688
      %1690 = vrot.lane.b32.xlu0 %v309, 127
      %v1691 = vpop.permute.xlu0 %1690
      %1692 = vrot.lane.b32.xlu0 %v323, 127
      %v1693 = vpop.permute.xlu0 %1692
      %vm1694 = vcmask 1039360
      %v1695 = vsel %vm1694, %v1679, %v1681
      %v1696 = vsel %vm1694, %v1681, %v1683
      %v1697 = vsel %vm1694, %v1683, %v1685
      %v1698 = vsel %vm1694, %v1685, %v1687
      %v1699 = vsel %vm1694, %v1687, %v1689
      %v1700 = vsel %vm1694, %v1689, %v1691
      %v1701 = vsel %vm1694, %v1691, %v1693
      %v1711 = vsel %vm1694, %v1693, %v1679
      %vm1712 = vmand %vm1438, %vm680
      %vm1713 = vmand %vm1712, %vm682
      %v1714 = vsel %vm1713, 1, 0
      %v1715 = vlaneseq
      %v1716 = vshrl.u32 %v1715, 7
      %v1717 = vsub.s32 0, %v1716
      %v1718 = vrot.slane %v1714, %v1717
      %v1719 = vlaneseq
      %v1720 = vshrl.u32 %v1719, 7
      %v1721 = vsub.s32 1, %v1720
      %v1722 = vrot.slane %v1714, %v1721
      %v1723 = vlaneseq
      %v1724 = vshrl.u32 %v1723, 7
      %v1725 = vsub.s32 2, %v1724
      %v1726 = vrot.slane %v1714, %v1725
      %v1727 = vlaneseq
      %v1728 = vshrl.u32 %v1727, 7
      %v1729 = vsub.s32 3, %v1728
      %v1730 = vrot.slane %v1714, %v1729
      %v1731 = vlaneseq
      %v1732 = vshrl.u32 %v1731, 7
      %v1733 = vsub.s32 4, %v1732
      %v1734 = vrot.slane %v1714, %v1733
      %v1735 = vlaneseq
      %v1736 = vshrl.u32 %v1735, 7
      %v1737 = vsub.s32 5, %v1736
      %v1738 = vrot.slane %v1714, %v1737
      %v1739 = vlaneseq
      %v1740 = vshrl.u32 %v1739, 7
      %v1741 = vsub.s32 6, %v1740
      %v1742 = vrot.slane %v1714, %v1741
      %v1743 = vlaneseq
      %v1744 = vshrl.u32 %v1743, 7
      %v1745 = vsub.s32 7, %v1744
      %v1746 = vrot.slane %v1714, %v1745
      %vm1747 = vcmp.eq.s32.totalorder %v1718, 1
      %vm1748 = vcmp.eq.s32.totalorder %v1722, 1
      %vm1749 = vcmp.eq.s32.totalorder %v1726, 1
      %vm1750 = vcmp.eq.s32.totalorder %v1730, 1
      %vm1751 = vcmp.eq.s32.totalorder %v1734, 1
      %vm1752 = vcmp.eq.s32.totalorder %v1738, 1
      %vm1753 = vcmp.eq.s32.totalorder %v1742, 1
      %vm1754 = vcmp.eq.s32.totalorder %v1746, 1
      %v1755 = vsel %vm1747, %v1695, 0.0
      %v1756 = vsel %vm1748, %v1696, 0.0
      %v1757 = vsel %vm1749, %v1697, 0.0
      %v1758 = vsel %vm1750, %v1698, 0.0
      %v1759 = vsel %vm1751, %v1699, 0.0
      %v1760 = vsel %vm1752, %v1700, 0.0
      %v1761 = vsel %vm1753, %v1701, 0.0
      %v1762 = vsel %vm1754, %v1711, 0.0
      %v1771 = vrot.slane %v1755, 4
      %v1772 = vrot.slane %v1756, 4
      %v1773 = vrot.slane %v1757, 4
      %v1774 = vrot.slane %v1758, 4
      %v1775 = vrot.slane %v1759, 4
      %v1776 = vrot.slane %v1760, 4
      %v1777 = vrot.slane %v1761, 4
      %v1778 = vrot.slane %v1762, 4
      %1787 = vst [vmem:[#allocation2 + $0x180] sm:$0xf0] %v1771
      %1788 = vst [vmem:[#allocation2 + $0x188] sm:$0xf0] %v1772
      %1789 = vst [vmem:[#allocation2 + $0x190] sm:$0xf0] %v1773
      %1790 = vst [vmem:[#allocation2 + $0x198] sm:$0xf0] %v1774
      %1791 = vst [vmem:[#allocation2 + $0x1a0] sm:$0xf0] %v1775
      %1792 = vst [vmem:[#allocation2 + $0x1a8] sm:$0xf0] %v1776
      %1793 = vst [vmem:[#allocation2 + $0x1b0] sm:$0xf0] %v1777
      %1794 = vst [vmem:[#allocation2 + $0x1b8] sm:$0xf0] %v1778
      %1795 = vrot.lane.b32.xlu0 %v306, 126
      %v1796 = vpop.permute.xlu0 %1795
      %1797 = vrot.lane.b32.xlu0 %v330, 126
      %v1798 = vpop.permute.xlu0 %1797
      %1799 = vrot.lane.b32.xlu0 %v307, 126
      %v1800 = vpop.permute.xlu0 %1799
      %1801 = vrot.lane.b32.xlu0 %v331, 126
      %v1802 = vpop.permute.xlu0 %1801
      %1803 = vrot.lane.b32.xlu0 %v308, 126
      %v1804 = vpop.permute.xlu0 %1803
      %1805 = vrot.lane.b32.xlu0 %v332, 126
      %v1806 = vpop.permute.xlu0 %1805
      %1807 = vrot.lane.b32.xlu0 %v309, 126
      %v1808 = vpop.permute.xlu0 %1807
      %1809 = vrot.lane.b32.xlu0 %v323, 126
      %v1810 = vpop.permute.xlu0 %1809
      %vm1811 = vcmask 1031168
      %v1812 = vsel %vm1811, %v1796, %v1798
      %v1813 = vsel %vm1811, %v1798, %v1800
      %v1814 = vsel %vm1811, %v1800, %v1802
      %v1815 = vsel %vm1811, %v1802, %v1804
      %v1816 = vsel %vm1811, %v1804, %v1806
      %v1817 = vsel %vm1811, %v1806, %v1808
      %v1818 = vsel %vm1811, %v1808, %v1810
      %v1828 = vsel %vm1811, %v1810, %v1796
      %vm1829 = vmand %vm1438, %vm800
      %vm1830 = vmand %vm1829, %vm802
      %v1831 = vsel %vm1830, 1, 0
      %v1832 = vlaneseq
      %v1833 = vshrl.u32 %v1832, 7
      %v1834 = vsub.s32 0, %v1833
      %v1835 = vrot.slane %v1831, %v1834
      %v1836 = vlaneseq
      %v1837 = vshrl.u32 %v1836, 7
      %v1838 = vsub.s32 1, %v1837
      %v1839 = vrot.slane %v1831, %v1838
      %v1840 = vlaneseq
      %v1841 = vshrl.u32 %v1840, 7
      %v1842 = vsub.s32 2, %v1841
      %v1843 = vrot.slane %v1831, %v1842
      %v1844 = vlaneseq
      %v1845 = vshrl.u32 %v1844, 7
      %v1846 = vsub.s32 3, %v1845
      %v1847 = vrot.slane %v1831, %v1846
      %v1848 = vlaneseq
      %v1849 = vshrl.u32 %v1848, 7
      %v1850 = vsub.s32 4, %v1849
      %v1851 = vrot.slane %v1831, %v1850
      %v1852 = vlaneseq
      %v1853 = vshrl.u32 %v1852, 7
      %v1854 = vsub.s32 5, %v1853
      %v1855 = vrot.slane %v1831, %v1854
      %v1856 = vlaneseq
      %v1857 = vshrl.u32 %v1856, 7
      %v1858 = vsub.s32 6, %v1857
      %v1859 = vrot.slane %v1831, %v1858
      %v1860 = vlaneseq
      %v1861 = vshrl.u32 %v1860, 7
      %v1862 = vsub.s32 7, %v1861
      %v1863 = vrot.slane %v1831, %v1862
      %vm1864 = vcmp.eq.s32.totalorder %v1835, 1
      %vm1865 = vcmp.eq.s32.totalorder %v1839, 1
      %vm1866 = vcmp.eq.s32.totalorder %v1843, 1
      %vm1867 = vcmp.eq.s32.totalorder %v1847, 1
      %vm1868 = vcmp.eq.s32.totalorder %v1851, 1
      %vm1869 = vcmp.eq.s32.totalorder %v1855, 1
      %vm1870 = vcmp.eq.s32.totalorder %v1859, 1
      %vm1871 = vcmp.eq.s32.totalorder %v1863, 1
      %v1872 = vsel %vm1864, %v1812, 0.0
      %v1873 = vsel %vm1865, %v1813, 0.0
      %v1874 = vsel %vm1866, %v1814, 0.0
      %v1875 = vsel %vm1867, %v1815, 0.0
      %v1876 = vsel %vm1868, %v1816, 0.0
      %v1877 = vsel %vm1869, %v1817, 0.0
      %v1878 = vsel %vm1870, %v1818, 0.0
      %v1879 = vsel %vm1871, %v1828, 0.0
      %1880 = vst [vmem:[#allocation2 + $0x1c0] sm:$0xf] %v1872
      %1881 = vst [vmem:[#allocation2 + $0x1c8] sm:$0xf] %v1873
      %1882 = vst [vmem:[#allocation2 + $0x1d0] sm:$0xf] %v1874
      %1883 = vst [vmem:[#allocation2 + $0x1d8] sm:$0xf] %v1875
      %1884 = vst [vmem:[#allocation2 + $0x1e0] sm:$0xf] %v1876
      %1885 = vst [vmem:[#allocation2 + $0x1e8] sm:$0xf] %v1877
      %1886 = vst [vmem:[#allocation2 + $0x1f0] sm:$0xf] %v1878
      %1887 = vst [vmem:[#allocation2 + $0x1f8] sm:$0xf] %v1879
      %1888 = vrot.lane.b32.xlu0 %v306, 114
      %v1889 = vpop.permute.xlu0 %1888
      %1890 = vrot.lane.b32.xlu0 %v330, 114
      %v1891 = vpop.permute.xlu0 %1890
      %1892 = vrot.lane.b32.xlu0 %v307, 114
      %v1893 = vpop.permute.xlu0 %1892
      %1894 = vrot.lane.b32.xlu0 %v331, 114
      %v1895 = vpop.permute.xlu0 %1894
      %1896 = vrot.lane.b32.xlu0 %v308, 114
      %v1897 = vpop.permute.xlu0 %1896
      %1898 = vrot.lane.b32.xlu0 %v332, 114
      %v1899 = vpop.permute.xlu0 %1898
      %1900 = vrot.lane.b32.xlu0 %v309, 114
      %v1901 = vpop.permute.xlu0 %1900
      %1902 = vrot.lane.b32.xlu0 %v323, 114
      %v1903 = vpop.permute.xlu0 %1902
      %vm1904 = vcmask 932864
      %v1905 = vsel %vm1904, %v1889, %v1891
      %v1906 = vsel %vm1904, %v1891, %v1893
      %v1907 = vsel %vm1904, %v1893, %v1895
      %v1908 = vsel %vm1904, %v1895, %v1897
      %v1909 = vsel %vm1904, %v1897, %v1899
      %v1910 = vsel %vm1904, %v1899, %v1901
      %v1911 = vsel %vm1904, %v1901, %v1903
      %v1921 = vsel %vm1904, %v1903, %v1889
      %v1922 = vadd.s32 %v310, 1
      %vm1923 = vcmp.ge.s32.totalorder %v1922, 0
      %vm1924 = vcmp.lt.s32.totalorder %v1922, 16
      %vm1925 = vmand %vm1923, %vm1924
      %vm1926 = vmand %vm1925, %vm369
      %vm1927 = vmand %vm1926, %vm371
      %v1928 = vsel %vm1927, 1, 0
      %v1929 = vlaneseq
      %v1930 = vshrl.u32 %v1929, 7
      %v1931 = vsub.s32 0, %v1930
      %v1932 = vrot.slane %v1928, %v1931
      %v1933 = vlaneseq
      %v1934 = vshrl.u32 %v1933, 7
      %v1935 = vsub.s32 1, %v1934
      %v1936 = vrot.slane %v1928, %v1935
      %v1937 = vlaneseq
      %v1938 = vshrl.u32 %v1937, 7
      %v1939 = vsub.s32 2, %v1938
      %v1940 = vrot.slane %v1928, %v1939
      %v1941 = vlaneseq
      %v1942 = vshrl.u32 %v1941, 7
      %v1943 = vsub.s32 3, %v1942
      %v1944 = vrot.slane %v1928, %v1943
      %v1945 = vlaneseq
      %v1946 = vshrl.u32 %v1945, 7
      %v1947 = vsub.s32 4, %v1946
      %v1948 = vrot.slane %v1928, %v1947
      %v1949 = vlaneseq
      %v1950 = vshrl.u32 %v1949, 7
      %v1951 = vsub.s32 5, %v1950
      %v1952 = vrot.slane %v1928, %v1951
      %v1953 = vlaneseq
      %v1954 = vshrl.u32 %v1953, 7
      %v1955 = vsub.s32 6, %v1954
      %v1956 = vrot.slane %v1928, %v1955
      %v1957 = vlaneseq
      %v1958 = vshrl.u32 %v1957, 7
      %v1959 = vsub.s32 7, %v1958
      %v1960 = vrot.slane %v1928, %v1959
      %vm1961 = vcmp.eq.s32.totalorder %v1932, 1
      %vm1962 = vcmp.eq.s32.totalorder %v1936, 1
      %vm1963 = vcmp.eq.s32.totalorder %v1940, 1
      %vm1964 = vcmp.eq.s32.totalorder %v1944, 1
      %vm1965 = vcmp.eq.s32.totalorder %v1948, 1
      %vm1966 = vcmp.eq.s32.totalorder %v1952, 1
      %vm1967 = vcmp.eq.s32.totalorder %v1956, 1
      %vm1968 = vcmp.eq.s32.totalorder %v1960, 1
      %v1969 = vsel %vm1961, %v1905, 0.0
      %v1970 = vsel %vm1962, %v1906, 0.0
      %v1971 = vsel %vm1963, %v1907, 0.0
      %v1972 = vsel %vm1964, %v1908, 0.0
      %v1973 = vsel %vm1965, %v1909, 0.0
      %v1974 = vsel %vm1966, %v1910, 0.0
      %v1975 = vsel %vm1967, %v1911, 0.0
      %v1976 = vsel %vm1968, %v1921, 0.0
      %v1985 = vrot.slane %v1969, 4
      %v1986 = vrot.slane %v1970, 4
      %v1987 = vrot.slane %v1971, 4
      %v1988 = vrot.slane %v1972, 4
      %v1989 = vrot.slane %v1973, 4
      %v1990 = vrot.slane %v1974, 4
      %v1991 = vrot.slane %v1975, 4
      %v1992 = vrot.slane %v1976, 4
      %2001 = vst [vmem:[#allocation2 + $0x1c0] sm:$0xf0] %v1985
      %2002 = vst [vmem:[#allocation2 + $0x1c8] sm:$0xf0] %v1986
      %2003 = vst [vmem:[#allocation2 + $0x1d0] sm:$0xf0] %v1987
      %2004 = vst [vmem:[#allocation2 + $0x1d8] sm:$0xf0] %v1988
      %2005 = vst [vmem:[#allocation2 + $0x1e0] sm:$0xf0] %v1989
      %2006 = vst [vmem:[#allocation2 + $0x1e8] sm:$0xf0] %v1990
      %2007 = vst [vmem:[#allocation2 + $0x1f0] sm:$0xf0] %v1991
      %2008 = vst [vmem:[#allocation2 + $0x1f8] sm:$0xf0] %v1992
      %2009 = vrot.lane.b32.xlu0 %v306, 113
      %v2010 = vpop.permute.xlu0 %2009
      %2011 = vrot.lane.b32.xlu0 %v330, 113
      %v2012 = vpop.permute.xlu0 %2011
      %2013 = vrot.lane.b32.xlu0 %v307, 113
      %v2014 = vpop.permute.xlu0 %2013
      %2015 = vrot.lane.b32.xlu0 %v331, 113
      %v2016 = vpop.permute.xlu0 %2015
      %2017 = vrot.lane.b32.xlu0 %v308, 113
      %v2018 = vpop.permute.xlu0 %2017
      %2019 = vrot.lane.b32.xlu0 %v332, 113
      %v2020 = vpop.permute.xlu0 %2019
      %2021 = vrot.lane.b32.xlu0 %v309, 113
      %v2022 = vpop.permute.xlu0 %2021
      %2023 = vrot.lane.b32.xlu0 %v323, 113
      %v2024 = vpop.permute.xlu0 %2023
      %vm2025 = vcmask 924672
      %v2026 = vsel %vm2025, %v2010, %v2012
      %v2027 = vsel %vm2025, %v2012, %v2014
      %v2028 = vsel %vm2025, %v2014, %v2016
      %v2029 = vsel %vm2025, %v2016, %v2018
      %v2030 = vsel %vm2025, %v2018, %v2020
      %v2031 = vsel %vm2025, %v2020, %v2022
      %v2032 = vsel %vm2025, %v2022, %v2024
      %v2042 = vsel %vm2025, %v2024, %v2010
      %vm2043 = vmand %vm1925, %vm465
      %vm2044 = vmand %vm2043, %vm467
      %v2045 = vsel %vm2044, 1, 0
      %v2046 = vlaneseq
      %v2047 = vshrl.u32 %v2046, 7
      %v2048 = vsub.s32 0, %v2047
      %v2049 = vrot.slane %v2045, %v2048
      %v2050 = vlaneseq
      %v2051 = vshrl.u32 %v2050, 7
      %v2052 = vsub.s32 1, %v2051
      %v2053 = vrot.slane %v2045, %v2052
      %v2054 = vlaneseq
      %v2055 = vshrl.u32 %v2054, 7
      %v2056 = vsub.s32 2, %v2055
      %v2057 = vrot.slane %v2045, %v2056
      %v2058 = vlaneseq
      %v2059 = vshrl.u32 %v2058, 7
      %v2060 = vsub.s32 3, %v2059
      %v2061 = vrot.slane %v2045, %v2060
      %v2062 = vlaneseq
      %v2063 = vshrl.u32 %v2062, 7
      %v2064 = vsub.s32 4, %v2063
      %v2065 = vrot.slane %v2045, %v2064
      %v2066 = vlaneseq
      %v2067 = vshrl.u32 %v2066, 7
      %v2068 = vsub.s32 5, %v2067
      %v2069 = vrot.slane %v2045, %v2068
      %v2070 = vlaneseq
      %v2071 = vshrl.u32 %v2070, 7
      %v2072 = vsub.s32 6, %v2071
      %v2073 = vrot.slane %v2045, %v2072
      %v2074 = vlaneseq
      %v2075 = vshrl.u32 %v2074, 7
      %v2076 = vsub.s32 7, %v2075
      %v2077 = vrot.slane %v2045, %v2076
      %vm2078 = vcmp.eq.s32.totalorder %v2049, 1
      %vm2079 = vcmp.eq.s32.totalorder %v2053, 1
      %vm2080 = vcmp.eq.s32.totalorder %v2057, 1
      %vm2081 = vcmp.eq.s32.totalorder %v2061, 1
      %vm2082 = vcmp.eq.s32.totalorder %v2065, 1
      %vm2083 = vcmp.eq.s32.totalorder %v2069, 1
      %vm2084 = vcmp.eq.s32.totalorder %v2073, 1
      %vm2085 = vcmp.eq.s32.totalorder %v2077, 1
      %v2086 = vsel %vm2078, %v2026, 0.0
      %v2087 = vsel %vm2079, %v2027, 0.0
      %v2088 = vsel %vm2080, %v2028, 0.0
      %v2089 = vsel %vm2081, %v2029, 0.0
      %v2090 = vsel %vm2082, %v2030, 0.0
      %v2091 = vsel %vm2083, %v2031, 0.0
      %v2092 = vsel %vm2084, %v2032, 0.0
      %v2093 = vsel %vm2085, %v2042, 0.0
      %2094 = vst [vmem:[#allocation2 + $0x200] sm:$0xf] %v2086
      %2095 = vst [vmem:[#allocation2 + $0x208] sm:$0xf] %v2087
      %2096 = vst [vmem:[#allocation2 + $0x210] sm:$0xf] %v2088
      %2097 = vst [vmem:[#allocation2 + $0x218] sm:$0xf] %v2089
      %2098 = vst [vmem:[#allocation2 + $0x220] sm:$0xf] %v2090
      %2099 = vst [vmem:[#allocation2 + $0x228] sm:$0xf] %v2091
      %2100 = vst [vmem:[#allocation2 + $0x230] sm:$0xf] %v2092
      %2101 = vst [vmem:[#allocation2 + $0x238] sm:$0xf] %v2093
      %2102 = vrot.lane.b32.xlu0 %v306, 112
      %v2103 = vpop.permute.xlu0 %2102
      %2104 = vrot.lane.b32.xlu0 %v330, 112
      %v2105 = vpop.permute.xlu0 %2104
      %2106 = vrot.lane.b32.xlu0 %v307, 112
      %v2107 = vpop.permute.xlu0 %2106
      %2108 = vrot.lane.b32.xlu0 %v331, 112
      %v2109 = vpop.permute.xlu0 %2108
      %2110 = vrot.lane.b32.xlu0 %v308, 112
      %v2111 = vpop.permute.xlu0 %2110
      %2112 = vrot.lane.b32.xlu0 %v332, 112
      %v2113 = vpop.permute.xlu0 %2112
      %2114 = vrot.lane.b32.xlu0 %v309, 112
      %v2115 = vpop.permute.xlu0 %2114
      %2116 = vrot.lane.b32.xlu0 %v323, 112
      %v2117 = vpop.permute.xlu0 %2116
      %vm2118 = vcmask 916480
      %v2119 = vsel %vm2118, %v2103, %v2105
      %v2120 = vsel %vm2118, %v2105, %v2107
      %v2121 = vsel %vm2118, %v2107, %v2109
      %v2122 = vsel %vm2118, %v2109, %v2111
      %v2123 = vsel %vm2118, %v2111, %v2113
      %v2124 = vsel %vm2118, %v2113, %v2115
      %v2125 = vsel %vm2118, %v2115, %v2117
      %v2135 = vsel %vm2118, %v2117, %v2103
      %vm2136 = vmand %vm1925, %vm584
      %vm2137 = vmand %vm2136, %vm586
      %v2138 = vsel %vm2137, 1, 0
      %v2139 = vlaneseq
      %v2140 = vshrl.u32 %v2139, 7
      %v2141 = vsub.s32 0, %v2140
      %v2142 = vrot.slane %v2138, %v2141
      %v2143 = vlaneseq
      %v2144 = vshrl.u32 %v2143, 7
      %v2145 = vsub.s32 1, %v2144
      %v2146 = vrot.slane %v2138, %v2145
      %v2147 = vlaneseq
      %v2148 = vshrl.u32 %v2147, 7
      %v2149 = vsub.s32 2, %v2148
      %v2150 = vrot.slane %v2138, %v2149
      %v2151 = vlaneseq
      %v2152 = vshrl.u32 %v2151, 7
      %v2153 = vsub.s32 3, %v2152
      %v2154 = vrot.slane %v2138, %v2153
      %v2155 = vlaneseq
      %v2156 = vshrl.u32 %v2155, 7
      %v2157 = vsub.s32 4, %v2156
      %v2158 = vrot.slane %v2138, %v2157
      %v2159 = vlaneseq
      %v2160 = vshrl.u32 %v2159, 7
      %v2161 = vsub.s32 5, %v2160
      %v2162 = vrot.slane %v2138, %v2161
      %v2163 = vlaneseq
      %v2164 = vshrl.u32 %v2163, 7
      %v2165 = vsub.s32 6, %v2164
      %v2166 = vrot.slane %v2138, %v2165
      %v2167 = vlaneseq
      %v2168 = vshrl.u32 %v2167, 7
      %v2169 = vsub.s32 7, %v2168
      %v2170 = vrot.slane %v2138, %v2169
      %vm2171 = vcmp.eq.s32.totalorder %v2142, 1
      %vm2172 = vcmp.eq.s32.totalorder %v2146, 1
      %vm2173 = vcmp.eq.s32.totalorder %v2150, 1
      %vm2174 = vcmp.eq.s32.totalorder %v2154, 1
      %vm2175 = vcmp.eq.s32.totalorder %v2158, 1
      %vm2176 = vcmp.eq.s32.totalorder %v2162, 1
      %vm2177 = vcmp.eq.s32.totalorder %v2166, 1
      %vm2178 = vcmp.eq.s32.totalorder %v2170, 1
      %v2179 = vsel %vm2171, %v2119, 0.0
      %v2180 = vsel %vm2172, %v2120, 0.0
      %v2181 = vsel %vm2173, %v2121, 0.0
      %v2182 = vsel %vm2174, %v2122, 0.0
      %v2183 = vsel %vm2175, %v2123, 0.0
      %v2184 = vsel %vm2176, %v2124, 0.0
      %v2185 = vsel %vm2177, %v2125, 0.0
      %v2186 = vsel %vm2178, %v2135, 0.0
      %v2195 = vrot.slane %v2179, 4
      %v2196 = vrot.slane %v2180, 4
      %v2197 = vrot.slane %v2181, 4
      %v2198 = vrot.slane %v2182, 4
      %v2199 = vrot.slane %v2183, 4
      %v2200 = vrot.slane %v2184, 4
      %v2201 = vrot.slane %v2185, 4
      %v2202 = vrot.slane %v2186, 4
      %2211 = vst [vmem:[#allocation2 + $0x200] sm:$0xf0] %v2195
      %2212 = vst [vmem:[#allocation2 + $0x208] sm:$0xf0] %v2196
      %2213 = vst [vmem:[#allocation2 + $0x210] sm:$0xf0] %v2197
      %2214 = vst [vmem:[#allocation2 + $0x218] sm:$0xf0] %v2198
      %2215 = vst [vmem:[#allocation2 + $0x220] sm:$0xf0] %v2199
      %2216 = vst [vmem:[#allocation2 + $0x228] sm:$0xf0] %v2200
      %2217 = vst [vmem:[#allocation2 + $0x230] sm:$0xf0] %v2201
      %2218 = vst [vmem:[#allocation2 + $0x238] sm:$0xf0] %v2202
      %2219 = vrot.lane.b32.xlu0 %v306, 111
      %v2220 = vpop.permute.xlu0 %2219
      %2221 = vrot.lane.b32.xlu0 %v330, 111
      %v2222 = vpop.permute.xlu0 %2221
      %2223 = vrot.lane.b32.xlu0 %v307, 111
      %v2224 = vpop.permute.xlu0 %2223
      %2225 = vrot.lane.b32.xlu0 %v331, 111
      %v2226 = vpop.permute.xlu0 %2225
      %2227 = vrot.lane.b32.xlu0 %v308, 111
      %v2228 = vpop.permute.xlu0 %2227
      %2229 = vrot.lane.b32.xlu0 %v332, 111
      %v2230 = vpop.permute.xlu0 %2229
      %2231 = vrot.lane.b32.xlu0 %v309, 111
      %v2232 = vpop.permute.xlu0 %2231
      %2233 = vrot.lane.b32.xlu0 %v323, 111
      %v2234 = vpop.permute.xlu0 %2233
      %vm2235 = vcmask 908288
      %v2236 = vsel %vm2235, %v2220, %v2222
      %v2237 = vsel %vm2235, %v2222, %v2224
      %v2238 = vsel %vm2235, %v2224, %v2226
      %v2239 = vsel %vm2235, %v2226, %v2228
      %v2240 = vsel %vm2235, %v2228, %v2230
      %v2241 = vsel %vm2235, %v2230, %v2232
      %v2242 = vsel %vm2235, %v2232, %v2234
      %v2252 = vsel %vm2235, %v2234, %v2220
      %vm2253 = vmand %vm1925, %vm680
      %vm2254 = vmand %vm2253, %vm682
      %v2255 = vsel %vm2254, 1, 0
      %v2256 = vlaneseq
      %v2257 = vshrl.u32 %v2256, 7
      %v2258 = vsub.s32 0, %v2257
      %v2259 = vrot.slane %v2255, %v2258
      %v2260 = vlaneseq
      %v2261 = vshrl.u32 %v2260, 7
      %v2262 = vsub.s32 1, %v2261
      %v2263 = vrot.slane %v2255, %v2262
      %v2264 = vlaneseq
      %v2265 = vshrl.u32 %v2264, 7
      %v2266 = vsub.s32 2, %v2265
      %v2267 = vrot.slane %v2255, %v2266
      %v2268 = vlaneseq
      %v2269 = vshrl.u32 %v2268, 7
      %v2270 = vsub.s32 3, %v2269
      %v2271 = vrot.slane %v2255, %v2270
      %v2272 = vlaneseq
      %v2273 = vshrl.u32 %v2272, 7
      %v2274 = vsub.s32 4, %v2273
      %v2275 = vrot.slane %v2255, %v2274
      %v2276 = vlaneseq
      %v2277 = vshrl.u32 %v2276, 7
      %v2278 = vsub.s32 5, %v2277
      %v2279 = vrot.slane %v2255, %v2278
      %v2280 = vlaneseq
      %v2281 = vshrl.u32 %v2280, 7
      %v2282 = vsub.s32 6, %v2281
      %v2283 = vrot.slane %v2255, %v2282
      %v2284 = vlaneseq
      %v2285 = vshrl.u32 %v2284, 7
      %v2286 = vsub.s32 7, %v2285
      %v2287 = vrot.slane %v2255, %v2286
      %vm2288 = vcmp.eq.s32.totalorder %v2259, 1
      %vm2289 = vcmp.eq.s32.totalorder %v2263, 1
      %vm2290 = vcmp.eq.s32.totalorder %v2267, 1
      %vm2291 = vcmp.eq.s32.totalorder %v2271, 1
      %vm2292 = vcmp.eq.s32.totalorder %v2275, 1
      %vm2293 = vcmp.eq.s32.totalorder %v2279, 1
      %vm2294 = vcmp.eq.s32.totalorder %v2283, 1
      %vm2295 = vcmp.eq.s32.totalorder %v2287, 1
      %v2296 = vsel %vm2288, %v2236, 0.0
      %v2297 = vsel %vm2289, %v2237, 0.0
      %v2298 = vsel %vm2290, %v2238, 0.0
      %v2299 = vsel %vm2291, %v2239, 0.0
      %v2300 = vsel %vm2292, %v2240, 0.0
      %v2301 = vsel %vm2293, %v2241, 0.0
      %v2302 = vsel %vm2294, %v2242, 0.0
      %v2303 = vsel %vm2295, %v2252, 0.0
      %2304 = vst [vmem:[#allocation2 + $0x240] sm:$0xf] %v2296
      %2305 = vst [vmem:[#allocation2 + $0x248] sm:$0xf] %v2297
      %2306 = vst [vmem:[#allocation2 + $0x250] sm:$0xf] %v2298
      %2307 = vst [vmem:[#allocation2 + $0x258] sm:$0xf] %v2299
      %2308 = vst [vmem:[#allocation2 + $0x260] sm:$0xf] %v2300
      %2309 = vst [vmem:[#allocation2 + $0x268] sm:$0xf] %v2301
      %2310 = vst [vmem:[#allocation2 + $0x270] sm:$0xf] %v2302
      %2311 = vst [vmem:[#allocation2 + $0x278] sm:$0xf] %v2303
      %2312 = vrot.lane.b32.xlu0 %v306, 110
      %v2313 = vpop.permute.xlu0 %2312
      %2314 = vrot.lane.b32.xlu0 %v330, 110
      %v2315 = vpop.permute.xlu0 %2314
      %2316 = vrot.lane.b32.xlu0 %v307, 110
      %v2317 = vpop.permute.xlu0 %2316
      %2318 = vrot.lane.b32.xlu0 %v331, 110
      %v2319 = vpop.permute.xlu0 %2318
      %2320 = vrot.lane.b32.xlu0 %v308, 110
      %v2321 = vpop.permute.xlu0 %2320
      %2322 = vrot.lane.b32.xlu0 %v332, 110
      %v2323 = vpop.permute.xlu0 %2322
      %2324 = vrot.lane.b32.xlu0 %v309, 110
      %v2325 = vpop.permute.xlu0 %2324
      %2326 = vrot.lane.b32.xlu0 %v323, 110
      %v2327 = vpop.permute.xlu0 %2326
      %vm2328 = vcmask 900096
      %v2329 = vsel %vm2328, %v2313, %v2315
      %v2330 = vsel %vm2328, %v2315, %v2317
      %v2331 = vsel %vm2328, %v2317, %v2319
      %v2332 = vsel %vm2328, %v2319, %v2321
      %v2333 = vsel %vm2328, %v2321, %v2323
      %v2334 = vsel %vm2328, %v2323, %v2325
      %v2335 = vsel %vm2328, %v2325, %v2327
      %v2345 = vsel %vm2328, %v2327, %v2313
      %vm2346 = vmand %vm1925, %vm800
      %vm2347 = vmand %vm2346, %vm802
      %v2348 = vsel %vm2347, 1, 0
      %v2349 = vlaneseq
      %v2350 = vshrl.u32 %v2349, 7
      %v2351 = vsub.s32 0, %v2350
      %v2352 = vrot.slane %v2348, %v2351
      %v2353 = vlaneseq
      %v2354 = vshrl.u32 %v2353, 7
      %v2355 = vsub.s32 1, %v2354
      %v2356 = vrot.slane %v2348, %v2355
      %v2357 = vlaneseq
      %v2358 = vshrl.u32 %v2357, 7
      %v2359 = vsub.s32 2, %v2358
      %v2360 = vrot.slane %v2348, %v2359
      %v2361 = vlaneseq
      %v2362 = vshrl.u32 %v2361, 7
      %v2363 = vsub.s32 3, %v2362
      %v2364 = vrot.slane %v2348, %v2363
      %v2365 = vlaneseq
      %v2366 = vshrl.u32 %v2365, 7
      %v2367 = vsub.s32 4, %v2366
      %v2368 = vrot.slane %v2348, %v2367
      %v2369 = vlaneseq
      %v2370 = vshrl.u32 %v2369, 7
      %v2371 = vsub.s32 5, %v2370
      %v2372 = vrot.slane %v2348, %v2371
      %v2373 = vlaneseq
      %v2374 = vshrl.u32 %v2373, 7
      %v2375 = vsub.s32 6, %v2374
      %v2376 = vrot.slane %v2348, %v2375
      %v2377 = vlaneseq
      %v2378 = vshrl.u32 %v2377, 7
      %v2379 = vsub.s32 7, %v2378
      %v2380 = vrot.slane %v2348, %v2379
      %vm2381 = vcmp.eq.s32.totalorder %v2352, 1
      %vm2382 = vcmp.eq.s32.totalorder %v2356, 1
      %vm2383 = vcmp.eq.s32.totalorder %v2360, 1
      %vm2384 = vcmp.eq.s32.totalorder %v2364, 1
      %vm2385 = vcmp.eq.s32.totalorder %v2368, 1
      %vm2386 = vcmp.eq.s32.totalorder %v2372, 1
      %vm2387 = vcmp.eq.s32.totalorder %v2376, 1
      %vm2388 = vcmp.eq.s32.totalorder %v2380, 1
      %v2389 = vsel %vm2381, %v2329, 0.0
      %v2390 = vsel %vm2382, %v2330, 0.0
      %v2391 = vsel %vm2383, %v2331, 0.0
      %v2392 = vsel %vm2384, %v2332, 0.0
      %v2393 = vsel %vm2385, %v2333, 0.0
      %v2394 = vsel %vm2386, %v2334, 0.0
      %v2395 = vsel %vm2387, %v2335, 0.0
      %v2396 = vsel %vm2388, %v2345, 0.0
      %v2405 = vrot.slane %v2389, 4
      %v2406 = vrot.slane %v2390, 4
      %v2407 = vrot.slane %v2391, 4
      %v2408 = vrot.slane %v2392, 4
      %v2409 = vrot.slane %v2393, 4
      %v2410 = vrot.slane %v2394, 4
      %v2411 = vrot.slane %v2395, 4
      %v2412 = vrot.slane %v2396, 4
      %2421 = vst [vmem:[#allocation2 + $0x240] sm:$0xf0] %v2405
      %2422 = vst [vmem:[#allocation2 + $0x248] sm:$0xf0] %v2406
      %2423 = vst [vmem:[#allocation2 + $0x250] sm:$0xf0] %v2407
      %2424 = vst [vmem:[#allocation2 + $0x258] sm:$0xf0] %v2408
      %2425 = vst [vmem:[#allocation2 + $0x260] sm:$0xf0] %v2409
      %2426 = vst [vmem:[#allocation2 + $0x268] sm:$0xf0] %v2410
      %2427 = vst [vmem:[#allocation2 + $0x270] sm:$0xf0] %v2411
      %2428 = vst [vmem:[#allocation2 + $0x278] sm:$0xf0] %v2412
      %2429 = vrot.lane.b32.xlu0 %v306, 98
      %v2430 = vpop.permute.xlu0 %2429
      %2431 = vrot.lane.b32.xlu0 %v330, 98
      %v2432 = vpop.permute.xlu0 %2431
      %2433 = vrot.lane.b32.xlu0 %v307, 98
      %v2434 = vpop.permute.xlu0 %2433
      %2435 = vrot.lane.b32.xlu0 %v331, 98
      %v2436 = vpop.permute.xlu0 %2435
      %2437 = vrot.lane.b32.xlu0 %v308, 98
      %v2438 = vpop.permute.xlu0 %2437
      %2439 = vrot.lane.b32.xlu0 %v332, 98
      %v2440 = vpop.permute.xlu0 %2439
      %2441 = vrot.lane.b32.xlu0 %v309, 98
      %v2442 = vpop.permute.xlu0 %2441
      %2443 = vrot.lane.b32.xlu0 %v323, 98
      %v2444 = vpop.permute.xlu0 %2443
      %vm2445 = vcmask 801792
      %v2446 = vsel %vm2445, %v2430, %v2432
      %v2447 = vsel %vm2445, %v2432, %v2434
      %v2448 = vsel %vm2445, %v2434, %v2436
      %v2449 = vsel %vm2445, %v2436, %v2438
      %v2450 = vsel %vm2445, %v2438, %v2440
      %v2451 = vsel %vm2445, %v2440, %v2442
      %v2452 = vsel %vm2445, %v2442, %v2444
      %v2462 = vsel %vm2445, %v2444, %v2430
      %v2463 = vadd.s32 %v310, 2
      %vm2464 = vcmp.ge.s32.totalorder %v2463, 0
      %vm2465 = vcmp.lt.s32.totalorder %v2463, 16
      %vm2466 = vmand %vm2464, %vm2465
      %vm2467 = vmand %vm2466, %vm369
      %vm2468 = vmand %vm2467, %vm371
      %v2469 = vsel %vm2468, 1, 0
      %v2470 = vlaneseq
      %v2471 = vshrl.u32 %v2470, 7
      %v2472 = vsub.s32 0, %v2471
      %v2473 = vrot.slane %v2469, %v2472
      %v2474 = vlaneseq
      %v2475 = vshrl.u32 %v2474, 7
      %v2476 = vsub.s32 1, %v2475
      %v2477 = vrot.slane %v2469, %v2476
      %v2478 = vlaneseq
      %v2479 = vshrl.u32 %v2478, 7
      %v2480 = vsub.s32 2, %v2479
      %v2481 = vrot.slane %v2469, %v2480
      %v2482 = vlaneseq
      %v2483 = vshrl.u32 %v2482, 7
      %v2484 = vsub.s32 3, %v2483
      %v2485 = vrot.slane %v2469, %v2484
      %v2486 = vlaneseq
      %v2487 = vshrl.u32 %v2486, 7
      %v2488 = vsub.s32 4, %v2487
      %v2489 = vrot.slane %v2469, %v2488
      %v2490 = vlaneseq
      %v2491 = vshrl.u32 %v2490, 7
      %v2492 = vsub.s32 5, %v2491
      %v2493 = vrot.slane %v2469, %v2492
      %v2494 = vlaneseq
      %v2495 = vshrl.u32 %v2494, 7
      %v2496 = vsub.s32 6, %v2495
      %v2497 = vrot.slane %v2469, %v2496
      %v2498 = vlaneseq
      %v2499 = vshrl.u32 %v2498, 7
      %v2500 = vsub.s32 7, %v2499
      %v2501 = vrot.slane %v2469, %v2500
      %vm2502 = vcmp.eq.s32.totalorder %v2473, 1
      %vm2503 = vcmp.eq.s32.totalorder %v2477, 1
      %vm2504 = vcmp.eq.s32.totalorder %v2481, 1
      %vm2505 = vcmp.eq.s32.totalorder %v2485, 1
      %vm2506 = vcmp.eq.s32.totalorder %v2489, 1
      %vm2507 = vcmp.eq.s32.totalorder %v2493, 1
      %vm2508 = vcmp.eq.s32.totalorder %v2497, 1
      %vm2509 = vcmp.eq.s32.totalorder %v2501, 1
      %v2510 = vsel %vm2502, %v2446, 0.0
      %v2511 = vsel %vm2503, %v2447, 0.0
      %v2512 = vsel %vm2504, %v2448, 0.0
      %v2513 = vsel %vm2505, %v2449, 0.0
      %v2514 = vsel %vm2506, %v2450, 0.0
      %v2515 = vsel %vm2507, %v2451, 0.0
      %v2516 = vsel %vm2508, %v2452, 0.0
      %v2517 = vsel %vm2509, %v2462, 0.0
      %2518 = vst [vmem:[#allocation2 + $0x280] sm:$0xf] %v2510
      %2519 = vst [vmem:[#allocation2 + $0x288] sm:$0xf] %v2511
      %2520 = vst [vmem:[#allocation2 + $0x290] sm:$0xf] %v2512
      %2521 = vst [vmem:[#allocation2 + $0x298] sm:$0xf] %v2513
      %2522 = vst [vmem:[#allocation2 + $0x2a0] sm:$0xf] %v2514
      %2523 = vst [vmem:[#allocation2 + $0x2a8] sm:$0xf] %v2515
      %2524 = vst [vmem:[#allocation2 + $0x2b0] sm:$0xf] %v2516
      %2525 = vst [vmem:[#allocation2 + $0x2b8] sm:$0xf] %v2517
      %2526 = vrot.lane.b32.xlu0 %v306, 97
      %v2527 = vpop.permute.xlu0 %2526
      %2528 = vrot.lane.b32.xlu0 %v330, 97
      %v2529 = vpop.permute.xlu0 %2528
      %2530 = vrot.lane.b32.xlu0 %v307, 97
      %v2531 = vpop.permute.xlu0 %2530
      %2532 = vrot.lane.b32.xlu0 %v331, 97
      %v2533 = vpop.permute.xlu0 %2532
      %2534 = vrot.lane.b32.xlu0 %v308, 97
      %v2535 = vpop.permute.xlu0 %2534
      %2536 = vrot.lane.b32.xlu0 %v332, 97
      %v2537 = vpop.permute.xlu0 %2536
      %2538 = vrot.lane.b32.xlu0 %v309, 97
      %v2539 = vpop.permute.xlu0 %2538
      %2540 = vrot.lane.b32.xlu0 %v323, 97
      %v2541 = vpop.permute.xlu0 %2540
      %vm2542 = vcmask 793600
      %v2543 = vsel %vm2542, %v2527, %v2529
      %v2544 = vsel %vm2542, %v2529, %v2531
      %v2545 = vsel %vm2542, %v2531, %v2533
      %v2546 = vsel %vm2542, %v2533, %v2535
      %v2547 = vsel %vm2542, %v2535, %v2537
      %v2548 = vsel %vm2542, %v2537, %v2539
      %v2549 = vsel %vm2542, %v2539, %v2541
      %v2559 = vsel %vm2542, %v2541, %v2527
      %vm2560 = vmand %vm2466, %vm465
      %vm2561 = vmand %vm2560, %vm467
      %v2562 = vsel %vm2561, 1, 0
      %v2563 = vlaneseq
      %v2564 = vshrl.u32 %v2563, 7
      %v2565 = vsub.s32 0, %v2564
      %v2566 = vrot.slane %v2562, %v2565
      %v2567 = vlaneseq
      %v2568 = vshrl.u32 %v2567, 7
      %v2569 = vsub.s32 1, %v2568
      %v2570 = vrot.slane %v2562, %v2569
      %v2571 = vlaneseq
      %v2572 = vshrl.u32 %v2571, 7
      %v2573 = vsub.s32 2, %v2572
      %v2574 = vrot.slane %v2562, %v2573
      %v2575 = vlaneseq
      %v2576 = vshrl.u32 %v2575, 7
      %v2577 = vsub.s32 3, %v2576
      %v2578 = vrot.slane %v2562, %v2577
      %v2579 = vlaneseq
      %v2580 = vshrl.u32 %v2579, 7
      %v2581 = vsub.s32 4, %v2580
      %v2582 = vrot.slane %v2562, %v2581
      %v2583 = vlaneseq
      %v2584 = vshrl.u32 %v2583, 7
      %v2585 = vsub.s32 5, %v2584
      %v2586 = vrot.slane %v2562, %v2585
      %v2587 = vlaneseq
      %v2588 = vshrl.u32 %v2587, 7
      %v2589 = vsub.s32 6, %v2588
      %v2590 = vrot.slane %v2562, %v2589
      %v2591 = vlaneseq
      %v2592 = vshrl.u32 %v2591, 7
      %v2593 = vsub.s32 7, %v2592
      %v2594 = vrot.slane %v2562, %v2593
      %vm2595 = vcmp.eq.s32.totalorder %v2566, 1
      %vm2596 = vcmp.eq.s32.totalorder %v2570, 1
      %vm2597 = vcmp.eq.s32.totalorder %v2574, 1
      %vm2598 = vcmp.eq.s32.totalorder %v2578, 1
      %vm2599 = vcmp.eq.s32.totalorder %v2582, 1
      %vm2600 = vcmp.eq.s32.totalorder %v2586, 1
      %vm2601 = vcmp.eq.s32.totalorder %v2590, 1
      %vm2602 = vcmp.eq.s32.totalorder %v2594, 1
      %v2603 = vsel %vm2595, %v2543, 0.0
      %v2604 = vsel %vm2596, %v2544, 0.0
      %v2605 = vsel %vm2597, %v2545, 0.0
      %v2606 = vsel %vm2598, %v2546, 0.0
      %v2607 = vsel %vm2599, %v2547, 0.0
      %v2608 = vsel %vm2600, %v2548, 0.0
      %v2609 = vsel %vm2601, %v2549, 0.0
      %v2610 = vsel %vm2602, %v2559, 0.0
      %v2619 = vrot.slane %v2603, 4
      %v2620 = vrot.slane %v2604, 4
      %v2621 = vrot.slane %v2605, 4
      %v2622 = vrot.slane %v2606, 4
      %v2623 = vrot.slane %v2607, 4
      %v2624 = vrot.slane %v2608, 4
      %v2625 = vrot.slane %v2609, 4
      %v2626 = vrot.slane %v2610, 4
      %2635 = vst [vmem:[#allocation2 + $0x280] sm:$0xf0] %v2619
      %2636 = vst [vmem:[#allocation2 + $0x288] sm:$0xf0] %v2620
      %2637 = vst [vmem:[#allocation2 + $0x290] sm:$0xf0] %v2621
      %2638 = vst [vmem:[#allocation2 + $0x298] sm:$0xf0] %v2622
      %2639 = vst [vmem:[#allocation2 + $0x2a0] sm:$0xf0] %v2623
      %2640 = vst [vmem:[#allocation2 + $0x2a8] sm:$0xf0] %v2624
      %2641 = vst [vmem:[#allocation2 + $0x2b0] sm:$0xf0] %v2625
      %2642 = vst [vmem:[#allocation2 + $0x2b8] sm:$0xf0] %v2626
      %2643 = vrot.lane.b32.xlu0 %v306, 96
      %v2644 = vpop.permute.xlu0 %2643
      %2645 = vrot.lane.b32.xlu0 %v330, 96
      %v2646 = vpop.permute.xlu0 %2645
      %2647 = vrot.lane.b32.xlu0 %v307, 96
      %v2648 = vpop.permute.xlu0 %2647
      %2649 = vrot.lane.b32.xlu0 %v331, 96
      %v2650 = vpop.permute.xlu0 %2649
      %2651 = vrot.lane.b32.xlu0 %v308, 96
      %v2652 = vpop.permute.xlu0 %2651
      %2653 = vrot.lane.b32.xlu0 %v332, 96
      %v2654 = vpop.permute.xlu0 %2653
      %2655 = vrot.lane.b32.xlu0 %v309, 96
      %v2656 = vpop.permute.xlu0 %2655
      %2657 = vrot.lane.b32.xlu0 %v323, 96
      %v2658 = vpop.permute.xlu0 %2657
      %vm2659 = vcmask 785408
      %v2660 = vsel %vm2659, %v2644, %v2646
      %v2661 = vsel %vm2659, %v2646, %v2648
      %v2662 = vsel %vm2659, %v2648, %v2650
      %v2663 = vsel %vm2659, %v2650, %v2652
      %v2664 = vsel %vm2659, %v2652, %v2654
      %v2665 = vsel %vm2659, %v2654, %v2656
      %v2666 = vsel %vm2659, %v2656, %v2658
      %v2676 = vsel %vm2659, %v2658, %v2644
      %vm2677 = vmand %vm2466, %vm584
      %vm2678 = vmand %vm2677, %vm586
      %v2679 = vsel %vm2678, 1, 0
      %v2680 = vlaneseq
      %v2681 = vshrl.u32 %v2680, 7
      %v2682 = vsub.s32 0, %v2681
      %v2683 = vrot.slane %v2679, %v2682
      %v2684 = vlaneseq
      %v2685 = vshrl.u32 %v2684, 7
      %v2686 = vsub.s32 1, %v2685
      %v2687 = vrot.slane %v2679, %v2686
      %v2688 = vlaneseq
      %v2689 = vshrl.u32 %v2688, 7
      %v2690 = vsub.s32 2, %v2689
      %v2691 = vrot.slane %v2679, %v2690
      %v2692 = vlaneseq
      %v2693 = vshrl.u32 %v2692, 7
      %v2694 = vsub.s32 3, %v2693
      %v2695 = vrot.slane %v2679, %v2694
      %v2696 = vlaneseq
      %v2697 = vshrl.u32 %v2696, 7
      %v2698 = vsub.s32 4, %v2697
      %v2699 = vrot.slane %v2679, %v2698
      %v2700 = vlaneseq
      %v2701 = vshrl.u32 %v2700, 7
      %v2702 = vsub.s32 5, %v2701
      %v2703 = vrot.slane %v2679, %v2702
      %v2704 = vlaneseq
      %v2705 = vshrl.u32 %v2704, 7
      %v2706 = vsub.s32 6, %v2705
      %v2707 = vrot.slane %v2679, %v2706
      %v2708 = vlaneseq
      %v2709 = vshrl.u32 %v2708, 7
      %v2710 = vsub.s32 7, %v2709
      %v2711 = vrot.slane %v2679, %v2710
      %vm2712 = vcmp.eq.s32.totalorder %v2683, 1
      %vm2713 = vcmp.eq.s32.totalorder %v2687, 1
      %vm2714 = vcmp.eq.s32.totalorder %v2691, 1
      %vm2715 = vcmp.eq.s32.totalorder %v2695, 1
      %vm2716 = vcmp.eq.s32.totalorder %v2699, 1
      %vm2717 = vcmp.eq.s32.totalorder %v2703, 1
      %vm2718 = vcmp.eq.s32.totalorder %v2707, 1
      %vm2719 = vcmp.eq.s32.totalorder %v2711, 1
      %v2720 = vsel %vm2712, %v2660, 0.0
      %v2721 = vsel %vm2713, %v2661, 0.0
      %v2722 = vsel %vm2714, %v2662, 0.0
      %v2723 = vsel %vm2715, %v2663, 0.0
      %v2724 = vsel %vm2716, %v2664, 0.0
      %v2725 = vsel %vm2717, %v2665, 0.0
      %v2726 = vsel %vm2718, %v2666, 0.0
      %v2727 = vsel %vm2719, %v2676, 0.0
      %2728 = vst [vmem:[#allocation2 + $0x2c0] sm:$0xf] %v2720
      %2729 = vst [vmem:[#allocation2 + $0x2c8] sm:$0xf] %v2721
      %2730 = vst [vmem:[#allocation2 + $0x2d0] sm:$0xf] %v2722
      %2731 = vst [vmem:[#allocation2 + $0x2d8] sm:$0xf] %v2723
      %2732 = vst [vmem:[#allocation2 + $0x2e0] sm:$0xf] %v2724
      %2733 = vst [vmem:[#allocation2 + $0x2e8] sm:$0xf] %v2725
      %2734 = vst [vmem:[#allocation2 + $0x2f0] sm:$0xf] %v2726
      %2735 = vst [vmem:[#allocation2 + $0x2f8] sm:$0xf] %v2727
      %2736 = vrot.lane.b32.xlu0 %v306, 95
      %v2737 = vpop.permute.xlu0 %2736
      %2738 = vrot.lane.b32.xlu0 %v330, 95
      %v2739 = vpop.permute.xlu0 %2738
      %2740 = vrot.lane.b32.xlu0 %v307, 95
      %v2741 = vpop.permute.xlu0 %2740
      %2742 = vrot.lane.b32.xlu0 %v331, 95
      %v2743 = vpop.permute.xlu0 %2742
      %2744 = vrot.lane.b32.xlu0 %v308, 95
      %v2745 = vpop.permute.xlu0 %2744
      %2746 = vrot.lane.b32.xlu0 %v332, 95
      %v2747 = vpop.permute.xlu0 %2746
      %2748 = vrot.lane.b32.xlu0 %v309, 95
      %v2749 = vpop.permute.xlu0 %2748
      %2750 = vrot.lane.b32.xlu0 %v323, 95
      %v2751 = vpop.permute.xlu0 %2750
      %vm2752 = vcmask 777216
      %v2753 = vsel %vm2752, %v2737, %v2739
      %v2754 = vsel %vm2752, %v2739, %v2741
      %v2755 = vsel %vm2752, %v2741, %v2743
      %v2756 = vsel %vm2752, %v2743, %v2745
      %v2757 = vsel %vm2752, %v2745, %v2747
      %v2758 = vsel %vm2752, %v2747, %v2749
      %v2759 = vsel %vm2752, %v2749, %v2751
      %v2769 = vsel %vm2752, %v2751, %v2737
      %vm2770 = vmand %vm2466, %vm680
      %vm2771 = vmand %vm2770, %vm682
      %v2772 = vsel %vm2771, 1, 0
      %v2773 = vlaneseq
      %v2774 = vshrl.u32 %v2773, 7
      %v2775 = vsub.s32 0, %v2774
      %v2776 = vrot.slane %v2772, %v2775
      %v2777 = vlaneseq
      %v2778 = vshrl.u32 %v2777, 7
      %v2779 = vsub.s32 1, %v2778
      %v2780 = vrot.slane %v2772, %v2779
      %v2781 = vlaneseq
      %v2782 = vshrl.u32 %v2781, 7
      %v2783 = vsub.s32 2, %v2782
      %v2784 = vrot.slane %v2772, %v2783
      %v2785 = vlaneseq
      %v2786 = vshrl.u32 %v2785, 7
      %v2787 = vsub.s32 3, %v2786
      %v2788 = vrot.slane %v2772, %v2787
      %v2789 = vlaneseq
      %v2790 = vshrl.u32 %v2789, 7
      %v2791 = vsub.s32 4, %v2790
      %v2792 = vrot.slane %v2772, %v2791
      %v2793 = vlaneseq
      %v2794 = vshrl.u32 %v2793, 7
      %v2795 = vsub.s32 5, %v2794
      %v2796 = vrot.slane %v2772, %v2795
      %v2797 = vlaneseq
      %v2798 = vshrl.u32 %v2797, 7
      %v2799 = vsub.s32 6, %v2798
      %v2800 = vrot.slane %v2772, %v2799
      %v2801 = vlaneseq
      %v2802 = vshrl.u32 %v2801, 7
      %v2803 = vsub.s32 7, %v2802
      %v2804 = vrot.slane %v2772, %v2803
      %vm2805 = vcmp.eq.s32.totalorder %v2776, 1
      %vm2806 = vcmp.eq.s32.totalorder %v2780, 1
      %vm2807 = vcmp.eq.s32.totalorder %v2784, 1
      %vm2808 = vcmp.eq.s32.totalorder %v2788, 1
      %vm2809 = vcmp.eq.s32.totalorder %v2792, 1
      %vm2810 = vcmp.eq.s32.totalorder %v2796, 1
      %vm2811 = vcmp.eq.s32.totalorder %v2800, 1
      %vm2812 = vcmp.eq.s32.totalorder %v2804, 1
      %v2813 = vsel %vm2805, %v2753, 0.0
      %v2814 = vsel %vm2806, %v2754, 0.0
      %v2815 = vsel %vm2807, %v2755, 0.0
      %v2816 = vsel %vm2808, %v2756, 0.0
      %v2817 = vsel %vm2809, %v2757, 0.0
      %v2818 = vsel %vm2810, %v2758, 0.0
      %v2819 = vsel %vm2811, %v2759, 0.0
      %v2820 = vsel %vm2812, %v2769, 0.0
      %v2829 = vrot.slane %v2813, 4
      %v2830 = vrot.slane %v2814, 4
      %v2831 = vrot.slane %v2815, 4
      %v2832 = vrot.slane %v2816, 4
      %v2833 = vrot.slane %v2817, 4
      %v2834 = vrot.slane %v2818, 4
      %v2835 = vrot.slane %v2819, 4
      %v2836 = vrot.slane %v2820, 4
      %2845 = vst [vmem:[#allocation2 + $0x2c0] sm:$0xf0] %v2829
      %2846 = vst [vmem:[#allocation2 + $0x2c8] sm:$0xf0] %v2830
      %2847 = vst [vmem:[#allocation2 + $0x2d0] sm:$0xf0] %v2831
      %2848 = vst [vmem:[#allocation2 + $0x2d8] sm:$0xf0] %v2832
      %2849 = vst [vmem:[#allocation2 + $0x2e0] sm:$0xf0] %v2833
      %2850 = vst [vmem:[#allocation2 + $0x2e8] sm:$0xf0] %v2834
      %2851 = vst [vmem:[#allocation2 + $0x2f0] sm:$0xf0] %v2835
      %2852 = vst [vmem:[#allocation2 + $0x2f8] sm:$0xf0] %v2836
      %2853 = vrot.lane.b32.xlu0 %v306, 94
      %v2854 = vpop.permute.xlu0 %2853
      %2855 = vrot.lane.b32.xlu0 %v330, 94
      %v2856 = vpop.permute.xlu0 %2855
      %2857 = vrot.lane.b32.xlu0 %v307, 94
      %v2858 = vpop.permute.xlu0 %2857
      %2859 = vrot.lane.b32.xlu0 %v331, 94
      %v2860 = vpop.permute.xlu0 %2859
      %2861 = vrot.lane.b32.xlu0 %v308, 94
      %v2862 = vpop.permute.xlu0 %2861
      %2863 = vrot.lane.b32.xlu0 %v332, 94
      %v2864 = vpop.permute.xlu0 %2863
      %2865 = vrot.lane.b32.xlu0 %v309, 94
      %v2866 = vpop.permute.xlu0 %2865
      %2867 = vrot.lane.b32.xlu0 %v323, 94
      %v2868 = vpop.permute.xlu0 %2867
      %vm2869 = vcmask 769024
      %v2870 = vsel %vm2869, %v2854, %v2856
      %v2871 = vsel %vm2869, %v2856, %v2858
      %v2872 = vsel %vm2869, %v2858, %v2860
      %v2873 = vsel %vm2869, %v2860, %v2862
      %v2874 = vsel %vm2869, %v2862, %v2864
      %v2875 = vsel %vm2869, %v2864, %v2866
      %v2876 = vsel %vm2869, %v2866, %v2868
      %v2886 = vsel %vm2869, %v2868, %v2854
      %vm2887 = vmand %vm2466, %vm800
      %vm2888 = vmand %vm2887, %vm802
      %v2889 = vsel %vm2888, 1, 0
      %v2890 = vlaneseq
      %v2891 = vshrl.u32 %v2890, 7
      %v2892 = vsub.s32 0, %v2891
      %v2893 = vrot.slane %v2889, %v2892
      %v2894 = vlaneseq
      %v2895 = vshrl.u32 %v2894, 7
      %v2896 = vsub.s32 1, %v2895
      %v2897 = vrot.slane %v2889, %v2896
      %v2898 = vlaneseq
      %v2899 = vshrl.u32 %v2898, 7
      %v2900 = vsub.s32 2, %v2899
      %v2901 = vrot.slane %v2889, %v2900
      %v2902 = vlaneseq
      %v2903 = vshrl.u32 %v2902, 7
      %v2904 = vsub.s32 3, %v2903
      %v2905 = vrot.slane %v2889, %v2904
      %v2906 = vlaneseq
      %v2907 = vshrl.u32 %v2906, 7
      %v2908 = vsub.s32 4, %v2907
      %v2909 = vrot.slane %v2889, %v2908
      %v2910 = vlaneseq
      %v2911 = vshrl.u32 %v2910, 7
      %v2912 = vsub.s32 5, %v2911
      %v2913 = vrot.slane %v2889, %v2912
      %v2914 = vlaneseq
      %v2915 = vshrl.u32 %v2914, 7
      %v2916 = vsub.s32 6, %v2915
      %v2917 = vrot.slane %v2889, %v2916
      %v2918 = vlaneseq
      %v2919 = vshrl.u32 %v2918, 7
      %v2920 = vsub.s32 7, %v2919
      %v2921 = vrot.slane %v2889, %v2920
      %vm2922 = vcmp.eq.s32.totalorder %v2893, 1
      %vm2923 = vcmp.eq.s32.totalorder %v2897, 1
      %vm2924 = vcmp.eq.s32.totalorder %v2901, 1
      %vm2925 = vcmp.eq.s32.totalorder %v2905, 1
      %vm2926 = vcmp.eq.s32.totalorder %v2909, 1
      %vm2927 = vcmp.eq.s32.totalorder %v2913, 1
      %vm2928 = vcmp.eq.s32.totalorder %v2917, 1
      %vm2929 = vcmp.eq.s32.totalorder %v2921, 1
      %v2930 = vsel %vm2922, %v2870, 0.0
      %v2931 = vsel %vm2923, %v2871, 0.0
      %v2932 = vsel %vm2924, %v2872, 0.0
      %v2933 = vsel %vm2925, %v2873, 0.0
      %v2934 = vsel %vm2926, %v2874, 0.0
      %v2935 = vsel %vm2927, %v2875, 0.0
      %v2936 = vsel %vm2928, %v2876, 0.0
      %v2937 = vsel %vm2929, %v2886, 0.0
      %2938 = vst [vmem:[#allocation2 + $0x300] sm:$0xf] %v2930
      %2939 = vst [vmem:[#allocation2 + $0x308] sm:$0xf] %v2931
      %2940 = vst [vmem:[#allocation2 + $0x310] sm:$0xf] %v2932
      %2941 = vst [vmem:[#allocation2 + $0x318] sm:$0xf] %v2933
      %2942 = vst [vmem:[#allocation2 + $0x320] sm:$0xf] %v2934
      %2943 = vst [vmem:[#allocation2 + $0x328] sm:$0xf] %v2935
      %2944 = vst [vmem:[#allocation2 + $0x330] sm:$0xf] %v2936
      %2945 = vst [vmem:[#allocation2 + $0x338] sm:$0xf] %v2937
      %v2946 = vld [vmem:[%s2] sm:$0xff]
      %v2947 = vld [vmem:[%s2 + $0x8] sm:$0xff]
      %v2948 = vld [vmem:[#allocation2] sm:$0xff]
      %v2949 = vld [vmem:[#allocation2 + $0x8] sm:$0xff]
      %v2950 = vld [vmem:[#allocation2 + $0x10] sm:$0xff]
      %v2951 = vld [vmem:[#allocation2 + $0x18] sm:$0xff]
      %v2952 = vld [vmem:[#allocation2 + $0x20] sm:$0xff]
      %v2953 = vld [vmem:[#allocation2 + $0x28] sm:$0xff]
      %v2954 = vld [vmem:[#allocation2 + $0x30] sm:$0xff]
      %v2955 = vld [vmem:[#allocation2 + $0x38] sm:$0xff]
      %v2956 = vld [vmem:[#allocation2 + $0x40] sm:$0xff]
      %v2957 = vld [vmem:[#allocation2 + $0x48] sm:$0xff]
      %v2958 = vld [vmem:[#allocation2 + $0x50] sm:$0xff]
      %v2959 = vld [vmem:[#allocation2 + $0x58] sm:$0xff]
      %v2960 = vld [vmem:[#allocation2 + $0x60] sm:$0xff]
      %v2961 = vld [vmem:[#allocation2 + $0x68] sm:$0xff]
      %v2962 = vld [vmem:[#allocation2 + $0x70] sm:$0xff]
      %v2963 = vld [vmem:[#allocation2 + $0x78] sm:$0xff]
      %v2964 = vld [vmem:[#allocation2 + $0x80] sm:$0xff]
      %v2965 = vld [vmem:[#allocation2 + $0x88] sm:$0xff]
      %v2966 = vld [vmem:[#allocation2 + $0x90] sm:$0xff]
      %v2967 = vld [vmem:[#allocation2 + $0x98] sm:$0xff]
      %v2968 = vld [vmem:[#allocation2 + $0xa0] sm:$0xff]
      %v2969 = vld [vmem:[#allocation2 + $0xa8] sm:$0xff]
      %v2970 = vld [vmem:[#allocation2 + $0xb0] sm:$0xff]
      %v2971 = vld [vmem:[#allocation2 + $0xb8] sm:$0xff]
      %v2972 = vld [vmem:[#allocation2 + $0xc0] sm:$0xff]
      %v2973 = vld [vmem:[#allocation2 + $0xc8] sm:$0xff]
      %v2974 = vld [vmem:[#allocation2 + $0xd0] sm:$0xff]
      %v2975 = vld [vmem:[#allocation2 + $0xd8] sm:$0xff]
      %v2976 = vld [vmem:[#allocation2 + $0xe0] sm:$0xff]
      %v2977 = vld [vmem:[#allocation2 + $0xe8] sm:$0xff]
      %v2978 = vld [vmem:[#allocation2 + $0xf0] sm:$0xff]
      %v2979 = vld [vmem:[#allocation2 + $0xf8] sm:$0xff]
      %v2980 = vld [vmem:[#allocation2 + $0x100] sm:$0xff]
      %v2981 = vld [vmem:[#allocation2 + $0x108] sm:$0xff]
      %v2982 = vld [vmem:[#allocation2 + $0x110] sm:$0xff]
      %v2983 = vld [vmem:[#allocation2 + $0x118] sm:$0xff]
      %v2984 = vld [vmem:[#allocation2 + $0x120] sm:$0xff]
      %v2985 = vld [vmem:[#allocation2 + $0x128] sm:$0xff]
      %v2986 = vld [vmem:[#allocation2 + $0x130] sm:$0xff]
      %v2987 = vld [vmem:[#allocation2 + $0x138] sm:$0xff]
      %v2988 = vld [vmem:[#allocation2 + $0x140] sm:$0xff]
      %v2989 = vld [vmem:[#allocation2 + $0x148] sm:$0xff]
      %v2990 = vld [vmem:[#allocation2 + $0x150] sm:$0xff]
      %v2991 = vld [vmem:[#allocation2 + $0x158] sm:$0xff]
      %v2992 = vld [vmem:[#allocation2 + $0x160] sm:$0xff]
      %v2993 = vld [vmem:[#allocation2 + $0x168] sm:$0xff]
      %v2994 = vld [vmem:[#allocation2 + $0x170] sm:$0xff]
      %v2995 = vld [vmem:[#allocation2 + $0x178] sm:$0xff]
      %v2996 = vld [vmem:[#allocation2 + $0x180] sm:$0xff]
      %v2997 = vld [vmem:[#allocation2 + $0x188] sm:$0xff]
      %v2998 = vld [vmem:[#allocation2 + $0x190] sm:$0xff]
      %v2999 = vld [vmem:[#allocation2 + $0x198] sm:$0xff]
      %v3000 = vld [vmem:[#allocation2 + $0x1a0] sm:$0xff]
      %v3001 = vld [vmem:[#allocation2 + $0x1a8] sm:$0xff]
      %v3002 = vld [vmem:[#allocation2 + $0x1b0] sm:$0xff]
      %v3003 = vld [vmem:[#allocation2 + $0x1b8] sm:$0xff]
      %v3004 = vld [vmem:[#allocation2 + $0x1c0] sm:$0xff]
      %v3005 = vld [vmem:[#allocation2 + $0x1c8] sm:$0xff]
      %v3006 = vld [vmem:[#allocation2 + $0x1d0] sm:$0xff]
      %v3007 = vld [vmem:[#allocation2 + $0x1d8] sm:$0xff]
      %v3008 = vld [vmem:[#allocation2 + $0x1e0] sm:$0xff]
      %v3009 = vld [vmem:[#allocation2 + $0x1e8] sm:$0xff]
      %v3010 = vld [vmem:[#allocation2 + $0x1f0] sm:$0xff]
      %v3011 = vld [vmem:[#allocation2 + $0x1f8] sm:$0xff]
      %v3012 = vld [vmem:[#allocation2 + $0x200] sm:$0xff]
      %v3013 = vld [vmem:[#allocation2 + $0x208] sm:$0xff]
      %v3014 = vld [vmem:[#allocation2 + $0x210] sm:$0xff]
      %v3015 = vld [vmem:[#allocation2 + $0x218] sm:$0xff]
      %v3016 = vld [vmem:[#allocation2 + $0x220] sm:$0xff]
      %v3017 = vld [vmem:[#allocation2 + $0x228] sm:$0xff]
      %v3018 = vld [vmem:[#allocation2 + $0x230] sm:$0xff]
      %v3019 = vld [vmem:[#allocation2 + $0x238] sm:$0xff]
      %v3020 = vld [vmem:[#allocation2 + $0x240] sm:$0xff]
      %v3021 = vld [vmem:[#allocation2 + $0x248] sm:$0xff]
      %v3022 = vld [vmem:[#allocation2 + $0x250] sm:$0xff]
      %v3023 = vld [vmem:[#allocation2 + $0x258] sm:$0xff]
      %v3024 = vld [vmem:[#allocation2 + $0x260] sm:$0xff]
      %v3025 = vld [vmem:[#allocation2 + $0x268] sm:$0xff]
      %v3026 = vld [vmem:[#allocation2 + $0x270] sm:$0xff]
      %v3027 = vld [vmem:[#allocation2 + $0x278] sm:$0xff]
      %v3028 = vld [vmem:[#allocation2 + $0x280] sm:$0xff]
      %v3029 = vld [vmem:[#allocation2 + $0x288] sm:$0xff]
      %v3030 = vld [vmem:[#allocation2 + $0x290] sm:$0xff]
      %v3031 = vld [vmem:[#allocation2 + $0x298] sm:$0xff]
      %v3032 = vld [vmem:[#allocation2 + $0x2a0] sm:$0xff]
      %v3033 = vld [vmem:[#allocation2 + $0x2a8] sm:$0xff]
      %v3034 = vld [vmem:[#allocation2 + $0x2b0] sm:$0xff]
      %v3035 = vld [vmem:[#allocation2 + $0x2b8] sm:$0xff]
      %v3036 = vld [vmem:[#allocation2 + $0x2c0] sm:$0xff]
      %v3037 = vld [vmem:[#allocation2 + $0x2c8] sm:$0xff]
      %v3038 = vld [vmem:[#allocation2 + $0x2d0] sm:$0xff]
      %v3039 = vld [vmem:[#allocation2 + $0x2d8] sm:$0xff]
      %v3040 = vld [vmem:[#allocation2 + $0x2e0] sm:$0xff]
      %v3041 = vld [vmem:[#allocation2 + $0x2e8] sm:$0xff]
      %v3042 = vld [vmem:[#allocation2 + $0x2f0] sm:$0xff]
      %v3043 = vld [vmem:[#allocation2 + $0x2f8] sm:$0xff]
      %v3044 = vld [vmem:[#allocation2 + $0x300] sm:$0xf]
      %v3045 = vld [vmem:[#allocation2 + $0x308] sm:$0xf]
      %v3046 = vld [vmem:[#allocation2 + $0x310] sm:$0xf]
      %v3047 = vld [vmem:[#allocation2 + $0x318] sm:$0xf]
      %v3048 = vld [vmem:[#allocation2 + $0x320] sm:$0xf]
      %v3049 = vld [vmem:[#allocation2 + $0x328] sm:$0xf]
      %v3050 = vld [vmem:[#allocation2 + $0x330] sm:$0xf]
      %v3051 = vld [vmem:[#allocation2 + $0x338] sm:$0xf]
      %v3052 = vld [vmem:[%s3] sm:$0xff]
      %v3053 = vld [vmem:[%s3 + $0x8] sm:$0xff]
      %3055 = vset.pattern.permute.xlu0 0
      %3056 = vperm.xlu0 %3055, %v3052
      %v3057 = vpop.permute.xlu0 %3056
      %3060 = vset.pattern.permute.xlu0 0
      %3061 = vperm.xlu0 %3060, %v3053
      %v3062 = vpop.permute.xlu0 %3061
      %vm3064 = vcmask 818176
      %v3066 = vsel %vm3064, %v2946, 0
      %v3069 = vsel %vm3064, %v2947, 0
      %vm3071 = vcmask 1043456
      %v3073 = vsel %vm3071, %v3044, 0
      %v3076 = vsel %vm3071, %v3045, 0
      %v3079 = vsel %vm3071, %v3046, 0
      %v3082 = vsel %vm3071, %v3047, 0
      %v3085 = vsel %vm3071, %v3048, 0
      %v3088 = vsel %vm3071, %v3049, 0
      %v3091 = vsel %vm3071, %v3050, 0
      %v3094 = vsel %vm3071, %v3051, 0
      %3096 = vmatprep.subr.mxu0 0.0
      %3097 = vmatpush1.msra.mxu0 0.0
      %3098 = vmatprep.subr.mxu0 0.0
      %3099 = vmatpush1.msra.mxu0 0.0
      %3100 = vmatprep.subr.mxu0 0.0
      %3101 = vmatpush1.msra.mxu0 0.0
      %3102 = vmatprep.subr.mxu0 %v3076
      %3103 = vmatpush1.msra.mxu0 %v3073
      %3104 = vmatprep.subr.mxu0 %v3037
      %3105 = vmatpush1.msra.mxu0 %v3036
      %3106 = vmatprep.subr.mxu0 %v3029
      %3107 = vmatpush1.msra.mxu0 %v3028
      %3108 = vmatprep.subr.mxu0 %v3021
      %3109 = vmatpush1.msra.mxu0 %v3020
      %3110 = vmatprep.subr.mxu0 %v3013
      %3111 = vmatpush1.msra.mxu0 %v3012
      %3112 = vmatprep.subr.mxu0 %v3005
      %3113 = vmatpush1.msra.mxu0 %v3004
      %3114 = vmatprep.subr.mxu0 %v2997
      %3115 = vmatpush1.msra.mxu0 %v2996
      %3116 = vmatprep.subr.mxu0 %v2989
      %3117 = vmatpush1.msra.mxu0 %v2988
      %3118 = vmatprep.subr.mxu0 %v2981
      %3119 = vmatpush1.msra.mxu0 %v2980
      %3120 = vmatprep.subr.mxu0 %v2973
      %3121 = vmatpush1.msra.mxu0 %v2972
      %3122 = vmatprep.subr.mxu0 %v2965
      %3123 = vmatpush1.msra.mxu0 %v2964
      %3124 = vmatprep.subr.mxu0 %v2957
      %3125 = vmatpush1.msra.mxu0 %v2956
      %3126 = vmatprep.subr.mxu0 %v2949
      %3127 = vmatpush1.msra.mxu0 %v2948
      %3128 = vmatprep.subr.mxu0 0.0
      %3129 = vmatpush2.msra.mxu0 0.0
      %3130 = vmatprep.subr.mxu0 0.0
      %3131 = vmatpush2.msra.mxu0 0.0
      %3132 = vmatprep.subr.mxu0 0.0
      %3133 = vmatpush2.msra.mxu0 0.0
      %3134 = vmatprep.subr.mxu0 0.0
      %3135 = vmatpush2.msra.mxu0 0.0
      %3136 = vmatprep.subr.mxu0 0.0
      %3137 = vmatpush2.msra.mxu0 0.0
      %3138 = vmatprep.subr.mxu0 0.0
      %3139 = vmatpush2.msra.mxu0 0.0
      %3140 = vmatprep.subr.mxu0 0.0
      %3141 = vmatpush2.msra.mxu0 0.0
      %3142 = vmatprep.subr.mxu0 0.0
      %3143 = vmatpush2.msra.mxu0 0.0
      %3144 = vmatprep.subr.mxu0 0.0
      %3145 = vmatpush2.msra.mxu0 0.0
      %3146 = vmatprep.subr.mxu0 0.0
      %3147 = vmatpush2.msra.mxu0 0.0
      %3148 = vmatprep.subr.mxu0 0.0
      %3149 = vmatpush2.msra.mxu0 0.0
      %3150 = vmatprep.subr.mxu0 0.0
      %3151 = vmatpush2.msra.mxu0 0.0
      %3152 = vmatprep.subr.mxu0 0.0
      %3153 = vmatpush2.msra.mxu0 0.0
      %3154 = vmatprep.subr.mxu0 0.0
      %3155 = vmatpush2.msra.mxu0 0.0
      %3156 = vmatprep.subr.mxu0 0.0
      %3157 = vmatpush2.msra.mxu0 0.0
      %3158 = vmatprep.subr.mxu0 0.0
      %3159 = vmatpush2.msra.mxu0 0.0
      %3160 = vmatprep.mubr.f32.mxu0 0.0
      %3161 = vmatmul.mubr.f32.gmra.mxu0 %v3066
      %v3162 = vpop.f32.mrf.mxu0
      %v3163 = vadd.f32 %v3057, %v3162
      %v3164 = vpop.f32.mrf.mxu0
      %v3165 = vadd.f32 %v3057, %v3164
      %3166 = vmatprep.mubr.f32.mxu0 0.0
      %3167 = vmatmul.mubr.f32.gmra.mxu0 %v3069
      %v3168 = vpop.f32.mrf.mxu0
      %v3169 = vadd.f32 %v3062, %v3168
      %v3170 = vpop.f32.mrf.mxu0
      %v3171 = vadd.f32 %v3062, %v3170
      %3172 = vdwg.mxu0
      %3173 = vmatprep.subr.mxu0 0.0
      %3174 = vmatpush1.msra.mxu0 0.0
      %3175 = vmatprep.subr.mxu0 0.0
      %3176 = vmatpush1.msra.mxu0 0.0
      %3177 = vmatprep.subr.mxu0 0.0
      %3178 = vmatpush1.msra.mxu0 0.0
      %3179 = vmatprep.subr.mxu0 %v3082
      %3180 = vmatpush1.msra.mxu0 %v3079
      %3181 = vmatprep.subr.mxu0 %v3039
      %3182 = vmatpush1.msra.mxu0 %v3038
      %3183 = vmatprep.subr.mxu0 %v3031
      %3184 = vmatpush1.msra.mxu0 %v3030
      %3185 = vmatprep.subr.mxu0 %v3023
      %3186 = vmatpush1.msra.mxu0 %v3022
      %3187 = vmatprep.subr.mxu0 %v3015
      %3188 = vmatpush1.msra.mxu0 %v3014
      %3189 = vmatprep.subr.mxu0 %v3007
      %3190 = vmatpush1.msra.mxu0 %v3006
      %3191 = vmatprep.subr.mxu0 %v2999
      %3192 = vmatpush1.msra.mxu0 %v2998
      %3193 = vmatprep.subr.mxu0 %v2991
      %3194 = vmatpush1.msra.mxu0 %v2990
      %3195 = vmatprep.subr.mxu0 %v2983
      %3196 = vmatpush1.msra.mxu0 %v2982
      %3197 = vmatprep.subr.mxu0 %v2975
      %3198 = vmatpush1.msra.mxu0 %v2974
      %3199 = vmatprep.subr.mxu0 %v2967
      %3200 = vmatpush1.msra.mxu0 %v2966
      %3201 = vmatprep.subr.mxu0 %v2959
      %3202 = vmatpush1.msra.mxu0 %v2958
      %3203 = vmatprep.subr.mxu0 %v2951
      %3204 = vmatpush1.msra.mxu0 %v2950
      %3205 = vmatprep.subr.mxu0 0.0
      %3206 = vmatpush2.msra.mxu0 0.0
      %3207 = vmatprep.subr.mxu0 0.0
      %3208 = vmatpush2.msra.mxu0 0.0
      %3209 = vmatprep.subr.mxu0 0.0
      %3210 = vmatpush2.msra.mxu0 0.0
      %3211 = vmatprep.subr.mxu0 0.0
      %3212 = vmatpush2.msra.mxu0 0.0
      %3213 = vmatprep.subr.mxu0 0.0
      %3214 = vmatpush2.msra.mxu0 0.0
      %3215 = vmatprep.subr.mxu0 0.0
      %3216 = vmatpush2.msra.mxu0 0.0
      %3217 = vmatprep.subr.mxu0 0.0
      %3218 = vmatpush2.msra.mxu0 0.0
      %3219 = vmatprep.subr.mxu0 0.0
      %3220 = vmatpush2.msra.mxu0 0.0
      %3221 = vmatprep.subr.mxu0 0.0
      %3222 = vmatpush2.msra.mxu0 0.0
      %3223 = vmatprep.subr.mxu0 0.0
      %3224 = vmatpush2.msra.mxu0 0.0
      %3225 = vmatprep.subr.mxu0 0.0
      %3226 = vmatpush2.msra.mxu0 0.0
      %3227 = vmatprep.subr.mxu0 0.0
      %3228 = vmatpush2.msra.mxu0 0.0
      %3229 = vmatprep.subr.mxu0 0.0
      %3230 = vmatpush2.msra.mxu0 0.0
      %3231 = vmatprep.subr.mxu0 0.0
      %3232 = vmatpush2.msra.mxu0 0.0
      %3233 = vmatprep.subr.mxu0 0.0
      %3234 = vmatpush2.msra.mxu0 0.0
      %3235 = vmatprep.subr.mxu0 0.0
      %3236 = vmatpush2.msra.mxu0 0.0
      %3237 = vmatprep.mubr.f32.mxu0 0.0
      %3238 = vmatmul.mubr.f32.gmra.mxu0 %v3066
      %v3239 = vpop.f32.mrf.mxu0
      %v3240 = vadd.f32 %v3057, %v3239
      %v3241 = vpop.f32.mrf.mxu0
      %v3242 = vadd.f32 %v3057, %v3241
      %3243 = vmatprep.mubr.f32.mxu0 0.0
      %3244 = vmatmul.mubr.f32.gmra.mxu0 %v3069
      %v3245 = vpop.f32.mrf.mxu0
      %v3246 = vadd.f32 %v3062, %v3245
      %v3247 = vpop.f32.mrf.mxu0
      %v3248 = vadd.f32 %v3062, %v3247
      %3249 = vdwg.mxu0
      %3250 = vmatprep.subr.mxu0 0.0
      %3251 = vmatpush1.msra.mxu0 0.0
      %3252 = vmatprep.subr.mxu0 0.0
      %3253 = vmatpush1.msra.mxu0 0.0
      %3254 = vmatprep.subr.mxu0 0.0
      %3255 = vmatpush1.msra.mxu0 0.0
      %3256 = vmatprep.subr.mxu0 %v3088
      %3257 = vmatpush1.msra.mxu0 %v3085
      %3258 = vmatprep.subr.mxu0 %v3041
      %3259 = vmatpush1.msra.mxu0 %v3040
      %3260 = vmatprep.subr.mxu0 %v3033
      %3261 = vmatpush1.msra.mxu0 %v3032
      %3262 = vmatprep.subr.mxu0 %v3025
      %3263 = vmatpush1.msra.mxu0 %v3024
      %3264 = vmatprep.subr.mxu0 %v3017
      %3265 = vmatpush1.msra.mxu0 %v3016
      %3266 = vmatprep.subr.mxu0 %v3009
      %3267 = vmatpush1.msra.mxu0 %v3008
      %3268 = vmatprep.subr.mxu0 %v3001
      %3269 = vmatpush1.msra.mxu0 %v3000
      %3270 = vmatprep.subr.mxu0 %v2993
      %3271 = vmatpush1.msra.mxu0 %v2992
      %3272 = vmatprep.subr.mxu0 %v2985
      %3273 = vmatpush1.msra.mxu0 %v2984
      %3274 = vmatprep.subr.mxu0 %v2977
      %3275 = vmatpush1.msra.mxu0 %v2976
      %3276 = vmatprep.subr.mxu0 %v2969
      %3277 = vmatpush1.msra.mxu0 %v2968
      %3278 = vmatprep.subr.mxu0 %v2961
      %3279 = vmatpush1.msra.mxu0 %v2960
      %3280 = vmatprep.subr.mxu0 %v2953
      %3281 = vmatpush1.msra.mxu0 %v2952
      %3282 = vmatprep.subr.mxu0 0.0
      %3283 = vmatpush2.msra.mxu0 0.0
      %3284 = vmatprep.subr.mxu0 0.0
      %3285 = vmatpush2.msra.mxu0 0.0
      %3286 = vmatprep.subr.mxu0 0.0
      %3287 = vmatpush2.msra.mxu0 0.0
      %3288 = vmatprep.subr.mxu0 0.0
      %3289 = vmatpush2.msra.mxu0 0.0
      %3290 = vmatprep.subr.mxu0 0.0
      %3291 = vmatpush2.msra.mxu0 0.0
      %3292 = vmatprep.subr.mxu0 0.0
      %3293 = vmatpush2.msra.mxu0 0.0
      %3294 = vmatprep.subr.mxu0 0.0
      %3295 = vmatpush2.msra.mxu0 0.0
      %3296 = vmatprep.subr.mxu0 0.0
      %3297 = vmatpush2.msra.mxu0 0.0
      %3298 = vmatprep.subr.mxu0 0.0
      %3299 = vmatpush2.msra.mxu0 0.0
      %3300 = vmatprep.subr.mxu0 0.0
      %3301 = vmatpush2.msra.mxu0 0.0
      %3302 = vmatprep.subr.mxu0 0.0
      %3303 = vmatpush2.msra.mxu0 0.0
      %3304 = vmatprep.subr.mxu0 0.0
      %3305 = vmatpush2.msra.mxu0 0.0
      %3306 = vmatprep.subr.mxu0 0.0
      %3307 = vmatpush2.msra.mxu0 0.0
      %3308 = vmatprep.subr.mxu0 0.0
      %3309 = vmatpush2.msra.mxu0 0.0
      %3310 = vmatprep.subr.mxu0 0.0
      %3311 = vmatpush2.msra.mxu0 0.0
      %3312 = vmatprep.subr.mxu0 0.0
      %3313 = vmatpush2.msra.mxu0 0.0
      %3314 = vmatprep.mubr.f32.mxu0 0.0
      %3315 = vmatmul.mubr.f32.gmra.mxu0 %v3066
      %v3316 = vpop.f32.mrf.mxu0
      %v3317 = vadd.f32 %v3057, %v3316
      %v3318 = vpop.f32.mrf.mxu0
      %v3319 = vadd.f32 %v3057, %v3318
      %3320 = vmatprep.mubr.f32.mxu0 0.0
      %3321 = vmatmul.mubr.f32.gmra.mxu0 %v3069
      %v3322 = vpop.f32.mrf.mxu0
      %v3323 = vadd.f32 %v3062, %v3322
      %v3324 = vpop.f32.mrf.mxu0
      %v3325 = vadd.f32 %v3062, %v3324
      %3326 = vdwg.mxu0
      %3327 = vmatprep.subr.mxu0 0.0
      %3328 = vmatpush1.msra.mxu0 0.0
      %3329 = vmatprep.subr.mxu0 0.0
      %3330 = vmatpush1.msra.mxu0 0.0
      %3331 = vmatprep.subr.mxu0 0.0
      %3332 = vmatpush1.msra.mxu0 0.0
      %3333 = vmatprep.subr.mxu0 %v3094
      %3334 = vmatpush1.msra.mxu0 %v3091
      %3335 = vmatprep.subr.mxu0 %v3043
      %3336 = vmatpush1.msra.mxu0 %v3042
      %3337 = vmatprep.subr.mxu0 %v3035
      %3338 = vmatpush1.msra.mxu0 %v3034
      %3339 = vmatprep.subr.mxu0 %v3027
      %3340 = vmatpush1.msra.mxu0 %v3026
      %3341 = vmatprep.subr.mxu0 %v3019
      %3342 = vmatpush1.msra.mxu0 %v3018
      %3343 = vmatprep.subr.mxu0 %v3011
      %3344 = vmatpush1.msra.mxu0 %v3010
      %3345 = vmatprep.subr.mxu0 %v3003
      %3346 = vmatpush1.msra.mxu0 %v3002
      %3347 = vmatprep.subr.mxu0 %v2995
      %3348 = vmatpush1.msra.mxu0 %v2994
      %3349 = vmatprep.subr.mxu0 %v2987
      %3350 = vmatpush1.msra.mxu0 %v2986
      %3351 = vmatprep.subr.mxu0 %v2979
      %3352 = vmatpush1.msra.mxu0 %v2978
      %3353 = vmatprep.subr.mxu0 %v2971
      %3354 = vmatpush1.msra.mxu0 %v2970
      %3355 = vmatprep.subr.mxu0 %v2963
      %3356 = vmatpush1.msra.mxu0 %v2962
      %3357 = vmatprep.subr.mxu0 %v2955
      %3358 = vmatpush1.msra.mxu0 %v2954
      %3359 = vmatprep.subr.mxu0 0.0
      %3360 = vmatpush2.msra.mxu0 0.0
      %3361 = vmatprep.subr.mxu0 0.0
      %3362 = vmatpush2.msra.mxu0 0.0
      %3363 = vmatprep.subr.mxu0 0.0
      %3364 = vmatpush2.msra.mxu0 0.0
      %3365 = vmatprep.subr.mxu0 0.0
      %3366 = vmatpush2.msra.mxu0 0.0
      %3367 = vmatprep.subr.mxu0 0.0
      %3368 = vmatpush2.msra.mxu0 0.0
      %3369 = vmatprep.subr.mxu0 0.0
      %3370 = vmatpush2.msra.mxu0 0.0
      %3371 = vmatprep.subr.mxu0 0.0
      %3372 = vmatpush2.msra.mxu0 0.0
      %3373 = vmatprep.subr.mxu0 0.0
      %3374 = vmatpush2.msra.mxu0 0.0
      %3375 = vmatprep.subr.mxu0 0.0
      %3376 = vmatpush2.msra.mxu0 0.0
      %3377 = vmatprep.subr.mxu0 0.0
      %3378 = vmatpush2.msra.mxu0 0.0
      %3379 = vmatprep.subr.mxu0 0.0
      %3380 = vmatpush2.msra.mxu0 0.0
      %3381 = vmatprep.subr.mxu0 0.0
      %3382 = vmatpush2.msra.mxu0 0.0
      %3383 = vmatprep.subr.mxu0 0.0
      %3384 = vmatpush2.msra.mxu0 0.0
      %3385 = vmatprep.subr.mxu0 0.0
      %3386 = vmatpush2.msra.mxu0 0.0
      %3387 = vmatprep.subr.mxu0 0.0
      %3388 = vmatpush2.msra.mxu0 0.0
      %3389 = vmatprep.subr.mxu0 0.0
      %3390 = vmatpush2.msra.mxu0 0.0
      %3391 = vmatprep.mubr.f32.mxu0 0.0
      %3392 = vmatmul.mubr.f32.gmra.mxu0 %v3066
      %v3393 = vpop.f32.mrf.mxu0
      %v3394 = vadd.f32 %v3057, %v3393
      %v3395 = vpop.f32.mrf.mxu0
      %v3396 = vadd.f32 %v3057, %v3395
      %3397 = vmatprep.mubr.f32.mxu0 0.0
      %3398 = vmatmul.mubr.f32.gmra.mxu0 %v3069
      %v3399 = vpop.f32.mrf.mxu0
      %v3400 = vadd.f32 %v3062, %v3399
      %v3401 = vpop.f32.mrf.mxu0
      %v3402 = vadd.f32 %v3062, %v3401
      %3403 = vdwg.mxu0
      %v3404 = vmax.f32 %v3163, 0.0
      %v3405 = vmax.f32 %v3165, 0.0
      %v3406 = vmax.f32 %v3240, 0.0
      %v3407 = vmax.f32 %v3242, 0.0
      %v3408 = vmax.f32 %v3317, 0.0
      %v3409 = vmax.f32 %v3319, 0.0
      %v3410 = vmax.f32 %v3394, 0.0
      %v3411 = vmax.f32 %v3396, 0.0
      %v3412 = vmax.f32 %v3169, 0.0
      %v3413 = vmax.f32 %v3171, 0.0
      %v3414 = vmax.f32 %v3246, 0.0
      %v3415 = vmax.f32 %v3248, 0.0
      %v3416 = vmax.f32 %v3323, 0.0
      %v3417 = vmax.f32 %v3325, 0.0
      %v3418 = vmax.f32 %v3400, 0.0
      %v3419 = vmax.f32 %v3402, 0.0
      %v3420 = vadd.s32 %v314, 4294967040
      %v3421 = vadd.s32 %v315, 4294967040
      %v3422 = vadd.s32 %v316, 4294967040
      %v3423 = vadd.s32 %v317, 4294967040
      %v3424 = vadd.s32 %v318, 4294967040
      %v3425 = vadd.s32 %v319, 4294967040
      %v3426 = vadd.s32 %v320, 4294967040
      %v3427 = vadd.s32 %v321, 4294967040
      %vm3428 = vcmp.ge.s32.totalorder %v3420, 0
      %vm3429 = vcmp.ge.s32.totalorder %v3421, 0
      %vm3430 = vcmp.ge.s32.totalorder %v3422, 0
      %vm3431 = vcmp.ge.s32.totalorder %v3423, 0
      %vm3432 = vcmp.ge.s32.totalorder %v3424, 0
      %vm3433 = vcmp.ge.s32.totalorder %v3425, 0
      %vm3434 = vcmp.ge.s32.totalorder %v3426, 0
      %vm3435 = vcmp.ge.s32.totalorder %v3427, 0
      %vm3436 = vcmp.lt.s32.totalorder %v3420, 1024
      %vm3437 = vcmp.lt.s32.totalorder %v3421, 1024
      %vm3438 = vcmp.lt.s32.totalorder %v3422, 1024
      %vm3439 = vcmp.lt.s32.totalorder %v3423, 1024
      %vm3440 = vcmp.lt.s32.totalorder %v3424, 1024
      %vm3441 = vcmp.lt.s32.totalorder %v3425, 1024
      %vm3442 = vcmp.lt.s32.totalorder %v3426, 1024
      %vm3443 = vcmp.lt.s32.totalorder %v3427, 1024
      %vm3444 = vmand %vm3428, %vm3436
      %vm3445 = vmand %vm3429, %vm3437
      %vm3446 = vmand %vm3430, %vm3438
      %vm3447 = vmand %vm3431, %vm3439
      %vm3448 = vmand %vm3432, %vm3440
      %vm3449 = vmand %vm3433, %vm3441
      %vm3450 = vmand %vm3434, %vm3442
      %vm3451 = vmand %vm3435, %vm3443
      %v3452 = vsel %vm3444, 1, 0
      %v3453 = vsel %vm3445, 1, 0
      %v3454 = vsel %vm3446, 1, 0
      %v3455 = vsel %vm3447, 1, 0
      %v3456 = vsel %vm3448, 1, 0
      %v3457 = vsel %vm3449, 1, 0
      %v3458 = vsel %vm3450, 1, 0
      %v3459 = vsel %vm3451, 1, 0
      %vm3460 = vcmp.eq.s32.totalorder %v3452, 1
      %vm3461 = vcmp.eq.s32.totalorder %v3453, 1
      %vm3462 = vcmp.eq.s32.totalorder %v3454, 1
      %vm3463 = vcmp.eq.s32.totalorder %v3455, 1
      %vm3464 = vcmp.eq.s32.totalorder %v3456, 1
      %vm3465 = vcmp.eq.s32.totalorder %v3457, 1
      %vm3466 = vcmp.eq.s32.totalorder %v3458, 1
      %vm3467 = vcmp.eq.s32.totalorder %v3459, 1
      %v3468 = vsel %vm3460, %v3410, 0.0
      %v3469 = vsel %vm3461, %v3411, 0.0
      %v3470 = vsel %vm3462, %v3404, 0.0
      %v3471 = vsel %vm3463, %v3405, 0.0
      %v3472 = vsel %vm3464, %v3406, 0.0
      %v3473 = vsel %vm3465, %v3407, 0.0
      %v3474 = vsel %vm3466, %v3408, 0.0
      %v3475 = vsel %vm3467, %v3409, 0.0
      %3476 = vst [vmem:[#allocation3] sm:$0xff] %v3468
      %3477 = vst [vmem:[#allocation3 + $0x8] sm:$0xff] %v3469
      %3478 = vst [vmem:[#allocation3 + $0x10] sm:$0xff] %v3470
      %3479 = vst [vmem:[#allocation3 + $0x18] sm:$0xff] %v3471
      %3480 = vst [vmem:[#allocation3 + $0x20] sm:$0xff] %v3472
      %3481 = vst [vmem:[#allocation3 + $0x28] sm:$0xff] %v3473
      %3482 = vst [vmem:[#allocation3 + $0x30] sm:$0xff] %v3474
      %3483 = vst [vmem:[#allocation3 + $0x38] sm:$0xff] %v3475
      %vm3484 = vcmp.ge.s32.totalorder %v314, 0
      %vm3485 = vcmp.ge.s32.totalorder %v315, 0
      %vm3486 = vcmp.ge.s32.totalorder %v316, 0
      %vm3487 = vcmp.ge.s32.totalorder %v317, 0
      %vm3488 = vcmp.ge.s32.totalorder %v318, 0
      %vm3489 = vcmp.ge.s32.totalorder %v319, 0
      %vm3490 = vcmp.ge.s32.totalorder %v320, 0
      %vm3491 = vcmp.ge.s32.totalorder %v321, 0
      %vm3492 = vcmp.lt.s32.totalorder %v314, 1024
      %vm3493 = vcmp.lt.s32.totalorder %v315, 1024
      %vm3494 = vcmp.lt.s32.totalorder %v316, 1024
      %vm3495 = vcmp.lt.s32.totalorder %v317, 1024
      %vm3496 = vcmp.lt.s32.totalorder %v318, 1024
      %vm3497 = vcmp.lt.s32.totalorder %v319, 1024
      %vm3498 = vcmp.lt.s32.totalorder %v320, 1024
      %vm3499 = vcmp.lt.s32.totalorder %v321, 1024
      %vm3500 = vmand %vm3484, %vm3492
      %vm3501 = vmand %vm3485, %vm3493
      %vm3502 = vmand %vm3486, %vm3494
      %vm3503 = vmand %vm3487, %vm3495
      %vm3504 = vmand %vm3488, %vm3496
      %vm3505 = vmand %vm3489, %vm3497
      %vm3506 = vmand %vm3490, %vm3498
      %vm3507 = vmand %vm3491, %vm3499
      %v3508 = vsel %vm3500, 1, 0
      %v3509 = vsel %vm3501, 1, 0
      %v3510 = vsel %vm3502, 1, 0
      %v3511 = vsel %vm3503, 1, 0
      %v3512 = vsel %vm3504, 1, 0
      %v3513 = vsel %vm3505, 1, 0
      %v3514 = vsel %vm3506, 1, 0
      %v3515 = vsel %vm3507, 1, 0
      %vm3516 = vcmp.eq.s32.totalorder %v3508, 1
      %vm3517 = vcmp.eq.s32.totalorder %v3509, 1
      %vm3518 = vcmp.eq.s32.totalorder %v3510, 1
      %vm3519 = vcmp.eq.s32.totalorder %v3511, 1
      %vm3520 = vcmp.eq.s32.totalorder %v3512, 1
      %vm3521 = vcmp.eq.s32.totalorder %v3513, 1
      %vm3522 = vcmp.eq.s32.totalorder %v3514, 1
      %vm3523 = vcmp.eq.s32.totalorder %v3515, 1
      %v3524 = vsel %vm3516, %v3404, 0.0
      %v3525 = vsel %vm3517, %v3405, 0.0
      %v3526 = vsel %vm3518, %v3406, 0.0
      %v3527 = vsel %vm3519, %v3407, 0.0
      %v3528 = vsel %vm3520, %v3408, 0.0
      %v3529 = vsel %vm3521, %v3409, 0.0
      %v3530 = vsel %vm3522, %v3410, 0.0
      %v3531 = vsel %vm3523, %v3411, 0.0
      %3532 = vst [vmem:[#allocation3 + $0x40] sm:$0xff] %v3524
      %3533 = vst [vmem:[#allocation3 + $0x48] sm:$0xff] %v3525
      %3534 = vst [vmem:[#allocation3 + $0x50] sm:$0xff] %v3526
      %3535 = vst [vmem:[#allocation3 + $0x58] sm:$0xff] %v3527
      %3536 = vst [vmem:[#allocation3 + $0x60] sm:$0xff] %v3528
      %3537 = vst [vmem:[#allocation3 + $0x68] sm:$0xff] %v3529
      %3538 = vst [vmem:[#allocation3 + $0x70] sm:$0xff] %v3530
      %3539 = vst [vmem:[#allocation3 + $0x78] sm:$0xff] %v3531
      %v3540 = vadd.s32 %v315, 256
      %v3541 = vadd.s32 %v316, 256
      %v3542 = vadd.s32 %v317, 256
      %v3543 = vadd.s32 %v318, 256
      %v3544 = vadd.s32 %v319, 256
      %v3545 = vadd.s32 %v320, 256
      %v3546 = vadd.s32 %v321, 256
      %vm3547 = vcmp.ge.s32.totalorder %v3540, 0
      %vm3548 = vcmp.ge.s32.totalorder %v3541, 0
      %vm3549 = vcmp.ge.s32.totalorder %v3542, 0
      %vm3550 = vcmp.ge.s32.totalorder %v3543, 0
      %vm3551 = vcmp.ge.s32.totalorder %v3544, 0
      %vm3552 = vcmp.ge.s32.totalorder %v3545, 0
      %vm3553 = vcmp.ge.s32.totalorder %v3546, 0
      %vm3554 = vcmp.lt.s32.totalorder %v3540, 1024
      %vm3555 = vcmp.lt.s32.totalorder %v3541, 1024
      %vm3556 = vcmp.lt.s32.totalorder %v3542, 1024
      %vm3557 = vcmp.lt.s32.totalorder %v3543, 1024
      %vm3558 = vcmp.lt.s32.totalorder %v3544, 1024
      %vm3559 = vcmp.lt.s32.totalorder %v3545, 1024
      %vm3560 = vcmp.lt.s32.totalorder %v3546, 1024
      %vm3561 = vmand %vm3547, %vm3554
      %vm3562 = vmand %vm3548, %vm3555
      %vm3563 = vmand %vm3549, %vm3556
      %vm3564 = vmand %vm3550, %vm3557
      %vm3565 = vmand %vm3551, %vm3558
      %vm3566 = vmand %vm3552, %vm3559
      %vm3567 = vmand %vm3553, %vm3560
      %v3568 = vsel %vm3561, 1, 0
      %v3569 = vsel %vm3562, 1, 0
      %v3570 = vsel %vm3563, 1, 0
      %v3571 = vsel %vm3564, 1, 0
      %v3572 = vsel %vm3565, 1, 0
      %v3573 = vsel %vm3566, 1, 0
      %v3574 = vsel %vm3567, 1, 0
      %vm3575 = vcmp.eq.s32.totalorder %v3568, 1
      %vm3576 = vcmp.eq.s32.totalorder %v3569, 1
      %vm3577 = vcmp.eq.s32.totalorder %v3570, 1
      %vm3578 = vcmp.eq.s32.totalorder %v3571, 1
      %vm3579 = vcmp.eq.s32.totalorder %v3572, 1
      %vm3580 = vcmp.eq.s32.totalorder %v3573, 1
      %vm3581 = vcmp.eq.s32.totalorder %v3574, 1
      %v3582 = vsel %vm3575, %v3407, 0.0
      %v3583 = vsel %vm3576, %v3408, 0.0
      %v3584 = vsel %vm3577, %v3409, 0.0
      %v3585 = vsel %vm3578, %v3410, 0.0
      %v3586 = vsel %vm3579, %v3411, 0.0
      %v3587 = vsel %vm3580, %v3404, 0.0
      %v3588 = vsel %vm3581, %v3405, 0.0
      %3589 = vst [vmem:[#allocation3 + $0x80] sm:$0xff] %v3526
      %3590 = vst [vmem:[#allocation3 + $0x88] sm:$0xff] %v3582
      %3591 = vst [vmem:[#allocation3 + $0x90] sm:$0xff] %v3583
      %3592 = vst [vmem:[#allocation3 + $0x98] sm:$0xff] %v3584
      %3593 = vst [vmem:[#allocation3 + $0xa0] sm:$0xff] %v3585
      %3594 = vst [vmem:[#allocation3 + $0xa8] sm:$0xff] %v3586
      %3595 = vst [vmem:[#allocation3 + $0xb0] sm:$0xff] %v3587
      %3596 = vst [vmem:[#allocation3 + $0xb8] sm:$0xff] %v3588
      %v3597 = vadd.s32 %v314, 4294966784
      %v3598 = vadd.s32 %v315, 4294966784
      %v3599 = vadd.s32 %v316, 4294966784
      %v3600 = vadd.s32 %v317, 4294966784
      %v3601 = vadd.s32 %v318, 4294966784
      %v3602 = vadd.s32 %v319, 4294966784
      %v3603 = vadd.s32 %v320, 4294966784
      %v3604 = vadd.s32 %v321, 4294966784
      %vm3605 = vcmp.ge.s32.totalorder %v3597, 0
      %vm3606 = vcmp.ge.s32.totalorder %v3598, 0
      %vm3607 = vcmp.ge.s32.totalorder %v3599, 0
      %vm3608 = vcmp.ge.s32.totalorder %v3600, 0
      %vm3609 = vcmp.ge.s32.totalorder %v3601, 0
      %vm3610 = vcmp.ge.s32.totalorder %v3602, 0
      %vm3611 = vcmp.ge.s32.totalorder %v3603, 0
      %vm3612 = vcmp.ge.s32.totalorder %v3604, 0
      %vm3613 = vcmp.lt.s32.totalorder %v3597, 1024
      %vm3614 = vcmp.lt.s32.totalorder %v3598, 1024
      %vm3615 = vcmp.lt.s32.totalorder %v3599, 1024
      %vm3616 = vcmp.lt.s32.totalorder %v3600, 1024
      %vm3617 = vcmp.lt.s32.totalorder %v3601, 1024
      %vm3618 = vcmp.lt.s32.totalorder %v3602, 1024
      %vm3619 = vcmp.lt.s32.totalorder %v3603, 1024
      %vm3620 = vcmp.lt.s32.totalorder %v3604, 1024
      %vm3621 = vmand %vm3605, %vm3613
      %vm3622 = vmand %vm3606, %vm3614
      %vm3623 = vmand %vm3607, %vm3615
      %vm3624 = vmand %vm3608, %vm3616
      %vm3625 = vmand %vm3609, %vm3617
      %vm3626 = vmand %vm3610, %vm3618
      %vm3627 = vmand %vm3611, %vm3619
      %vm3628 = vmand %vm3612, %vm3620
      %v3629 = vsel %vm3621, 1, 0
      %v3630 = vsel %vm3622, 1, 0
      %v3631 = vsel %vm3623, 1, 0
      %v3632 = vsel %vm3624, 1, 0
      %v3633 = vsel %vm3625, 1, 0
      %v3634 = vsel %vm3626, 1, 0
      %v3635 = vsel %vm3627, 1, 0
      %v3636 = vsel %vm3628, 1, 0
      %vm3637 = vcmp.eq.s32.totalorder %v3629, 1
      %vm3638 = vcmp.eq.s32.totalorder %v3630, 1
      %vm3639 = vcmp.eq.s32.totalorder %v3631, 1
      %vm3640 = vcmp.eq.s32.totalorder %v3632, 1
      %vm3641 = vcmp.eq.s32.totalorder %v3633, 1
      %vm3642 = vcmp.eq.s32.totalorder %v3634, 1
      %vm3643 = vcmp.eq.s32.totalorder %v3635, 1
      %vm3644 = vcmp.eq.s32.totalorder %v3636, 1
      %v3645 = vsel %vm3637, %v3416, 0.0
      %v3646 = vsel %vm3638, %v3417, 0.0
      %v3647 = vsel %vm3639, %v3418, 0.0
      %v3648 = vsel %vm3640, %v3419, 0.0
      %v3649 = vsel %vm3641, %v3412, 0.0
      %v3650 = vsel %vm3642, %v3413, 0.0
      %v3651 = vsel %vm3643, %v3414, 0.0
      %v3652 = vsel %vm3644, %v3415, 0.0
      %3653 = vst [vmem:[#allocation3 + $0xc0] sm:$0xff] %v3645
      %3654 = vst [vmem:[#allocation3 + $0xc8] sm:$0xff] %v3646
      %3655 = vst [vmem:[#allocation3 + $0xd0] sm:$0xff] %v3647
      %3656 = vst [vmem:[#allocation3 + $0xd8] sm:$0xff] %v3648
      %3657 = vst [vmem:[#allocation3 + $0xe0] sm:$0xff] %v3649
      %3658 = vst [vmem:[#allocation3 + $0xe8] sm:$0xff] %v3650
      %3659 = vst [vmem:[#allocation3 + $0xf0] sm:$0xff] %v3651
      %3660 = vst [vmem:[#allocation3 + $0xf8] sm:$0xff] %v3652
      %v3661 = vsel %vm3460, %v3418, 0.0
      %v3662 = vsel %vm3461, %v3419, 0.0
      %v3663 = vsel %vm3462, %v3412, 0.0
      %v3664 = vsel %vm3463, %v3413, 0.0
      %v3665 = vsel %vm3464, %v3414, 0.0
      %v3666 = vsel %vm3465, %v3415, 0.0
      %v3667 = vsel %vm3466, %v3416, 0.0
      %v3668 = vsel %vm3467, %v3417, 0.0
      %3669 = vst [vmem:[#allocation3 + $0x100] sm:$0xff] %v3661
      %3670 = vst [vmem:[#allocation3 + $0x108] sm:$0xff] %v3662
      %3671 = vst [vmem:[#allocation3 + $0x110] sm:$0xff] %v3663
      %3672 = vst [vmem:[#allocation3 + $0x118] sm:$0xff] %v3664
      %3673 = vst [vmem:[#allocation3 + $0x120] sm:$0xff] %v3665
      %3674 = vst [vmem:[#allocation3 + $0x128] sm:$0xff] %v3666
      %3675 = vst [vmem:[#allocation3 + $0x130] sm:$0xff] %v3667
      %3676 = vst [vmem:[#allocation3 + $0x138] sm:$0xff] %v3668
      %v3677 = vsel %vm3516, %v3412, 0.0
      %v3678 = vsel %vm3517, %v3413, 0.0
      %v3679 = vsel %vm3518, %v3414, 0.0
      %v3680 = vsel %vm3519, %v3415, 0.0
      %v3681 = vsel %vm3520, %v3416, 0.0
      %v3682 = vsel %vm3521, %v3417, 0.0
      %v3683 = vsel %vm3522, %v3418, 0.0
      %v3684 = vsel %vm3523, %v3419, 0.0
      %3685 = vst [vmem:[#allocation3 + $0x140] sm:$0xff] %v3677
      %3686 = vst [vmem:[#allocation3 + $0x148] sm:$0xff] %v3678
      %3687 = vst [vmem:[#allocation3 + $0x150] sm:$0xff] %v3679
      %3688 = vst [vmem:[#allocation3 + $0x158] sm:$0xff] %v3680
      %3689 = vst [vmem:[#allocation3 + $0x160] sm:$0xff] %v3681
      %3690 = vst [vmem:[#allocation3 + $0x168] sm:$0xff] %v3682
      %3691 = vst [vmem:[#allocation3 + $0x170] sm:$0xff] %v3683
      %3692 = vst [vmem:[#allocation3 + $0x178] sm:$0xff] %v3684
      %v3693 = vsel %vm3575, %v3415, 0.0
      %v3694 = vsel %vm3576, %v3416, 0.0
      %v3695 = vsel %vm3577, %v3417, 0.0
      %v3696 = vsel %vm3578, %v3418, 0.0
      %v3697 = vsel %vm3579, %v3419, 0.0
      %v3698 = vsel %vm3580, %v3412, 0.0
      %v3699 = vsel %vm3581, %v3413, 0.0
      %3700 = vst [vmem:[#allocation3 + $0x180] sm:$0xff] %v3679
      %3701 = vst [vmem:[#allocation3 + $0x188] sm:$0xff] %v3693
      %3702 = vst [vmem:[#allocation3 + $0x190] sm:$0xff] %v3694
      %3703 = vst [vmem:[#allocation3 + $0x198] sm:$0xff] %v3695
      %3704 = vst [vmem:[#allocation3 + $0x1a0] sm:$0xff] %v3696
      %3705 = vst [vmem:[#allocation3 + $0x1a8] sm:$0xff] %v3697
      %3706 = vst [vmem:[#allocation3 + $0x1b0] sm:$0xff] %v3698
      %3707 = vst [vmem:[#allocation3 + $0x1b8] sm:$0xff] %v3699
      %v3708 = vadd.s32 %v315, 512
      %v3709 = vadd.s32 %v316, 512
      %v3710 = vadd.s32 %v317, 512
      %v3711 = vadd.s32 %v318, 512
      %v3712 = vadd.s32 %v319, 512
      %v3713 = vadd.s32 %v320, 512
      %v3714 = vadd.s32 %v321, 512
      %vm3715 = vcmp.ge.s32.totalorder %v3708, 0
      %vm3716 = vcmp.ge.s32.totalorder %v3709, 0
      %vm3717 = vcmp.ge.s32.totalorder %v3710, 0
      %vm3718 = vcmp.ge.s32.totalorder %v3711, 0
      %vm3719 = vcmp.ge.s32.totalorder %v3712, 0
      %vm3720 = vcmp.ge.s32.totalorder %v3713, 0
      %vm3721 = vcmp.ge.s32.totalorder %v3714, 0
      %vm3722 = vcmp.lt.s32.totalorder %v3708, 1024
      %vm3723 = vcmp.lt.s32.totalorder %v3709, 1024
      %vm3724 = vcmp.lt.s32.totalorder %v3710, 1024
      %vm3725 = vcmp.lt.s32.totalorder %v3711, 1024
      %vm3726 = vcmp.lt.s32.totalorder %v3712, 1024
      %vm3727 = vcmp.lt.s32.totalorder %v3713, 1024
      %vm3728 = vcmp.lt.s32.totalorder %v3714, 1024
      %vm3729 = vmand %vm3715, %vm3722
      %vm3730 = vmand %vm3716, %vm3723
      %vm3731 = vmand %vm3717, %vm3724
      %vm3732 = vmand %vm3718, %vm3725
      %vm3733 = vmand %vm3719, %vm3726
      %vm3734 = vmand %vm3720, %vm3727
      %vm3735 = vmand %vm3721, %vm3728
      %v3736 = vsel %vm3729, 1, 0
      %v3737 = vsel %vm3730, 1, 0
      %v3738 = vsel %vm3731, 1, 0
      %v3739 = vsel %vm3732, 1, 0
      %v3740 = vsel %vm3733, 1, 0
      %v3741 = vsel %vm3734, 1, 0
      %v3742 = vsel %vm3735, 1, 0
      %vm3743 = vcmp.eq.s32.totalorder %v3736, 1
      %vm3744 = vcmp.eq.s32.totalorder %v3737, 1
      %vm3745 = vcmp.eq.s32.totalorder %v3738, 1
      %vm3746 = vcmp.eq.s32.totalorder %v3739, 1
      %vm3747 = vcmp.eq.s32.totalorder %v3740, 1
      %vm3748 = vcmp.eq.s32.totalorder %v3741, 1
      %vm3749 = vcmp.eq.s32.totalorder %v3742, 1
      %v3750 = vsel %vm3743, %v3417, 0.0
      %v3751 = vsel %vm3744, %v3418, 0.0
      %v3752 = vsel %vm3745, %v3419, 0.0
      %v3753 = vsel %vm3746, %v3412, 0.0
      %v3754 = vsel %vm3747, %v3413, 0.0
      %v3755 = vsel %vm3748, %v3414, 0.0
      %v3756 = vsel %vm3749, %v3415, 0.0
      %3757 = vst [vmem:[#allocation3 + $0x1c0] sm:$0xff] %v3681
      %3758 = vst [vmem:[#allocation3 + $0x1c8] sm:$0xff] %v3750
      %3759 = vst [vmem:[#allocation3 + $0x1d0] sm:$0xff] %v3751
      %3760 = vst [vmem:[#allocation3 + $0x1d8] sm:$0xff] %v3752
      %3761 = vst [vmem:[#allocation3 + $0x1e0] sm:$0xff] %v3753
      %3762 = vst [vmem:[#allocation3 + $0x1e8] sm:$0xff] %v3754
      %3763 = vst [vmem:[#allocation3 + $0x1f0] sm:$0xff] %v3755
      %3764 = vst [vmem:[#allocation3 + $0x1f8] sm:$0xff] %v3756
      %v3765 = vld [vmem:[%s4] sm:$0xff]
      %v3766 = vld [vmem:[%s4 + $0x8] sm:$0xff]
      %v3767 = vld [vmem:[#allocation3] sm:$0xff]
      %v3768 = vld [vmem:[#allocation3 + $0x8] sm:$0xff]
      %v3769 = vld [vmem:[#allocation3 + $0x10] sm:$0xff]
      %v3770 = vld [vmem:[#allocation3 + $0x18] sm:$0xff]
      %v3771 = vld [vmem:[#allocation3 + $0x20] sm:$0xff]
      %v3772 = vld [vmem:[#allocation3 + $0x28] sm:$0xff]
      %v3773 = vld [vmem:[#allocation3 + $0x30] sm:$0xff]
      %v3774 = vld [vmem:[#allocation3 + $0x38] sm:$0xff]
      %v3775 = vld [vmem:[#allocation3 + $0x40] sm:$0xff]
      %v3776 = vld [vmem:[#allocation3 + $0x48] sm:$0xff]
      %v3777 = vld [vmem:[#allocation3 + $0x50] sm:$0xff]
      %v3778 = vld [vmem:[#allocation3 + $0x58] sm:$0xff]
      %v3779 = vld [vmem:[#allocation3 + $0x60] sm:$0xff]
      %v3780 = vld [vmem:[#allocation3 + $0x68] sm:$0xff]
      %v3781 = vld [vmem:[#allocation3 + $0x70] sm:$0xff]
      %v3782 = vld [vmem:[#allocation3 + $0x78] sm:$0xff]
      %v3783 = vld [vmem:[#allocation3 + $0x80] sm:$0xff]
      %v3784 = vld [vmem:[#allocation3 + $0x88] sm:$0xff]
      %v3785 = vld [vmem:[#allocation3 + $0x90] sm:$0xff]
      %v3786 = vld [vmem:[#allocation3 + $0x98] sm:$0xff]
      %v3787 = vld [vmem:[#allocation3 + $0xa0] sm:$0xff]
      %v3788 = vld [vmem:[#allocation3 + $0xa8] sm:$0xff]
      %v3789 = vld [vmem:[#allocation3 + $0xb0] sm:$0xff]
      %v3790 = vld [vmem:[#allocation3 + $0xb8] sm:$0xff]
      %v3791 = vld [vmem:[#allocation3 + $0xc0] sm:$0xff]
      %v3792 = vld [vmem:[#allocation3 + $0xc8] sm:$0xff]
      %v3793 = vld [vmem:[#allocation3 + $0xd0] sm:$0xff]
      %v3794 = vld [vmem:[#allocation3 + $0xd8] sm:$0xff]
      %v3795 = vld [vmem:[#allocation3 + $0xe0] sm:$0xff]
      %v3796 = vld [vmem:[#allocation3 + $0xe8] sm:$0xff]
      %v3797 = vld [vmem:[#allocation3 + $0xf0] sm:$0xff]
      %v3798 = vld [vmem:[#allocation3 + $0xf8] sm:$0xff]
      %v3799 = vld [vmem:[#allocation3 + $0x100] sm:$0xff]
      %v3800 = vld [vmem:[#allocation3 + $0x108] sm:$0xff]
      %v3801 = vld [vmem:[#allocation3 + $0x110] sm:$0xff]
      %v3802 = vld [vmem:[#allocation3 + $0x118] sm:$0xff]
      %v3803 = vld [vmem:[#allocation3 + $0x120] sm:$0xff]
      %v3804 = vld [vmem:[#allocation3 + $0x128] sm:$0xff]
      %v3805 = vld [vmem:[#allocation3 + $0x130] sm:$0xff]
      %v3806 = vld [vmem:[#allocation3 + $0x138] sm:$0xff]
      %v3807 = vld [vmem:[#allocation3 + $0x140] sm:$0xff]
      %v3808 = vld [vmem:[#allocation3 + $0x148] sm:$0xff]
      %v3809 = vld [vmem:[#allocation3 + $0x150] sm:$0xff]
      %v3810 = vld [vmem:[#allocation3 + $0x158] sm:$0xff]
      %v3811 = vld [vmem:[#allocation3 + $0x160] sm:$0xff]
      %v3812 = vld [vmem:[#allocation3 + $0x168] sm:$0xff]
      %v3813 = vld [vmem:[#allocation3 + $0x170] sm:$0xff]
      %v3814 = vld [vmem:[#allocation3 + $0x178] sm:$0xff]
      %v3815 = vld [vmem:[#allocation3 + $0x180] sm:$0xff]
      %v3816 = vld [vmem:[#allocation3 + $0x188] sm:$0xff]
      %v3817 = vld [vmem:[#allocation3 + $0x190] sm:$0xff]
      %v3818 = vld [vmem:[#allocation3 + $0x198] sm:$0xff]
      %v3819 = vld [vmem:[#allocation3 + $0x1a0] sm:$0xff]
      %v3820 = vld [vmem:[#allocation3 + $0x1a8] sm:$0xff]
      %v3821 = vld [vmem:[#allocation3 + $0x1b0] sm:$0xff]
      %v3822 = vld [vmem:[#allocation3 + $0x1b8] sm:$0xff]
      %v3823 = vld [vmem:[#allocation3 + $0x1c0] sm:$0xff]
      %v3824 = vld [vmem:[#allocation3 + $0x1c8] sm:$0xff]
      %v3825 = vld [vmem:[#allocation3 + $0x1d0] sm:$0xff]
      %v3826 = vld [vmem:[#allocation3 + $0x1d8] sm:$0xff]
      %v3827 = vld [vmem:[#allocation3 + $0x1e0] sm:$0xff]
      %v3828 = vld [vmem:[#allocation3 + $0x1e8] sm:$0xff]
      %v3829 = vld [vmem:[#allocation3 + $0x1f0] sm:$0xff]
      %v3830 = vld [vmem:[#allocation3 + $0x1f8] sm:$0xff]
      %v3831 = vld [vmem:[%s5] sm:$0xff]
      %v3832 = vld [vmem:[%s5 + $0x8] sm:$0xff]
      %3834 = vset.pattern.permute.xlu0 0
      %3835 = vperm.xlu0 %3834, %v3831
      %v3836 = vpop.permute.xlu0 %3835
      %3839 = vset.pattern.permute.xlu0 0
      %3840 = vperm.xlu0 %3839, %v3832
      %v3841 = vpop.permute.xlu0 %3840
      %vm3843 = vcmask 523264
      %v3845 = vsel %vm3843, %v3765, 0
      %v3848 = vsel %vm3843, %v3766, 0
      %3850 = vmatprep.subr.mxu0 0.0
      %3851 = vmatpush1.msra.mxu0 0.0
      %3852 = vmatprep.subr.mxu0 0.0
      %3853 = vmatpush1.msra.mxu0 0.0
      %3854 = vmatprep.subr.mxu0 0.0
      %3855 = vmatpush1.msra.mxu0 0.0
      %3856 = vmatprep.subr.mxu0 0.0
      %3857 = vmatpush1.msra.mxu0 0.0
      %3858 = vmatprep.subr.mxu0 0.0
      %3859 = vmatpush1.msra.mxu0 0.0
      %3860 = vmatprep.subr.mxu0 0.0
      %3861 = vmatpush1.msra.mxu0 0.0
      %3862 = vmatprep.subr.mxu0 0.0
      %3863 = vmatpush1.msra.mxu0 0.0
      %3864 = vmatprep.subr.mxu0 0.0
      %3865 = vmatpush1.msra.mxu0 0.0
      %3866 = vmatprep.subr.mxu0 %v3824
      %3867 = vmatpush1.msra.mxu0 %v3823
      %3868 = vmatprep.subr.mxu0 %v3816
      %3869 = vmatpush1.msra.mxu0 %v3815
      %3870 = vmatprep.subr.mxu0 %v3808
      %3871 = vmatpush1.msra.mxu0 %v3807
      %3872 = vmatprep.subr.mxu0 %v3800
      %3873 = vmatpush1.msra.mxu0 %v3799
      %3874 = vmatprep.subr.mxu0 %v3792
      %3875 = vmatpush1.msra.mxu0 %v3791
      %3876 = vmatprep.subr.mxu0 %v3784
      %3877 = vmatpush1.msra.mxu0 %v3783
      %3878 = vmatprep.subr.mxu0 %v3776
      %3879 = vmatpush1.msra.mxu0 %v3775
      %3880 = vmatprep.subr.mxu0 %v3768
      %3881 = vmatpush1.msra.mxu0 %v3767
      %3882 = vmatprep.subr.mxu0 0.0
      %3883 = vmatpush2.msra.mxu0 0.0
      %3884 = vmatprep.subr.mxu0 0.0
      %3885 = vmatpush2.msra.mxu0 0.0
      %3886 = vmatprep.subr.mxu0 0.0
      %3887 = vmatpush2.msra.mxu0 0.0
      %3888 = vmatprep.subr.mxu0 0.0
      %3889 = vmatpush2.msra.mxu0 0.0
      %3890 = vmatprep.subr.mxu0 0.0
      %3891 = vmatpush2.msra.mxu0 0.0
      %3892 = vmatprep.subr.mxu0 0.0
      %3893 = vmatpush2.msra.mxu0 0.0
      %3894 = vmatprep.subr.mxu0 0.0
      %3895 = vmatpush2.msra.mxu0 0.0
      %3896 = vmatprep.subr.mxu0 0.0
      %3897 = vmatpush2.msra.mxu0 0.0
      %3898 = vmatprep.subr.mxu0 0.0
      %3899 = vmatpush2.msra.mxu0 0.0
      %3900 = vmatprep.subr.mxu0 0.0
      %3901 = vmatpush2.msra.mxu0 0.0
      %3902 = vmatprep.subr.mxu0 0.0
      %3903 = vmatpush2.msra.mxu0 0.0
      %3904 = vmatprep.subr.mxu0 0.0
      %3905 = vmatpush2.msra.mxu0 0.0
      %3906 = vmatprep.subr.mxu0 0.0
      %3907 = vmatpush2.msra.mxu0 0.0
      %3908 = vmatprep.subr.mxu0 0.0
      %3909 = vmatpush2.msra.mxu0 0.0
      %3910 = vmatprep.subr.mxu0 0.0
      %3911 = vmatpush2.msra.mxu0 0.0
      %3912 = vmatprep.subr.mxu0 0.0
      %3913 = vmatpush2.msra.mxu0 0.0
      %3914 = vmatprep.mubr.f32.mxu0 0.0
      %3915 = vmatmul.mubr.f32.gmra.mxu0 %v3845
      %v3916 = vpop.f32.mrf.mxu0
      %v3917 = vadd.f32 %v3836, %v3916
      %v3918 = vpop.f32.mrf.mxu0
      %v3919 = vadd.f32 %v3836, %v3918
      %3920 = vmatprep.mubr.f32.mxu0 0.0
      %3921 = vmatmul.mubr.f32.gmra.mxu0 %v3848
      %v3922 = vpop.f32.mrf.mxu0
      %v3923 = vadd.f32 %v3841, %v3922
      %v3924 = vpop.f32.mrf.mxu0
      %v3925 = vadd.f32 %v3841, %v3924
      %3926 = vdwg.mxu0
      %3927 = vmatprep.subr.mxu0 0.0
      %3928 = vmatpush1.msra.mxu0 0.0
      %3929 = vmatprep.subr.mxu0 0.0
      %3930 = vmatpush1.msra.mxu0 0.0
      %3931 = vmatprep.subr.mxu0 0.0
      %3932 = vmatpush1.msra.mxu0 0.0
      %3933 = vmatprep.subr.mxu0 0.0
      %3934 = vmatpush1.msra.mxu0 0.0
      %3935 = vmatprep.subr.mxu0 0.0
      %3936 = vmatpush1.msra.mxu0 0.0
      %3937 = vmatprep.subr.mxu0 0.0
      %3938 = vmatpush1.msra.mxu0 0.0
      %3939 = vmatprep.subr.mxu0 0.0
      %3940 = vmatpush1.msra.mxu0 0.0
      %3941 = vmatprep.subr.mxu0 0.0
      %3942 = vmatpush1.msra.mxu0 0.0
      %3943 = vmatprep.subr.mxu0 %v3826
      %3944 = vmatpush1.msra.mxu0 %v3825
      %3945 = vmatprep.subr.mxu0 %v3818
      %3946 = vmatpush1.msra.mxu0 %v3817
      %3947 = vmatprep.subr.mxu0 %v3810
      %3948 = vmatpush1.msra.mxu0 %v3809
      %3949 = vmatprep.subr.mxu0 %v3802
      %3950 = vmatpush1.msra.mxu0 %v3801
      %3951 = vmatprep.subr.mxu0 %v3794
      %3952 = vmatpush1.msra.mxu0 %v3793
      %3953 = vmatprep.subr.mxu0 %v3786
      %3954 = vmatpush1.msra.mxu0 %v3785
      %3955 = vmatprep.subr.mxu0 %v3778
      %3956 = vmatpush1.msra.mxu0 %v3777
      %3957 = vmatprep.subr.mxu0 %v3770
      %3958 = vmatpush1.msra.mxu0 %v3769
      %3959 = vmatprep.subr.mxu0 0.0
      %3960 = vmatpush2.msra.mxu0 0.0
      %3961 = vmatprep.subr.mxu0 0.0
      %3962 = vmatpush2.msra.mxu0 0.0
      %3963 = vmatprep.subr.mxu0 0.0
      %3964 = vmatpush2.msra.mxu0 0.0
      %3965 = vmatprep.subr.mxu0 0.0
      %3966 = vmatpush2.msra.mxu0 0.0
      %3967 = vmatprep.subr.mxu0 0.0
      %3968 = vmatpush2.msra.mxu0 0.0
      %3969 = vmatprep.subr.mxu0 0.0
      %3970 = vmatpush2.msra.mxu0 0.0
      %3971 = vmatprep.subr.mxu0 0.0
      %3972 = vmatpush2.msra.mxu0 0.0
      %3973 = vmatprep.subr.mxu0 0.0
      %3974 = vmatpush2.msra.mxu0 0.0
      %3975 = vmatprep.subr.mxu0 0.0
      %3976 = vmatpush2.msra.mxu0 0.0
      %3977 = vmatprep.subr.mxu0 0.0
      %3978 = vmatpush2.msra.mxu0 0.0
      %3979 = vmatprep.subr.mxu0 0.0
      %3980 = vmatpush2.msra.mxu0 0.0
      %3981 = vmatprep.subr.mxu0 0.0
      %3982 = vmatpush2.msra.mxu0 0.0
      %3983 = vmatprep.subr.mxu0 0.0
      %3984 = vmatpush2.msra.mxu0 0.0
      %3985 = vmatprep.subr.mxu0 0.0
      %3986 = vmatpush2.msra.mxu0 0.0
      %3987 = vmatprep.subr.mxu0 0.0
      %3988 = vmatpush2.msra.mxu0 0.0
      %3989 = vmatprep.subr.mxu0 0.0
      %3990 = vmatpush2.msra.mxu0 0.0
      %3991 = vmatprep.mubr.f32.mxu0 0.0
      %3992 = vmatmul.mubr.f32.gmra.mxu0 %v3845
      %v3993 = vpop.f32.mrf.mxu0
      %v3994 = vadd.f32 %v3836, %v3993
      %v3995 = vpop.f32.mrf.mxu0
      %v3996 = vadd.f32 %v3836, %v3995
      %3997 = vmatprep.mubr.f32.mxu0 0.0
      %3998 = vmatmul.mubr.f32.gmra.mxu0 %v3848
      %v3999 = vpop.f32.mrf.mxu0
      %v4000 = vadd.f32 %v3841, %v3999
      %v4001 = vpop.f32.mrf.mxu0
      %v4002 = vadd.f32 %v3841, %v4001
      %4003 = vdwg.mxu0
      %4004 = vmatprep.subr.mxu0 0.0
      %4005 = vmatpush1.msra.mxu0 0.0
      %4006 = vmatprep.subr.mxu0 0.0
      %4007 = vmatpush1.msra.mxu0 0.0
      %4008 = vmatprep.subr.mxu0 0.0
      %4009 = vmatpush1.msra.mxu0 0.0
      %4010 = vmatprep.subr.mxu0 0.0
      %4011 = vmatpush1.msra.mxu0 0.0
      %4012 = vmatprep.subr.mxu0 0.0
      %4013 = vmatpush1.msra.mxu0 0.0
      %4014 = vmatprep.subr.mxu0 0.0
      %4015 = vmatpush1.msra.mxu0 0.0
      %4016 = vmatprep.subr.mxu0 0.0
      %4017 = vmatpush1.msra.mxu0 0.0
      %4018 = vmatprep.subr.mxu0 0.0
      %4019 = vmatpush1.msra.mxu0 0.0
      %4020 = vmatprep.subr.mxu0 %v3828
      %4021 = vmatpush1.msra.mxu0 %v3827
      %4022 = vmatprep.subr.mxu0 %v3820
      %4023 = vmatpush1.msra.mxu0 %v3819
      %4024 = vmatprep.subr.mxu0 %v3812
      %4025 = vmatpush1.msra.mxu0 %v3811
      %4026 = vmatprep.subr.mxu0 %v3804
      %4027 = vmatpush1.msra.mxu0 %v3803
      %4028 = vmatprep.subr.mxu0 %v3796
      %4029 = vmatpush1.msra.mxu0 %v3795
      %4030 = vmatprep.subr.mxu0 %v3788
      %4031 = vmatpush1.msra.mxu0 %v3787
      %4032 = vmatprep.subr.mxu0 %v3780
      %4033 = vmatpush1.msra.mxu0 %v3779
      %4034 = vmatprep.subr.mxu0 %v3772
      %4035 = vmatpush1.msra.mxu0 %v3771
      %4036 = vmatprep.subr.mxu0 0.0
      %4037 = vmatpush2.msra.mxu0 0.0
      %4038 = vmatprep.subr.mxu0 0.0
      %4039 = vmatpush2.msra.mxu0 0.0
      %4040 = vmatprep.subr.mxu0 0.0
      %4041 = vmatpush2.msra.mxu0 0.0
      %4042 = vmatprep.subr.mxu0 0.0
      %4043 = vmatpush2.msra.mxu0 0.0
      %4044 = vmatprep.subr.mxu0 0.0
      %4045 = vmatpush2.msra.mxu0 0.0
      %4046 = vmatprep.subr.mxu0 0.0
      %4047 = vmatpush2.msra.mxu0 0.0
      %4048 = vmatprep.subr.mxu0 0.0
      %4049 = vmatpush2.msra.mxu0 0.0
      %4050 = vmatprep.subr.mxu0 0.0
      %4051 = vmatpush2.msra.mxu0 0.0
      %4052 = vmatprep.subr.mxu0 0.0
      %4053 = vmatpush2.msra.mxu0 0.0
      %4054 = vmatprep.subr.mxu0 0.0
      %4055 = vmatpush2.msra.mxu0 0.0
      %4056 = vmatprep.subr.mxu0 0.0
      %4057 = vmatpush2.msra.mxu0 0.0
      %4058 = vmatprep.subr.mxu0 0.0
      %4059 = vmatpush2.msra.mxu0 0.0
      %4060 = vmatprep.subr.mxu0 0.0
      %4061 = vmatpush2.msra.mxu0 0.0
      %4062 = vmatprep.subr.mxu0 0.0
      %4063 = vmatpush2.msra.mxu0 0.0
      %4064 = vmatprep.subr.mxu0 0.0
      %4065 = vmatpush2.msra.mxu0 0.0
      %4066 = vmatprep.subr.mxu0 0.0
      %4067 = vmatpush2.msra.mxu0 0.0
      %4068 = vmatprep.mubr.f32.mxu0 0.0
      %4069 = vmatmul.mubr.f32.gmra.mxu0 %v3845
      %v4070 = vpop.f32.mrf.mxu0
      %v4071 = vadd.f32 %v3836, %v4070
      %v4072 = vpop.f32.mrf.mxu0
      %v4073 = vadd.f32 %v3836, %v4072
      %4074 = vmatprep.mubr.f32.mxu0 0.0
      %4075 = vmatmul.mubr.f32.gmra.mxu0 %v3848
      %v4076 = vpop.f32.mrf.mxu0
      %v4077 = vadd.f32 %v3841, %v4076
      %v4078 = vpop.f32.mrf.mxu0
      %v4079 = vadd.f32 %v3841, %v4078
      %4080 = vdwg.mxu0
      %4081 = vmatprep.subr.mxu0 0.0
      %4082 = vmatpush1.msra.mxu0 0.0
      %4083 = vmatprep.subr.mxu0 0.0
      %4084 = vmatpush1.msra.mxu0 0.0
      %4085 = vmatprep.subr.mxu0 0.0
      %4086 = vmatpush1.msra.mxu0 0.0
      %4087 = vmatprep.subr.mxu0 0.0
      %4088 = vmatpush1.msra.mxu0 0.0
      %4089 = vmatprep.subr.mxu0 0.0
      %4090 = vmatpush1.msra.mxu0 0.0
      %4091 = vmatprep.subr.mxu0 0.0
      %4092 = vmatpush1.msra.mxu0 0.0
      %4093 = vmatprep.subr.mxu0 0.0
      %4094 = vmatpush1.msra.mxu0 0.0
      %4095 = vmatprep.subr.mxu0 0.0
      %4096 = vmatpush1.msra.mxu0 0.0
      %4097 = vmatprep.subr.mxu0 %v3830
      %4098 = vmatpush1.msra.mxu0 %v3829
      %4099 = vmatprep.subr.mxu0 %v3822
      %4100 = vmatpush1.msra.mxu0 %v3821
      %4101 = vmatprep.subr.mxu0 %v3814
      %4102 = vmatpush1.msra.mxu0 %v3813
      %4103 = vmatprep.subr.mxu0 %v3806
      %4104 = vmatpush1.msra.mxu0 %v3805
      %4105 = vmatprep.subr.mxu0 %v3798
      %4106 = vmatpush1.msra.mxu0 %v3797
      %4107 = vmatprep.subr.mxu0 %v3790
      %4108 = vmatpush1.msra.mxu0 %v3789
      %4109 = vmatprep.subr.mxu0 %v3782
      %4110 = vmatpush1.msra.mxu0 %v3781
      %4111 = vmatprep.subr.mxu0 %v3774
      %4112 = vmatpush1.msra.mxu0 %v3773
      %4113 = vmatprep.subr.mxu0 0.0
      %4114 = vmatpush2.msra.mxu0 0.0
      %4115 = vmatprep.subr.mxu0 0.0
      %4116 = vmatpush2.msra.mxu0 0.0
      %4117 = vmatprep.subr.mxu0 0.0
      %4118 = vmatpush2.msra.mxu0 0.0
      %4119 = vmatprep.subr.mxu0 0.0
      %4120 = vmatpush2.msra.mxu0 0.0
      %4121 = vmatprep.subr.mxu0 0.0
      %4122 = vmatpush2.msra.mxu0 0.0
      %4123 = vmatprep.subr.mxu0 0.0
      %4124 = vmatpush2.msra.mxu0 0.0
      %4125 = vmatprep.subr.mxu0 0.0
      %4126 = vmatpush2.msra.mxu0 0.0
      %4127 = vmatprep.subr.mxu0 0.0
      %4128 = vmatpush2.msra.mxu0 0.0
      %4129 = vmatprep.subr.mxu0 0.0
      %4130 = vmatpush2.msra.mxu0 0.0
      %4131 = vmatprep.subr.mxu0 0.0
      %4132 = vmatpush2.msra.mxu0 0.0
      %4133 = vmatprep.subr.mxu0 0.0
      %4134 = vmatpush2.msra.mxu0 0.0
      %4135 = vmatprep.subr.mxu0 0.0
      %4136 = vmatpush2.msra.mxu0 0.0
      %4137 = vmatprep.subr.mxu0 0.0
      %4138 = vmatpush2.msra.mxu0 0.0
      %4139 = vmatprep.subr.mxu0 0.0
      %4140 = vmatpush2.msra.mxu0 0.0
      %4141 = vmatprep.subr.mxu0 0.0
      %4142 = vmatpush2.msra.mxu0 0.0
      %4143 = vmatprep.subr.mxu0 0.0
      %4144 = vmatpush2.msra.mxu0 0.0
      %4145 = vmatprep.mubr.f32.mxu0 0.0
      %4146 = vmatmul.mubr.f32.gmra.mxu0 %v3845
      %v4147 = vpop.f32.mrf.mxu0
      %v4148 = vadd.f32 %v3836, %v4147
      %v4149 = vpop.f32.mrf.mxu0
      %v4150 = vadd.f32 %v3836, %v4149
      %4151 = vmatprep.mubr.f32.mxu0 0.0
      %4152 = vmatmul.mubr.f32.gmra.mxu0 %v3848
      %v4153 = vpop.f32.mrf.mxu0
      %v4154 = vadd.f32 %v3841, %v4153
      %v4155 = vpop.f32.mrf.mxu0
      %v4156 = vadd.f32 %v3841, %v4155
      %4157 = vdwg.mxu0
      %v4158 = vmax.f32 %v3917, 0.0
      %v4159 = vmax.f32 %v3919, 0.0
      %v4160 = vmax.f32 %v3994, 0.0
      %v4161 = vmax.f32 %v3996, 0.0
      %v4162 = vmax.f32 %v4071, 0.0
      %v4163 = vmax.f32 %v4073, 0.0
      %v4164 = vmax.f32 %v4148, 0.0
      %v4165 = vmax.f32 %v4150, 0.0
      %v4166 = vmax.f32 %v3923, 0.0
      %v4167 = vmax.f32 %v3925, 0.0
      %v4168 = vmax.f32 %v4000, 0.0
      %v4169 = vmax.f32 %v4002, 0.0
      %v4170 = vmax.f32 %v4077, 0.0
      %v4171 = vmax.f32 %v4079, 0.0
      %v4172 = vmax.f32 %v4154, 0.0
      %v4173 = vmax.f32 %v4156, 0.0
      %v4174 = vadd.f32 %v4158, %v4166
      %v4175 = vadd.f32 %v4159, %v4167
      %v4176 = vadd.f32 %v4160, %v4168
      %v4177 = vadd.f32 %v4161, %v4169
      %v4178 = vadd.f32 %v4162, %v4170
      %v4179 = vadd.f32 %v4163, %v4171
      %v4180 = vadd.f32 %v4164, %v4172
      %v4181 = vadd.f32 %v4165, %v4173
      %v4182 = vld [vmem:[%s6] sm:$0xff]
      %v4183 = vld [vmem:[%s7] sm:$0xff]
      %4185 = vset.pattern.permute.xlu0 0
      %4186 = vperm.xlu0 %4185, %v4183
      %v4187 = vpop.permute.xlu0 %4186
      %vm4189 = vcmask 64512
      %v4191 = vsel %vm4189, %v4182, 0
      %4193 = vmatprep.subr.mxu0 0.0
      %4194 = vmatpush1.msra.mxu0 0.0
      %4195 = vmatprep.subr.mxu0 0.0
      %4196 = vmatpush1.msra.mxu0 0.0
      %4197 = vmatprep.subr.mxu0 0.0
      %4198 = vmatpush1.msra.mxu0 0.0
      %4199 = vmatprep.subr.mxu0 0.0
      %4200 = vmatpush1.msra.mxu0 0.0
      %4201 = vmatprep.subr.mxu0 0.0
      %4202 = vmatpush1.msra.mxu0 0.0
      %4203 = vmatprep.subr.mxu0 0.0
      %4204 = vmatpush1.msra.mxu0 0.0
      %4205 = vmatprep.subr.mxu0 0.0
      %4206 = vmatpush1.msra.mxu0 0.0
      %4207 = vmatprep.subr.mxu0 0.0
      %4208 = vmatpush1.msra.mxu0 0.0
      %4209 = vmatprep.subr.mxu0 0.0
      %4210 = vmatpush1.msra.mxu0 0.0
      %4211 = vmatprep.subr.mxu0 0.0
      %4212 = vmatpush1.msra.mxu0 0.0
      %4213 = vmatprep.subr.mxu0 0.0
      %4214 = vmatpush1.msra.mxu0 0.0
      %4215 = vmatprep.subr.mxu0 0.0
      %4216 = vmatpush1.msra.mxu0 0.0
      %4217 = vmatprep.subr.mxu0 0.0
      %4218 = vmatpush1.msra.mxu0 0.0
      %4219 = vmatprep.subr.mxu0 0.0
      %4220 = vmatpush1.msra.mxu0 0.0
      %4221 = vmatprep.subr.mxu0 0.0
      %4222 = vmatpush1.msra.mxu0 0.0
      %4223 = vmatprep.subr.mxu0 %v4175
      %4224 = vmatpush1.msra.mxu0 %v4174
      %4225 = vmatprep.subr.mxu0 0.0
      %4226 = vmatpush2.msra.mxu0 0.0
      %4227 = vmatprep.subr.mxu0 0.0
      %4228 = vmatpush2.msra.mxu0 0.0
      %4229 = vmatprep.subr.mxu0 0.0
      %4230 = vmatpush2.msra.mxu0 0.0
      %4231 = vmatprep.subr.mxu0 0.0
      %4232 = vmatpush2.msra.mxu0 0.0
      %4233 = vmatprep.subr.mxu0 0.0
      %4234 = vmatpush2.msra.mxu0 0.0
      %4235 = vmatprep.subr.mxu0 0.0
      %4236 = vmatpush2.msra.mxu0 0.0
      %4237 = vmatprep.subr.mxu0 0.0
      %4238 = vmatpush2.msra.mxu0 0.0
      %4239 = vmatprep.subr.mxu0 0.0
      %4240 = vmatpush2.msra.mxu0 0.0
      %4241 = vmatprep.subr.mxu0 0.0
      %4242 = vmatpush2.msra.mxu0 0.0
      %4243 = vmatprep.subr.mxu0 0.0
      %4244 = vmatpush2.msra.mxu0 0.0
      %4245 = vmatprep.subr.mxu0 0.0
      %4246 = vmatpush2.msra.mxu0 0.0
      %4247 = vmatprep.subr.mxu0 0.0
      %4248 = vmatpush2.msra.mxu0 0.0
      %4249 = vmatprep.subr.mxu0 0.0
      %4250 = vmatpush2.msra.mxu0 0.0
      %4251 = vmatprep.subr.mxu0 0.0
      %4252 = vmatpush2.msra.mxu0 0.0
      %4253 = vmatprep.subr.mxu0 0.0
      %4254 = vmatpush2.msra.mxu0 0.0
      %4255 = vmatprep.subr.mxu0 0.0
      %4256 = vmatpush2.msra.mxu0 0.0
      %4257 = vmatprep.mubr.f32.mxu0 0.0
      %4258 = vmatmul.mubr.f32.gmra.mxu0 %v4191
      %v4259 = vpop.f32.mrf.mxu0
      %v4260 = vadd.f32 %v4187, %v4259
      %v4261 = vpop.f32.mrf.mxu0
      %v4262 = vadd.f32 %v4187, %v4261
      %4263 = vdwg.mxu0
      %4264 = vmatprep.subr.mxu0 0.0
      %4265 = vmatpush1.msra.mxu0 0.0
      %4266 = vmatprep.subr.mxu0 0.0
      %4267 = vmatpush1.msra.mxu0 0.0
      %4268 = vmatprep.subr.mxu0 0.0
      %4269 = vmatpush1.msra.mxu0 0.0
      %4270 = vmatprep.subr.mxu0 0.0
      %4271 = vmatpush1.msra.mxu0 0.0
      %4272 = vmatprep.subr.mxu0 0.0
      %4273 = vmatpush1.msra.mxu0 0.0
      %4274 = vmatprep.subr.mxu0 0.0
      %4275 = vmatpush1.msra.mxu0 0.0
      %4276 = vmatprep.subr.mxu0 0.0
      %4277 = vmatpush1.msra.mxu0 0.0
      %4278 = vmatprep.subr.mxu0 0.0
      %4279 = vmatpush1.msra.mxu0 0.0
      %4280 = vmatprep.subr.mxu0 0.0
      %4281 = vmatpush1.msra.mxu0 0.0
      %4282 = vmatprep.subr.mxu0 0.0
      %4283 = vmatpush1.msra.mxu0 0.0
      %4284 = vmatprep.subr.mxu0 0.0
      %4285 = vmatpush1.msra.mxu0 0.0
      %4286 = vmatprep.subr.mxu0 0.0
      %4287 = vmatpush1.msra.mxu0 0.0
      %4288 = vmatprep.subr.mxu0 0.0
      %4289 = vmatpush1.msra.mxu0 0.0
      %4290 = vmatprep.subr.mxu0 0.0
      %4291 = vmatpush1.msra.mxu0 0.0
      %4292 = vmatprep.subr.mxu0 0.0
      %4293 = vmatpush1.msra.mxu0 0.0
      %4294 = vmatprep.subr.mxu0 %v4177
      %4295 = vmatpush1.msra.mxu0 %v4176
      %4296 = vmatprep.subr.mxu0 0.0
      %4297 = vmatpush2.msra.mxu0 0.0
      %4298 = vmatprep.subr.mxu0 0.0
      %4299 = vmatpush2.msra.mxu0 0.0
      %4300 = vmatprep.subr.mxu0 0.0
      %4301 = vmatpush2.msra.mxu0 0.0
      %4302 = vmatprep.subr.mxu0 0.0
      %4303 = vmatpush2.msra.mxu0 0.0
      %4304 = vmatprep.subr.mxu0 0.0
      %4305 = vmatpush2.msra.mxu0 0.0
      %4306 = vmatprep.subr.mxu0 0.0
      %4307 = vmatpush2.msra.mxu0 0.0
      %4308 = vmatprep.subr.mxu0 0.0
      %4309 = vmatpush2.msra.mxu0 0.0
      %4310 = vmatprep.subr.mxu0 0.0
      %4311 = vmatpush2.msra.mxu0 0.0
      %4312 = vmatprep.subr.mxu0 0.0
      %4313 = vmatpush2.msra.mxu0 0.0
      %4314 = vmatprep.subr.mxu0 0.0
      %4315 = vmatpush2.msra.mxu0 0.0
      %4316 = vmatprep.subr.mxu0 0.0
      %4317 = vmatpush2.msra.mxu0 0.0
      %4318 = vmatprep.subr.mxu0 0.0
      %4319 = vmatpush2.msra.mxu0 0.0
      %4320 = vmatprep.subr.mxu0 0.0
      %4321 = vmatpush2.msra.mxu0 0.0
      %4322 = vmatprep.subr.mxu0 0.0
      %4323 = vmatpush2.msra.mxu0 0.0
      %4324 = vmatprep.subr.mxu0 0.0
      %4325 = vmatpush2.msra.mxu0 0.0
      %4326 = vmatprep.subr.mxu0 0.0
      %4327 = vmatpush2.msra.mxu0 0.0
      %4328 = vmatprep.mubr.f32.mxu0 0.0
      %4329 = vmatmul.mubr.f32.gmra.mxu0 %v4191
      %v4330 = vpop.f32.mrf.mxu0
      %v4331 = vadd.f32 %v4187, %v4330
      %v4332 = vpop.f32.mrf.mxu0
      %v4333 = vadd.f32 %v4187, %v4332
      %4334 = vdwg.mxu0
      %4335 = vmatprep.subr.mxu0 0.0
      %4336 = vmatpush1.msra.mxu0 0.0
      %4337 = vmatprep.subr.mxu0 0.0
      %4338 = vmatpush1.msra.mxu0 0.0
      %4339 = vmatprep.subr.mxu0 0.0
      %4340 = vmatpush1.msra.mxu0 0.0
      %4341 = vmatprep.subr.mxu0 0.0
      %4342 = vmatpush1.msra.mxu0 0.0
      %4343 = vmatprep.subr.mxu0 0.0
      %4344 = vmatpush1.msra.mxu0 0.0
      %4345 = vmatprep.subr.mxu0 0.0
      %4346 = vmatpush1.msra.mxu0 0.0
      %4347 = vmatprep.subr.mxu0 0.0
      %4348 = vmatpush1.msra.mxu0 0.0
      %4349 = vmatprep.subr.mxu0 0.0
      %4350 = vmatpush1.msra.mxu0 0.0
      %4351 = vmatprep.subr.mxu0 0.0
      %4352 = vmatpush1.msra.mxu0 0.0
      %4353 = vmatprep.subr.mxu0 0.0
      %4354 = vmatpush1.msra.mxu0 0.0
      %4355 = vmatprep.subr.mxu0 0.0
      %4356 = vmatpush1.msra.mxu0 0.0
      %4357 = vmatprep.subr.mxu0 0.0
      %4358 = vmatpush1.msra.mxu0 0.0
      %4359 = vmatprep.subr.mxu0 0.0
      %4360 = vmatpush1.msra.mxu0 0.0
      %4361 = vmatprep.subr.mxu0 0.0
      %4362 = vmatpush1.msra.mxu0 0.0
      %4363 = vmatprep.subr.mxu0 0.0
      %4364 = vmatpush1.msra.mxu0 0.0
      %4365 = vmatprep.subr.mxu0 %v4179
      %4366 = vmatpush1.msra.mxu0 %v4178
      %4367 = vmatprep.subr.mxu0 0.0
      %4368 = vmatpush2.msra.mxu0 0.0
      %4369 = vmatprep.subr.mxu0 0.0
      %4370 = vmatpush2.msra.mxu0 0.0
      %4371 = vmatprep.subr.mxu0 0.0
      %4372 = vmatpush2.msra.mxu0 0.0
      %4373 = vmatprep.subr.mxu0 0.0
      %4374 = vmatpush2.msra.mxu0 0.0
      %4375 = vmatprep.subr.mxu0 0.0
      %4376 = vmatpush2.msra.mxu0 0.0
      %4377 = vmatprep.subr.mxu0 0.0
      %4378 = vmatpush2.msra.mxu0 0.0
      %4379 = vmatprep.subr.mxu0 0.0
      %4380 = vmatpush2.msra.mxu0 0.0
      %4381 = vmatprep.subr.mxu0 0.0
      %4382 = vmatpush2.msra.mxu0 0.0
      %4383 = vmatprep.subr.mxu0 0.0
      %4384 = vmatpush2.msra.mxu0 0.0
      %4385 = vmatprep.subr.mxu0 0.0
      %4386 = vmatpush2.msra.mxu0 0.0
      %4387 = vmatprep.subr.mxu0 0.0
      %4388 = vmatpush2.msra.mxu0 0.0
      %4389 = vmatprep.subr.mxu0 0.0
      %4390 = vmatpush2.msra.mxu0 0.0
      %4391 = vmatprep.subr.mxu0 0.0
      %4392 = vmatpush2.msra.mxu0 0.0
      %4393 = vmatprep.subr.mxu0 0.0
      %4394 = vmatpush2.msra.mxu0 0.0
      %4395 = vmatprep.subr.mxu0 0.0
      %4396 = vmatpush2.msra.mxu0 0.0
      %4397 = vmatprep.subr.mxu0 0.0
      %4398 = vmatpush2.msra.mxu0 0.0
      %4399 = vmatprep.mubr.f32.mxu0 0.0
      %4400 = vmatmul.mubr.f32.gmra.mxu0 %v4191
      %v4401 = vpop.f32.mrf.mxu0
      %v4402 = vadd.f32 %v4187, %v4401
      %v4403 = vpop.f32.mrf.mxu0
      %v4404 = vadd.f32 %v4187, %v4403
      %4405 = vdwg.mxu0
      %4406 = vmatprep.subr.mxu0 0.0
      %4407 = vmatpush1.msra.mxu0 0.0
      %4408 = vmatprep.subr.mxu0 0.0
      %4409 = vmatpush1.msra.mxu0 0.0
      %4410 = vmatprep.subr.mxu0 0.0
      %4411 = vmatpush1.msra.mxu0 0.0
      %4412 = vmatprep.subr.mxu0 0.0
      %4413 = vmatpush1.msra.mxu0 0.0
      %4414 = vmatprep.subr.mxu0 0.0
      %4415 = vmatpush1.msra.mxu0 0.0
      %4416 = vmatprep.subr.mxu0 0.0
      %4417 = vmatpush1.msra.mxu0 0.0
      %4418 = vmatprep.subr.mxu0 0.0
      %4419 = vmatpush1.msra.mxu0 0.0
      %4420 = vmatprep.subr.mxu0 0.0
      %4421 = vmatpush1.msra.mxu0 0.0
      %4422 = vmatprep.subr.mxu0 0.0
      %4423 = vmatpush1.msra.mxu0 0.0
      %4424 = vmatprep.subr.mxu0 0.0
      %4425 = vmatpush1.msra.mxu0 0.0
      %4426 = vmatprep.subr.mxu0 0.0
      %4427 = vmatpush1.msra.mxu0 0.0
      %4428 = vmatprep.subr.mxu0 0.0
      %4429 = vmatpush1.msra.mxu0 0.0
      %4430 = vmatprep.subr.mxu0 0.0
      %4431 = vmatpush1.msra.mxu0 0.0
      %4432 = vmatprep.subr.mxu0 0.0
      %4433 = vmatpush1.msra.mxu0 0.0
      %4434 = vmatprep.subr.mxu0 0.0
      %4435 = vmatpush1.msra.mxu0 0.0
      %4436 = vmatprep.subr.mxu0 %v4181
      %4437 = vmatpush1.msra.mxu0 %v4180
      %4438 = vmatprep.subr.mxu0 0.0
      %4439 = vmatpush2.msra.mxu0 0.0
      %4440 = vmatprep.subr.mxu0 0.0
      %4441 = vmatpush2.msra.mxu0 0.0
      %4442 = vmatprep.subr.mxu0 0.0
      %4443 = vmatpush2.msra.mxu0 0.0
      %4444 = vmatprep.subr.mxu0 0.0
      %4445 = vmatpush2.msra.mxu0 0.0
      %4446 = vmatprep.subr.mxu0 0.0
      %4447 = vmatpush2.msra.mxu0 0.0
      %4448 = vmatprep.subr.mxu0 0.0
      %4449 = vmatpush2.msra.mxu0 0.0
      %4450 = vmatprep.subr.mxu0 0.0
      %4451 = vmatpush2.msra.mxu0 0.0
      %4452 = vmatprep.subr.mxu0 0.0
      %4453 = vmatpush2.msra.mxu0 0.0
      %4454 = vmatprep.subr.mxu0 0.0
      %4455 = vmatpush2.msra.mxu0 0.0
      %4456 = vmatprep.subr.mxu0 0.0
      %4457 = vmatpush2.msra.mxu0 0.0
      %4458 = vmatprep.subr.mxu0 0.0
      %4459 = vmatpush2.msra.mxu0 0.0
      %4460 = vmatprep.subr.mxu0 0.0
      %4461 = vmatpush2.msra.mxu0 0.0
      %4462 = vmatprep.subr.mxu0 0.0
      %4463 = vmatpush2.msra.mxu0 0.0
      %4464 = vmatprep.subr.mxu0 0.0
      %4465 = vmatpush2.msra.mxu0 0.0
      %4466 = vmatprep.subr.mxu0 0.0
      %4467 = vmatpush2.msra.mxu0 0.0
      %4468 = vmatprep.subr.mxu0 0.0
      %4469 = vmatpush2.msra.mxu0 0.0
      %4470 = vmatprep.mubr.f32.mxu0 0.0
      %4471 = vmatmul.mubr.f32.gmra.mxu0 %v4191
      %v4472 = vpop.f32.mrf.mxu0
      %v4473 = vadd.f32 %v4187, %v4472
      %v4474 = vpop.f32.mrf.mxu0
      %v4475 = vadd.f32 %v4187, %v4474
      %4476 = vdwg.mxu0
      %v4477 = vmax.f32 %v4260, 0.0
      %v4478 = vmax.f32 %v4262, 0.0
      %v4479 = vmax.f32 %v4331, 0.0
      %v4480 = vmax.f32 %v4333, 0.0
      %v4481 = vmax.f32 %v4402, 0.0
      %v4482 = vmax.f32 %v4404, 0.0
      %v4483 = vmax.f32 %v4473, 0.0
      %v4484 = vmax.f32 %v4475, 0.0
      %4485 = vst [vmem:[%s305] sm:$0xff] %v4477
      %4486 = vst [vmem:[%s305 + $0x8] sm:$0xff] %v4478
      %4487 = vst [vmem:[%s305 + $0x10] sm:$0xff] %v4479
      %4488 = vst [vmem:[%s305 + $0x18] sm:$0xff] %v4480
      %4489 = vst [vmem:[%s305 + $0x20] sm:$0xff] %v4481
      %4490 = vst [vmem:[%s305 + $0x28] sm:$0xff] %v4482
      %4491 = vst [vmem:[%s305 + $0x30] sm:$0xff] %v4483
      %4492 = vst [vmem:[%s305 + $0x38] sm:$0xff] %v4484
      %p4493 = scmp.lt.s32.totalorder %s19, 1
      %s4494 = scalar_select %p4493, %s19, 1
      %s4495 = smul.addr %s4494, 8
      %s4496 = smul.addr %s4495, 8
      %s4497 = scalar_lea.vmem %s8, %s4496
      // Predicated region
      $region53: #{visual_block_pallas.1} parent=51 // pred_check
        %p4498 = pneg %p210
      $region54: #{visual_block_pallas.1} parent=51 // pred_check_branch
        %4500 = sbr.rel (%p4498) target = $region56
      $region55: #{visual_block_pallas.1} parent=51 // pred_region
        _
      $region56: #{visual_block_pallas.1} parent=51 // pred_fallthru
        _
    $region52: #{visual_block_pallas.1} parent=5 // pred_fallthru
      _
    %p4501 = scmp.le.s32.totalorder 2, %s14
    // Predicated region
    $region57: #{visual_block_pallas.1} parent=5 // pred_check
      %p4502 = pneg %p4501
    $region58: #{visual_block_pallas.1} parent=5 // pred_check_branch
      %4504 = sbr.rel (%p4502) target = $region60
    $region59: #{visual_block_pallas.1} parent=5 // pred_region
      %s4505 = ssub.s32 %s14, 2
      // Predicated region
      $region61: #{visual_block_pallas.1} parent=59 // pred_check
        %p4506 = pneg %p216
      $region62: #{visual_block_pallas.1} parent=59 // pred_check_branch
        %4508 = sbr.rel (%p4506) target = $region64
      $region63: #{visual_block_pallas.1} parent=59 // pred_region
        %p4509 = scmp.lt.s32.totalorder %s20, 1
        %s4510 = scalar_select %p4509, %s20, 1
        %s4511 = smul.addr %s4510, 8
        %s4512 = smul.addr %s4511, 8
        %s4513 = scalar_lea.vmem %s8, %s4512
      $region64: #{visual_block_pallas.1} parent=59 // pred_fallthru
        _
    $region60: #{visual_block_pallas.1} parent=5 // pred_fallthru
      _
  $region6: #{visual_block_pallas.1} parent=0 // loop_footer
    %s18 = sadd.s32 1, %s14
  $region7: #{visual_block_pallas.1} parent=0 // loop_footer_branch
    %13 = sbr.rel target = $region3
  $region8: #{visual_block_pallas.1} parent=0 // loop_exit
    _

</llo_original>
